<compile_context>
chip_gen: v7x
topology: tpu7x:2x2x1
jax: 0.10.0
libtpu: 0.0.40
codegen_flags: <defaults>
</compile_context>

<pallas_src>
import numpy as np
import jax
import jax.numpy as jnp
from jax.experimental import pallas as pl
from jax.experimental.pallas import tpu as pltpu


# ----------------------------------------------------------------------------
# Fused kernel: per (batch, H-tile) block
#   csm_new[c]  = sum_{c'} Wc[c,c'] * csm[c']                     (complex 1x1 coil mix)
#   comb        = sum_c image[c] * conj(csm_new[c])               (coil combine)
#   y           = W2 @ relu(W1 @ [comb_r; comb_i] + b1) + b2      (per-pixel MLP, VPU FMAs)
#   out[c]      = (y_r + i*y_i) * csm_new[c]                      (coil re-expand)
# ----------------------------------------------------------------------------
def _fused_kernel(wc_r_ref, wc_i_ref, w1_ref, b1_ref, w2_ref, b2_ref,
                  img_r_ref, img_i_ref, csm_r_ref, csm_i_ref,
                  csm_o_r_ref, csm_o_i_ref, out_r_ref, out_i_ref):
    C = csm_r_ref.shape[1]
    th, W = csm_r_ref.shape[2], csm_r_ref.shape[3]
    HID = b1_ref.shape[0]

    # --- CSE (complex coil mix) + coil combine, fully in vregs/VMEM -----------------
    comb_r = jnp.zeros((th, W), jnp.float32)
    comb_i = jnp.zeros((th, W), jnp.float32)
    for c in range(C):  # static unroll; C is small
        new_r = jnp.zeros((th, W), jnp.float32)
        new_i = jnp.zeros((th, W), jnp.float32)
        for cp in range(C):
            wr = wc_r_ref[c * C + cp]  # scalar from SMEM
            wi = wc_i_ref[c * C + cp]
            sr = csm_r_ref[0, cp]
            si = csm_i_ref[0, cp]
            new_r = new_r + wr * sr - wi * si
            new_i = new_i + wr * si + wi * sr
        # write csm_new once (VMEM-resident output block; re-read below is cheap)
        csm_o_r_ref[0, c] = new_r
        csm_o_i_ref[0, c] = new_i
        ir = img_r_ref[0, c]
        ii = img_i_ref[0, c]
        # image * conj(csm_new) = (ir + i*ii) * (new_r - i*new_i)
        comb_r = comb_r + ir * new_r + ii * new_i
        comb_i = comb_i + ii * new_r - ir * new_i

    # --- per-pixel MLP on the combined complex image (pure VPU scalar FMAs) ---------
    y_r = jnp.zeros((th, W), jnp.float32)
    y_i = jnp.zeros((th, W), jnp.float32)
    for k in range(HID):  # static unroll; HID is small
        h = w1_ref[2 * k] * comb_r + w1_ref[2 * k + 1] * comb_i + b1_ref[k]
        h = jnp.maximum(h, 0.0)
        y_r = y_r + w2_ref[k] * h          # w2 row 0
        y_i = y_i + w2_ref[HID + k] * h    # w2 row 1
    y_r = y_r + b2_ref[0]
    y_i = y_i + b2_ref[1]

    # --- coil re-expansion: out[c] = x_ch * csm_new[c] -------------------------------
    for c in range(C):
        sr = csm_o_r_ref[0, c]
        si = csm_o_i_ref[0, c]
        out_r_ref[0, c] = y_r * sr - y_i * si
        out_i_ref[0, c] = y_r * si + y_i * sr


def _pick_h_tile(H, C, W, budget_bytes=4 * 1024 * 1024):
    """Largest H-tile (multiple of 8, dividing H) whose double-buffered per-step
    working set (4 input + 4 output coil-plane blocks) stays within budget."""
    assert H % 8 == 0, "H must be a multiple of 8 (sublane tiling)"
    best = 8
    th = 8
    while th <= H:
        if H % th == 0:
            per_step = 8 * C * th * W * 4 * 2  # 8 arrays x block bytes x double buffer
            if per_step <= budget_bytes:
                best = th
        th += 8
    return best


def p2p_cse_fused(img_r, img_i, csm_r, csm_i, wc_r, wc_i, w1f, b1, w2f, b2):
    B, C, H, W = img_r.shape
    assert W % 128 == 0, "W must be a multiple of 128 (lane tiling)"
    th = _pick_h_tile(H, C, W)

    blk = pl.BlockSpec((1, C, th, W), lambda b, h: (b, 0, h, 0))
    smem = pl.BlockSpec(memory_space=pltpu.MemorySpace.SMEM)

    out_shape = (
        jax.ShapeDtypeStruct((B, C, H, W), jnp.float32),  # csm_new real
        jax.ShapeDtypeStruct((B, C, H, W), jnp.float32),  # csm_new imag
        jax.ShapeDtypeStruct((B, C, H, W), jnp.float32),  # out real
        jax.ShapeDtypeStruct((B, C, H, W), jnp.float32),  # out imag
    )

    # per-step working set (8 coil-plane blocks, double buffered) + headroom, capped at 32 MiB
    per_step = 8 * C * th * W * 4 * 2
    vmem_limit = int(min(max(per_step * 2, 8 * 1024 * 1024), 32 * 1024 * 1024))

    return pl.pallas_call(
        _fused_kernel,
        out_shape=out_shape,
        grid=(B, H // th),
        in_specs=[smem, smem, smem, smem, smem, smem, blk, blk, blk, blk],
        out_specs=(blk, blk, blk, blk),
        compiler_params=pltpu.CompilerParams(
            dimension_semantics=("parallel", "parallel"),
            vmem_limit_bytes=vmem_limit,
        ),
    )(wc_r, wc_i, w1f, b1, w2f, b2, img_r, img_i, csm_r, csm_i)


# ----------------------------------------------------------------------------
# Full forward (thin JAX glue; all hot work in the single fused Pallas kernel)
# ----------------------------------------------------------------------------
def p2p_cse_regularization(image, csm, params):
    """image, csm: complex64 (B, C, H, W). Returns (x_ch * csm_new, csm_new)."""
    img_r = jnp.real(image).astype(jnp.float32)
    img_i = jnp.imag(image).astype(jnp.float32)
    csm_r = jnp.real(csm).astype(jnp.float32)
    csm_i = jnp.imag(csm).astype(jnp.float32)

    # flatten small weights for 1-D SMEM residence (avoids 2-D SMEM padding)
    wc_r = params["wc_r"].reshape(-1)            # (C*C,)
    wc_i = params["wc_i"].reshape(-1)            # (C*C,)
    w1f = params["w1"].reshape(-1)               # (HID*2,)  w1[k, j] -> w1f[2k + j]
    b1 = params["b1"].reshape(-1)                # (HID,)
    w2f = params["w2"].reshape(-1)               # (2*HID,)  w2[j, k] -> w2f[j*HID + k]
    b2 = params["b2"].reshape(-1)                # (2,)

    csm_nr, csm_ni, out_r, out_i = p2p_cse_fused(
        img_r, img_i, csm_r, csm_i, wc_r, wc_i, w1f, b1, w2f, b2)

    out = jax.lax.complex(out_r, out_i)
    csm_new = jax.lax.complex(csm_nr, csm_ni)
    return out, csm_new


# ----------------------------------------------------------------------------
# NumPy float64 reference for verification
# ----------------------------------------------------------------------------
def reference_np(image, csm, params):
    img = np.asarray(image).astype(np.complex128)
    csm_ = np.asarray(csm).astype(np.complex128)
    wc = (np.asarray(params["wc_r"], np.float64)
          + 1j * np.asarray(params["wc_i"], np.float64))
    csm_new = np.einsum("cd,bdhw->bchw", wc, csm_)
    comb = np.sum(img * np.conj(csm_new), axis=1)  # (B,H,W)
    B, C, H, W = img.shape
    x = np.stack([comb.real.reshape(-1), comb.imag.reshape(-1)], axis=0)
    W1 = np.asarray(params["w1"], np.float64)
    B1 = np.asarray(params["b1"], np.float64)
    W2 = np.asarray(params["w2"], np.float64)
    B2 = np.asarray(params["b2"], np.float64)
    h = np.maximum(W1 @ x + B1, 0.0)
    y = W2 @ h + B2
    x_ch = (y[0] + 1j * y[1]).reshape(B, H, W)
    out = x_ch[:, None, :, :] * csm_new
    return out, csm_new


if __name__ == "__main__":
    B, C, H, W = 2, 4, 16, 128
    HID = 32

    key = jax.random.PRNGKey(0)
    ks = jax.random.split(key, 10)
    image = jax.lax.complex(jax.random.normal(ks[0], (B, C, H, W), jnp.float32),
                            jax.random.normal(ks[1], (B, C, H, W), jnp.float32))
    csm = jax.lax.complex(jax.random.normal(ks[2], (B, C, H, W), jnp.float32),
                          jax.random.normal(ks[3], (B, C, H, W), jnp.float32)) * 0.5

    params = {
        "wc_r": jax.random.normal(ks[4], (C, C), jnp.float32) * 0.3,
        "wc_i": jax.random.normal(ks[5], (C, C), jnp.float32) * 0.3,
        "w1": jax.random.normal(ks[6], (HID, 2), jnp.float32) * 0.5,
        "b1": jax.random.normal(ks[7], (HID, 1), jnp.float32) * 0.1,
        "w2": jax.random.normal(ks[8], (2, HID), jnp.float32) * 0.3,
        "b2": jax.random.normal(ks[9], (2, 1), jnp.float32) * 0.1,
    }

    fwd = jax.jit(p2p_cse_regularization)
    out, csm_new = fwd(image, csm, params)
    out = jax.block_until_ready(out)
    csm_new = jax.block_until_ready(csm_new)

    ref_out, ref_csm = reference_np(image, csm, params)
    np.testing.assert_allclose(np.asarray(csm_new), ref_csm, rtol=1e-3, atol=1e-3)
    np.testing.assert_allclose(np.asarray(out), ref_out, rtol=1e-3, atol=1e-3)

    print("KERNEL_OK")
</pallas_src>

<mosaic_0001>
module attributes {stable_mosaic.version = 11 : i64} {
  func.func @_fused_kernel(%arg0: i32, %arg1: i32, %arg2: memref<16xf32, #tpu.memory_space<smem>>, %arg3: memref<16xf32, #tpu.memory_space<smem>>, %arg4: memref<64xf32, #tpu.memory_space<smem>>, %arg5: memref<32xf32, #tpu.memory_space<smem>>, %arg6: memref<64xf32, #tpu.memory_space<smem>>, %arg7: memref<2xf32, #tpu.memory_space<smem>>, %arg8: memref<1x4x16x128xf32, #tpu.memory_space<vmem>>, %arg9: memref<1x4x16x128xf32, #tpu.memory_space<vmem>>, %arg10: memref<1x4x16x128xf32, #tpu.memory_space<vmem>>, %arg11: memref<1x4x16x128xf32, #tpu.memory_space<vmem>>, %arg12: memref<1x4x16x128xf32, #tpu.memory_space<vmem>>, %arg13: memref<1x4x16x128xf32, #tpu.memory_space<vmem>>, %arg14: memref<1x4x16x128xf32, #tpu.memory_space<vmem>>, %arg15: memref<1x4x16x128xf32, #tpu.memory_space<vmem>>) attributes {dimension_semantics = [#tpu.dimension_semantics<parallel>, #tpu.dimension_semantics<parallel>], iteration_bounds = array<i64: 2, 1>, scalar_prefetch = 0 : i64, scratch_operands = 0 : i64, tpu.core_type = #tpu.core_type<tc>, window_params = [{transform_indices = @transform_0, window_bounds = array<i64: 16>}, {transform_indices = @transform_1, window_bounds = array<i64: 16>}, {transform_indices = @transform_2, window_bounds = array<i64: 64>}, {transform_indices = @transform_3, window_bounds = array<i64: 32>}, {transform_indices = @transform_4, window_bounds = array<i64: 64>}, {transform_indices = @transform_5, window_bounds = array<i64: 2>}, {transform_indices = @transform_6, window_bounds = array<i64: 1, 4, 16, 128>}, {transform_indices = @transform_7, window_bounds = array<i64: 1, 4, 16, 128>}, {transform_indices = @transform_8, window_bounds = array<i64: 1, 4, 16, 128>}, {transform_indices = @transform_9, window_bounds = array<i64: 1, 4, 16, 128>}, {transform_indices = @transform_10, window_bounds = array<i64: 1, 4, 16, 128>}, {transform_indices = @transform_11, window_bounds = array<i64: 1, 4, 16, 128>}, {transform_indices = @transform_12, window_bounds = array<i64: 1, 4, 16, 128>}, {transform_indices = @transform_13, window_bounds = array<i64: 1, 4, 16, 128>}]} {
    %cst = arith.constant 0.000000e+00 : f32
    %0 = vector.broadcast %cst : f32 to vector<16x128xf32>
    %cst_0 = arith.constant 0.000000e+00 : f32
    %1 = vector.broadcast %cst_0 : f32 to vector<16x128xf32>
    %cst_1 = arith.constant 0.000000e+00 : f32
    %2 = vector.broadcast %cst_1 : f32 to vector<16x128xf32>
    %cst_2 = arith.constant 0.000000e+00 : f32
    %3 = vector.broadcast %cst_2 : f32 to vector<16x128xf32>
    %c0 = arith.constant 0 : index
    %4 = memref.load %arg2[%c0] : memref<16xf32, #tpu.memory_space<smem>>
    %c0_3 = arith.constant 0 : index
    %5 = memref.load %arg3[%c0_3] : memref<16xf32, #tpu.memory_space<smem>>
    %c0_4 = arith.constant 0 : index
    %c0_5 = arith.constant 0 : index
    %c0_6 = arith.constant 0 : index
    %c0_7 = arith.constant 0 : index
    %6 = vector.load %arg10[%c0_4, %c0_5, %c0_6, %c0_7] : memref<1x4x16x128xf32, #tpu.memory_space<vmem>>, vector<1x1x16x128xf32>
    %7 = vector.shape_cast %6 : vector<1x1x16x128xf32> to vector<16x128xf32>
    %c0_8 = arith.constant 0 : index
    %c0_9 = arith.constant 0 : index
    %c0_10 = arith.constant 0 : index
    %c0_11 = arith.constant 0 : index
    %8 = vector.load %arg11[%c0_8, %c0_9, %c0_10, %c0_11] : memref<1x4x16x128xf32, #tpu.memory_space<vmem>>, vector<1x1x16x128xf32>
    %9 = vector.shape_cast %8 : vector<1x1x16x128xf32> to vector<16x128xf32>
    %10 = vector.broadcast %4 : f32 to vector<16x128xf32>
    %11 = arith.mulf %10, %7 : vector<16x128xf32>
    %12 = arith.addf %2, %11 : vector<16x128xf32>
    %13 = vector.broadcast %5 : f32 to vector<16x128xf32>
    %14 = arith.mulf %13, %9 : vector<16x128xf32>
    %15 = arith.subf %12, %14 : vector<16x128xf32>
    %16 = vector.broadcast %4 : f32 to vector<16x128xf32>
    %17 = arith.mulf %16, %9 : vector<16x128xf32>
    %18 = arith.addf %3, %17 : vector<16x128xf32>
    %19 = vector.broadcast %5 : f32 to vector<16x128xf32>
    %20 = arith.mulf %19, %7 : vector<16x128xf32>
    %21 = arith.addf %18, %20 : vector<16x128xf32>
    %c1 = arith.constant 1 : index
    %22 = memref.load %arg2[%c1] : memref<16xf32, #tpu.memory_space<smem>>
    %c1_12 = arith.constant 1 : index
    %23 = memref.load %arg3[%c1_12] : memref<16xf32, #tpu.memory_space<smem>>
    %c0_13 = arith.constant 0 : index
    %c1_14 = arith.constant 1 : index
    %c0_15 = arith.constant 0 : index
    %c0_16 = arith.constant 0 : index
    %24 = vector.load %arg10[%c0_13, %c1_14, %c0_15, %c0_16] : memref<1x4x16x128xf32, #tpu.memory_space<vmem>>, vector<1x1x16x128xf32>
    %25 = vector.shape_cast %24 : vector<1x1x16x128xf32> to vector<16x128xf32>
    %c0_17 = arith.constant 0 : index
    %c1_18 = arith.constant 1 : index
    %c0_19 = arith.constant 0 : index
    %c0_20 = arith.constant 0 : index
    %26 = vector.load %arg11[%c0_17, %c1_18, %c0_19, %c0_20] : memref<1x4x16x128xf32, #tpu.memory_space<vmem>>, vector<1x1x16x128xf32>
    %27 = vector.shape_cast %26 : vector<1x1x16x128xf32> to vector<16x128xf32>
    %28 = vector.broadcast %22 : f32 to vector<16x128xf32>
    %29 = arith.mulf %28, %25 : vector<16x128xf32>
    %30 = arith.addf %15, %29 : vector<16x128xf32>
    %31 = vector.broadcast %23 : f32 to vector<16x128xf32>
    %32 = arith.mulf %31, %27 : vector<16x128xf32>
    %33 = arith.subf %30, %32 : vector<16x128xf32>
    %34 = vector.broadcast %22 : f32 to vector<16x128xf32>
    %35 = arith.mulf %34, %27 : vector<16x128xf32>
    %36 = arith.addf %21, %35 : vector<16x128xf32>
    %37 = vector.broadcast %23 : f32 to vector<16x128xf32>
    %38 = arith.mulf %37, %25 : vector<16x128xf32>
    %39 = arith.addf %36, %38 : vector<16x128xf32>
    %c2 = arith.constant 2 : index
    %40 = memref.load %arg2[%c2] : memref<16xf32, #tpu.memory_space<smem>>
    %c2_21 = arith.constant 2 : index
    %41 = memref.load %arg3[%c2_21] : memref<16xf32, #tpu.memory_space<smem>>
    %c0_22 = arith.constant 0 : index
    %c2_23 = arith.constant 2 : index
    %c0_24 = arith.constant 0 : index
    %c0_25 = arith.constant 0 : index
    %42 = vector.load %arg10[%c0_22, %c2_23, %c0_24, %c0_25] : memref<1x4x16x128xf32, #tpu.memory_space<vmem>>, vector<1x1x16x128xf32>
    %43 = vector.shape_cast %42 : vector<1x1x16x128xf32> to vector<16x128xf32>
    %c0_26 = arith.constant 0 : index
    %c2_27 = arith.constant 2 : index
    %c0_28 = arith.constant 0 : index
    %c0_29 = arith.constant 0 : index
    %44 = vector.load %arg11[%c0_26, %c2_27, %c0_28, %c0_29] : memref<1x4x16x128xf32, #tpu.memory_space<vmem>>, vector<1x1x16x128xf32>
    %45 = vector.shape_cast %44 : vector<1x1x16x128xf32> to vector<16x128xf32>
    %46 = vector.broadcast %40 : f32 to vector<16x128xf32>
    %47 = arith.mulf %46, %43 : vector<16x128xf32>
    %48 = arith.addf %33, %47 : vector<16x128xf32>
    %49 = vector.broadcast %41 : f32 to vector<16x128xf32>
    %50 = arith.mulf %49, %45 : vector<16x128xf32>
    %51 = arith.subf %48, %50 : vector<16x128xf32>
    %52 = vector.broadcast %40 : f32 to vector<16x128xf32>
    %53 = arith.mulf %52, %45 : vector<16x128xf32>
    %54 = arith.addf %39, %53 : vector<16x128xf32>
    %55 = vector.broadcast %41 : f32 to vector<16x128xf32>
    %56 = arith.mulf %55, %43 : vector<16x128xf32>
    %57 = arith.addf %54, %56 : vector<16x128xf32>
    %c3 = arith.constant 3 : index
    %58 = memref.load %arg2[%c3] : memref<16xf32, #tpu.memory_space<smem>>
    %c3_30 = arith.constant 3 : index
    %59 = memref.load %arg3[%c3_30] : memref<16xf32, #tpu.memory_space<smem>>
    %c0_31 = arith.constant 0 : index
    %c3_32 = arith.constant 3 : index
    %c0_33 = arith.constant 0 : index
    %c0_34 = arith.constant 0 : index
    %60 = vector.load %arg10[%c0_31, %c3_32, %c0_33, %c0_34] : memref<1x4x16x128xf32, #tpu.memory_space<vmem>>, vector<1x1x16x128xf32>
    %61 = vector.shape_cast %60 : vector<1x1x16x128xf32> to vector<16x128xf32>
    %c0_35 = arith.constant 0 : index
    %c3_36 = arith.constant 3 : index
    %c0_37 = arith.constant 0 : index
    %c0_38 = arith.constant 0 : index
    %62 = vector.load %arg11[%c0_35, %c3_36, %c0_37, %c0_38] : memref<1x4x16x128xf32, #tpu.memory_space<vmem>>, vector<1x1x16x128xf32>
    %63 = vector.shape_cast %62 : vector<1x1x16x128xf32> to vector<16x128xf32>
    %64 = vector.broadcast %58 : f32 to vector<16x128xf32>
    %65 = arith.mulf %64, %61 : vector<16x128xf32>
    %66 = arith.addf %51, %65 : vector<16x128xf32>
    %67 = vector.broadcast %59 : f32 to vector<16x128xf32>
    %68 = arith.mulf %67, %63 : vector<16x128xf32>
    %69 = arith.subf %66, %68 : vector<16x128xf32>
    %70 = vector.broadcast %58 : f32 to vector<16x128xf32>
    %71 = arith.mulf %70, %63 : vector<16x128xf32>
    %72 = arith.addf %57, %71 : vector<16x128xf32>
    %73 = vector.broadcast %59 : f32 to vector<16x128xf32>
    %74 = arith.mulf %73, %61 : vector<16x128xf32>
    %75 = arith.addf %72, %74 : vector<16x128xf32>
    %c0_39 = arith.constant 0 : index
    %c0_40 = arith.constant 0 : index
    %c0_41 = arith.constant 0 : index
    %c0_42 = arith.constant 0 : index
    %76 = vector.load %arg12[%c0_39, %c0_40, %c0_41, %c0_42] : memref<1x4x16x128xf32, #tpu.memory_space<vmem>>, vector<1x1x16x128xf32>
    %77 = vector.shape_cast %76 : vector<1x1x16x128xf32> to vector<16x128xf32>
    %78 = vector.shape_cast %69 : vector<16x128xf32> to vector<1x1x16x128xf32>
    tpu.vector_store %arg12[%c0_39, %c0_40, %c0_41, %c0_42], %78 {strides = array<i32>} : memref<1x4x16x128xf32, #tpu.memory_space<vmem>>, vector<1x1x16x128xf32>,
    %c0_43 = arith.constant 0 : index
    %c0_44 = arith.constant 0 : index
    %c0_45 = arith.constant 0 : index
    %c0_46 = arith.constant 0 : index
    %79 = vector.load %arg13[%c0_43, %c0_44, %c0_45, %c0_46] : memref<1x4x16x128xf32, #tpu.memory_space<vmem>>, vector<1x1x16x128xf32>
    %80 = vector.shape_cast %79 : vector<1x1x16x128xf32> to vector<16x128xf32>
    %81 = vector.shape_cast %75 : vector<16x128xf32> to vector<1x1x16x128xf32>
    tpu.vector_store %arg13[%c0_43, %c0_44, %c0_45, %c0_46], %81 {strides = array<i32>} : memref<1x4x16x128xf32, #tpu.memory_space<vmem>>, vector<1x1x16x128xf32>,
    %c0_47 = arith.constant 0 : index
    %c0_48 = arith.constant 0 : index
    %c0_49 = arith.constant 0 : index
    %c0_50 = arith.constant 0 : index
    %82 = vector.load %arg8[%c0_47, %c0_48, %c0_49, %c0_50] : memref<1x4x16x128xf32, #tpu.memory_space<vmem>>, vector<1x1x16x128xf32>
    %83 = vector.shape_cast %82 : vector<1x1x16x128xf32> to vector<16x128xf32>
    %c0_51 = arith.constant 0 : index
    %c0_52 = arith.constant 0 : index
    %c0_53 = arith.constant 0 : index
    %c0_54 = arith.constant 0 : index
    %84 = vector.load %arg9[%c0_51, %c0_52, %c0_53, %c0_54] : memref<1x4x16x128xf32, #tpu.memory_space<vmem>>, vector<1x1x16x128xf32>
    %85 = vector.shape_cast %84 : vector<1x1x16x128xf32> to vector<16x128xf32>
    %86 = arith.mulf %83, %69 : vector<16x128xf32>
    %87 = arith.addf %0, %86 : vector<16x128xf32>
    %88 = arith.mulf %85, %75 : vector<16x128xf32>
    %89 = arith.addf %87, %88 : vector<16x128xf32>
    %90 = arith.mulf %85, %69 : vector<16x128xf32>
    %91 = arith.addf %1, %90 : vector<16x128xf32>
    %92 = arith.mulf %83, %75 : vector<16x128xf32>
    %93 = arith.subf %91, %92 : vector<16x128xf32>
    %cst_55 = arith.constant 0.000000e+00 : f32
    %94 = vector.broadcast %cst_55 : f32 to vector<16x128xf32>
    %cst_56 = arith.constant 0.000000e+00 : f32
    %95 = vector.broadcast %cst_56 : f32 to vector<16x128xf32>
    %c4 = arith.constant 4 : index
    %96 = memref.load %arg2[%c4] : memref<16xf32, #tpu.memory_space<smem>>
    %c4_57 = arith.constant 4 : index
    %97 = memref.load %arg3[%c4_57] : memref<16xf32, #tpu.memory_space<smem>>
    %c0_58 = arith.constant 0 : index
    %c0_59 = arith.constant 0 : index
    %c0_60 = arith.constant 0 : index
    %c0_61 = arith.constant 0 : index
    %98 = vector.load %arg10[%c0_58, %c0_59, %c0_60, %c0_61] : memref<1x4x16x128xf32, #tpu.memory_space<vmem>>, vector<1x1x16x128xf32>
    %99 = vector.shape_cast %98 : vector<1x1x16x128xf32> to vector<16x128xf32>
    %c0_62 = arith.constant 0 : index
    %c0_63 = arith.constant 0 : index
    %c0_64 = arith.constant 0 : index
    %c0_65 = arith.constant 0 : index
    %100 = vector.load %arg11[%c0_62, %c0_63, %c0_64, %c0_65] : memref<1x4x16x128xf32, #tpu.memory_space<vmem>>, vector<1x1x16x128xf32>
    %101 = vector.shape_cast %100 : vector<1x1x16x128xf32> to vector<16x128xf32>
    %102 = vector.broadcast %96 : f32 to vector<16x128xf32>
    %103 = arith.mulf %102, %99 : vector<16x128xf32>
    %104 = arith.addf %94, %103 : vector<16x128xf32>
    %105 = vector.broadcast %97 : f32 to vector<16x128xf32>
    %106 = arith.mulf %105, %101 : vector<16x128xf32>
    %107 = arith.subf %104, %106 : vector<16x128xf32>
    %108 = vector.broadcast %96 : f32 to vector<16x128xf32>
    %109 = arith.mulf %108, %101 : vector<16x128xf32>
    %110 = arith.addf %95, %109 : vector<16x128xf32>
    %111 = vector.broadcast %97 : f32 to vector<16x128xf32>
    %112 = arith.mulf %111, %99 : vector<16x128xf32>
    %113 = arith.addf %110, %112 : vector<16x128xf32>
    %c5 = arith.constant 5 : index
    %114 = memref.load %arg2[%c5] : memref<16xf32, #tpu.memory_space<smem>>
    %c5_66 = arith.constant 5 : index
    %115 = memref.load %arg3[%c5_66] : memref<16xf32, #tpu.memory_space<smem>>
    %c0_67 = arith.constant 0 : index
    %c1_68 = arith.constant 1 : index
    %c0_69 = arith.constant 0 : index
    %c0_70 = arith.constant 0 : index
    %116 = vector.load %arg10[%c0_67, %c1_68, %c0_69, %c0_70] : memref<1x4x16x128xf32, #tpu.memory_space<vmem>>, vector<1x1x16x128xf32>
    %117 = vector.shape_cast %116 : vector<1x1x16x128xf32> to vector<16x128xf32>
    %c0_71 = arith.constant 0 : index
    %c1_72 = arith.constant 1 : index
    %c0_73 = arith.constant 0 : index
    %c0_74 = arith.constant 0 : index
    %118 = vector.load %arg11[%c0_71, %c1_72, %c0_73, %c0_74] : memref<1x4x16x128xf32, #tpu.memory_space<vmem>>, vector<1x1x16x128xf32>
    %119 = vector.shape_cast %118 : vector<1x1x16x128xf32> to vector<16x128xf32>
    %120 = vector.broadcast %114 : f32 to vector<16x128xf32>
    %121 = arith.mulf %120, %117 : vector<16x128xf32>
    %122 = arith.addf %107, %121 : vector<16x128xf32>
    %123 = vector.broadcast %115 : f32 to vector<16x128xf32>
    %124 = arith.mulf %123, %119 : vector<16x128xf32>
    %125 = arith.subf %122, %124 : vector<16x128xf32>
    %126 = vector.broadcast %114 : f32 to vector<16x128xf32>
    %127 = arith.mulf %126, %119 : vector<16x128xf32>
    %128 = arith.addf %113, %127 : vector<16x128xf32>
    %129 = vector.broadcast %115 : f32 to vector<16x128xf32>
    %130 = arith.mulf %129, %117 : vector<16x128xf32>
    %131 = arith.addf %128, %130 : vector<16x128xf32>
    %c6 = arith.constant 6 : index
    %132 = memref.load %arg2[%c6] : memref<16xf32, #tpu.memory_space<smem>>
    %c6_75 = arith.constant 6 : index
    %133 = memref.load %arg3[%c6_75] : memref<16xf32, #tpu.memory_space<smem>>
    %c0_76 = arith.constant 0 : index
    %c2_77 = arith.constant 2 : index
    %c0_78 = arith.constant 0 : index
    %c0_79 = arith.constant 0 : index
    %134 = vector.load %arg10[%c0_76, %c2_77, %c0_78, %c0_79] : memref<1x4x16x128xf32, #tpu.memory_space<vmem>>, vector<1x1x16x128xf32>
    %135 = vector.shape_cast %134 : vector<1x1x16x128xf32> to vector<16x128xf32>
    %c0_80 = arith.constant 0 : index
    %c2_81 = arith.constant 2 : index
    %c0_82 = arith.constant 0 : index
    %c0_83 = arith.constant 0 : index
    %136 = vector.load %arg11[%c0_80, %c2_81, %c0_82, %c0_83] : memref<1x4x16x128xf32, #tpu.memory_space<vmem>>, vector<1x1x16x128xf32>
    %137 = vector.shape_cast %136 : vector<1x1x16x128xf32> to vector<16x128xf32>
    %138 = vector.broadcast %132 : f32 to vector<16x128xf32>
    %139 = arith.mulf %138, %135 : vector<16x128xf32>
    %140 = arith.addf %125, %139 : vector<16x128xf32>
    %141 = vector.broadcast %133 : f32 to vector<16x128xf32>
    %142 = arith.mulf %141, %137 : vector<16x128xf32>
    %143 = arith.subf %140, %142 : vector<16x128xf32>
    %144 = vector.broadcast %132 : f32 to vector<16x128xf32>
    %145 = arith.mulf %144, %137 : vector<16x128xf32>
    %146 = arith.addf %131, %145 : vector<16x128xf32>
    %147 = vector.broadcast %133 : f32 to vector<16x128xf32>
    %148 = arith.mulf %147, %135 : vector<16x128xf32>
    %149 = arith.addf %146, %148 : vector<16x128xf32>
    %c7 = arith.constant 7 : index
    %150 = memref.load %arg2[%c7] : memref<16xf32, #tpu.memory_space<smem>>
    %c7_84 = arith.constant 7 : index
    %151 = memref.load %arg3[%c7_84] : memref<16xf32, #tpu.memory_space<smem>>
    %c0_85 = arith.constant 0 : index
    %c3_86 = arith.constant 3 : index
    %c0_87 = arith.constant 0 : index
    %c0_88 = arith.constant 0 : index
    %152 = vector.load %arg10[%c0_85, %c3_86, %c0_87, %c0_88] : memref<1x4x16x128xf32, #tpu.memory_space<vmem>>, vector<1x1x16x128xf32>
    %153 = vector.shape_cast %152 : vector<1x1x16x128xf32> to vector<16x128xf32>
    %c0_89 = arith.constant 0 : index
    %c3_90 = arith.constant 3 : index
    %c0_91 = arith.constant 0 : index
    %c0_92 = arith.constant 0 : index
    %154 = vector.load %arg11[%c0_89, %c3_90, %c0_91, %c0_92] : memref<1x4x16x128xf32, #tpu.memory_space<vmem>>, vector<1x1x16x128xf32>
    %155 = vector.shape_cast %154 : vector<1x1x16x128xf32> to vector<16x128xf32>
    %156 = vector.broadcast %150 : f32 to vector<16x128xf32>
    %157 = arith.mulf %156, %153 : vector<16x128xf32>
    %158 = arith.addf %143, %157 : vector<16x128xf32>
    %159 = vector.broadcast %151 : f32 to vector<16x128xf32>
    %160 = arith.mulf %159, %155 : vector<16x128xf32>
    %161 = arith.subf %158, %160 : vector<16x128xf32>
    %162 = vector.broadcast %150 : f32 to vector<16x128xf32>
    %163 = arith.mulf %162, %155 : vector<16x128xf32>
    %164 = arith.addf %149, %163 : vector<16x128xf32>
    %165 = vector.broadcast %151 : f32 to vector<16x128xf32>
    %166 = arith.mulf %165, %153 : vector<16x128xf32>
    %167 = arith.addf %164, %166 : vector<16x128xf32>
    %c0_93 = arith.constant 0 : index
    %c1_94 = arith.constant 1 : index
    %c0_95 = arith.constant 0 : index
    %c0_96 = arith.constant 0 : index
    %168 = vector.load %arg12[%c0_93, %c1_94, %c0_95, %c0_96] : memref<1x4x16x128xf32, #tpu.memory_space<vmem>>, vector<1x1x16x128xf32>
    %169 = vector.shape_cast %168 : vector<1x1x16x128xf32> to vector<16x128xf32>
    %170 = vector.shape_cast %161 : vector<16x128xf32> to vector<1x1x16x128xf32>
    tpu.vector_store %arg12[%c0_93, %c1_94, %c0_95, %c0_96], %170 {strides = array<i32>} : memref<1x4x16x128xf32, #tpu.memory_space<vmem>>, vector<1x1x16x128xf32>,
    %c0_97 = arith.constant 0 : index
    %c1_98 = arith.constant 1 : index
    %c0_99 = arith.constant 0 : index
    %c0_100 = arith.constant 0 : index
    %171 = vector.load %arg13[%c0_97, %c1_98, %c0_99, %c0_100] : memref<1x4x16x128xf32, #tpu.memory_space<vmem>>, vector<1x1x16x128xf32>
    %172 = vector.shape_cast %171 : vector<1x1x16x128xf32> to vector<16x128xf32>
    %173 = vector.shape_cast %167 : vector<16x128xf32> to vector<1x1x16x128xf32>
    tpu.vector_store %arg13[%c0_97, %c1_98, %c0_99, %c0_100], %173 {strides = array<i32>} : memref<1x4x16x128xf32, #tpu.memory_space<vmem>>, vector<1x1x16x128xf32>,
    %c0_101 = arith.constant 0 : index
    %c1_102 = arith.constant 1 : index
    %c0_103 = arith.constant 0 : index
    %c0_104 = arith.constant 0 : index
    %174 = vector.load %arg8[%c0_101, %c1_102, %c0_103, %c0_104] : memref<1x4x16x128xf32, #tpu.memory_space<vmem>>, vector<1x1x16x128xf32>
    %175 = vector.shape_cast %174 : vector<1x1x16x128xf32> to vector<16x128xf32>
    %c0_105 = arith.constant 0 : index
    %c1_106 = arith.constant 1 : index
    %c0_107 = arith.constant 0 : index
    %c0_108 = arith.constant 0 : index
    %176 = vector.load %arg9[%c0_105, %c1_106, %c0_107, %c0_108] : memref<1x4x16x128xf32, #tpu.memory_space<vmem>>, vector<1x1x16x128xf32>
    %177 = vector.shape_cast %176 : vector<1x1x16x128xf32> to vector<16x128xf32>
    %178 = arith.mulf %175, %161 : vector<16x128xf32>
    %179 = arith.addf %89, %178 : vector<16x128xf32>
    %180 = arith.mulf %177, %167 : vector<16x128xf32>
    %181 = arith.addf %179, %180 : vector<16x128xf32>
    %182 = arith.mulf %177, %161 : vector<16x128xf32>
    %183 = arith.addf %93, %182 : vector<16x128xf32>
    %184 = arith.mulf %175, %167 : vector<16x128xf32>
    %185 = arith.subf %183, %184 : vector<16x128xf32>
    %cst_109 = arith.constant 0.000000e+00 : f32
    %186 = vector.broadcast %cst_109 : f32 to vector<16x128xf32>
    %cst_110 = arith.constant 0.000000e+00 : f32
    %187 = vector.broadcast %cst_110 : f32 to vector<16x128xf32>
    %c8 = arith.constant 8 : index
    %188 = memref.load %arg2[%c8] : memref<16xf32, #tpu.memory_space<smem>>
    %c8_111 = arith.constant 8 : index
    %189 = memref.load %arg3[%c8_111] : memref<16xf32, #tpu.memory_space<smem>>
    %c0_112 = arith.constant 0 : index
    %c0_113 = arith.constant 0 : index
    %c0_114 = arith.constant 0 : index
    %c0_115 = arith.constant 0 : index
    %190 = vector.load %arg10[%c0_112, %c0_113, %c0_114, %c0_115] : memref<1x4x16x128xf32, #tpu.memory_space<vmem>>, vector<1x1x16x128xf32>
    %191 = vector.shape_cast %190 : vector<1x1x16x128xf32> to vector<16x128xf32>
    %c0_116 = arith.constant 0 : index
    %c0_117 = arith.constant 0 : index
    %c0_118 = arith.constant 0 : index
    %c0_119 = arith.constant 0 : index
    %192 = vector.load %arg11[%c0_116, %c0_117, %c0_118, %c0_119] : memref<1x4x16x128xf32, #tpu.memory_space<vmem>>, vector<1x1x16x128xf32>
    %193 = vector.shape_cast %192 : vector<1x1x16x128xf32> to vector<16x128xf32>
    %194 = vector.broadcast %188 : f32 to vector<16x128xf32>
    %195 = arith.mulf %194, %191 : vector<16x128xf32>
    %196 = arith.addf %186, %195 : vector<16x128xf32>
    %197 = vector.broadcast %189 : f32 to vector<16x128xf32>
    %198 = arith.mulf %197, %193 : vector<16x128xf32>
    %199 = arith.subf %196, %198 : vector<16x128xf32>
    %200 = vector.broadcast %188 : f32 to vector<16x128xf32>
    %201 = arith.mulf %200, %193 : vector<16x128xf32>
    %202 = arith.addf %187, %201 : vector<16x128xf32>
    %203 = vector.broadcast %189 : f32 to vector<16x128xf32>
    %204 = arith.mulf %203, %191 : vector<16x128xf32>
    %205 = arith.addf %202, %204 : vector<16x128xf32>
    %c9 = arith.constant 9 : index
    %206 = memref.load %arg2[%c9] : memref<16xf32, #tpu.memory_space<smem>>
    %c9_120 = arith.constant 9 : index
    %207 = memref.load %arg3[%c9_120] : memref<16xf32, #tpu.memory_space<smem>>
    %c0_121 = arith.constant 0 : index
    %c1_122 = arith.constant 1 : index
    %c0_123 = arith.constant 0 : index
    %c0_124 = arith.constant 0 : index
    %208 = vector.load %arg10[%c0_121, %c1_122, %c0_123, %c0_124] : memref<1x4x16x128xf32, #tpu.memory_space<vmem>>, vector<1x1x16x128xf32>
    %209 = vector.shape_cast %208 : vector<1x1x16x128xf32> to vector<16x128xf32>
    %c0_125 = arith.constant 0 : index
    %c1_126 = arith.constant 1 : index
    %c0_127 = arith.constant 0 : index
    %c0_128 = arith.constant 0 : index
    %210 = vector.load %arg11[%c0_125, %c1_126, %c0_127, %c0_128] : memref<1x4x16x128xf32, #tpu.memory_space<vmem>>, vector<1x1x16x128xf32>
    %211 = vector.shape_cast %210 : vector<1x1x16x128xf32> to vector<16x128xf32>
    %212 = vector.broadcast %206 : f32 to vector<16x128xf32>
    %213 = arith.mulf %212, %209 : vector<16x128xf32>
    %214 = arith.addf %199, %213 : vector<16x128xf32>
    %215 = vector.broadcast %207 : f32 to vector<16x128xf32>
    %216 = arith.mulf %215, %211 : vector<16x128xf32>
    %217 = arith.subf %214, %216 : vector<16x128xf32>
    %218 = vector.broadcast %206 : f32 to vector<16x128xf32>
    %219 = arith.mulf %218, %211 : vector<16x128xf32>
    %220 = arith.addf %205, %219 : vector<16x128xf32>
    %221 = vector.broadcast %207 : f32 to vector<16x128xf32>
    %222 = arith.mulf %221, %209 : vector<16x128xf32>
    %223 = arith.addf %220, %222 : vector<16x128xf32>
    %c10 = arith.constant 10 : index
    %224 = memref.load %arg2[%c10] : memref<16xf32, #tpu.memory_space<smem>>
    %c10_129 = arith.constant 10 : index
    %225 = memref.load %arg3[%c10_129] : memref<16xf32, #tpu.memory_space<smem>>
    %c0_130 = arith.constant 0 : index
    %c2_131 = arith.constant 2 : index
    %c0_132 = arith.constant 0 : index
    %c0_133 = arith.constant 0 : index
    %226 = vector.load %arg10[%c0_130, %c2_131, %c0_132, %c0_133] : memref<1x4x16x128xf32, #tpu.memory_space<vmem>>, vector<1x1x16x128xf32>
    %227 = vector.shape_cast %226 : vector<1x1x16x128xf32> to vector<16x128xf32>
    %c0_134 = arith.constant 0 : index
    %c2_135 = arith.constant 2 : index
    %c0_136 = arith.constant 0 : index
    %c0_137 = arith.constant 0 : index
    %228 = vector.load %arg11[%c0_134, %c2_135, %c0_136, %c0_137] : memref<1x4x16x128xf32, #tpu.memory_space<vmem>>, vector<1x1x16x128xf32>
    %229 = vector.shape_cast %228 : vector<1x1x16x128xf32> to vector<16x128xf32>
    %230 = vector.broadcast %224 : f32 to vector<16x128xf32>
    %231 = arith.mulf %230, %227 : vector<16x128xf32>
    %232 = arith.addf %217, %231 : vector<16x128xf32>
    %233 = vector.broadcast %225 : f32 to vector<16x128xf32>
    %234 = arith.mulf %233, %229 : vector<16x128xf32>
    %235 = arith.subf %232, %234 : vector<16x128xf32>
    %236 = vector.broadcast %224 : f32 to vector<16x128xf32>
    %237 = arith.mulf %236, %229 : vector<16x128xf32>
    %238 = arith.addf %223, %237 : vector<16x128xf32>
    %239 = vector.broadcast %225 : f32 to vector<16x128xf32>
    %240 = arith.mulf %239, %227 : vector<16x128xf32>
    %241 = arith.addf %238, %240 : vector<16x128xf32>
    %c11 = arith.constant 11 : index
    %242 = memref.load %arg2[%c11] : memref<16xf32, #tpu.memory_space<smem>>
    %c11_138 = arith.constant 11 : index
    %243 = memref.load %arg3[%c11_138] : memref<16xf32, #tpu.memory_space<smem>>
    %c0_139 = arith.constant 0 : index
    %c3_140 = arith.constant 3 : index
    %c0_141 = arith.constant 0 : index
    %c0_142 = arith.constant 0 : index
    %244 = vector.load %arg10[%c0_139, %c3_140, %c0_141, %c0_142] : memref<1x4x16x128xf32, #tpu.memory_space<vmem>>, vector<1x1x16x128xf32>
    %245 = vector.shape_cast %244 : vector<1x1x16x128xf32> to vector<16x128xf32>
    %c0_143 = arith.constant 0 : index
    %c3_144 = arith.constant 3 : index
    %c0_145 = arith.constant 0 : index
    %c0_146 = arith.constant 0 : index
    %246 = vector.load %arg11[%c0_143, %c3_144, %c0_145, %c0_146] : memref<1x4x16x128xf32, #tpu.memory_space<vmem>>, vector<1x1x16x128xf32>
    %247 = vector.shape_cast %246 : vector<1x1x16x128xf32> to vector<16x128xf32>
    %248 = vector.broadcast %242 : f32 to vector<16x128xf32>
    %249 = arith.mulf %248, %245 : vector<16x128xf32>
    %250 = arith.addf %235, %249 : vector<16x128xf32>
    %251 = vector.broadcast %243 : f32 to vector<16x128xf32>
    %252 = arith.mulf %251, %247 : vector<16x128xf32>
    %253 = arith.subf %250, %252 : vector<16x128xf32>
    %254 = vector.broadcast %242 : f32 to vector<16x128xf32>
    %255 = arith.mulf %254, %247 : vector<16x128xf32>
    %256 = arith.addf %241, %255 : vector<16x128xf32>
    %257 = vector.broadcast %243 : f32 to vector<16x128xf32>
    %258 = arith.mulf %257, %245 : vector<16x128xf32>
    %259 = arith.addf %256, %258 : vector<16x128xf32>
    %c0_147 = arith.constant 0 : index
    %c2_148 = arith.constant 2 : index
    %c0_149 = arith.constant 0 : index
    %c0_150 = arith.constant 0 : index
    %260 = vector.load %arg12[%c0_147, %c2_148, %c0_149, %c0_150] : memref<1x4x16x128xf32, #tpu.memory_space<vmem>>, vector<1x1x16x128xf32>
    %261 = vector.shape_cast %260 : vector<1x1x16x128xf32> to vector<16x128xf32>
    %262 = vector.shape_cast %253 : vector<16x128xf32> to vector<1x1x16x128xf32>
    tpu.vector_store %arg12[%c0_147, %c2_148, %c0_149, %c0_150], %262 {strides = array<i32>} : memref<1x4x16x128xf32, #tpu.memory_space<vmem>>, vector<1x1x16x128xf32>,
    %c0_151 = arith.constant 0 : index
    %c2_152 = arith.constant 2 : index
    %c0_153 = arith.constant 0 : index
    %c0_154 = arith.constant 0 : index
    %263 = vector.load %arg13[%c0_151, %c2_152, %c0_153, %c0_154] : memref<1x4x16x128xf32, #tpu.memory_space<vmem>>, vector<1x1x16x128xf32>
    %264 = vector.shape_cast %263 : vector<1x1x16x128xf32> to vector<16x128xf32>
    %265 = vector.shape_cast %259 : vector<16x128xf32> to vector<1x1x16x128xf32>
    tpu.vector_store %arg13[%c0_151, %c2_152, %c0_153, %c0_154], %265 {strides = array<i32>} : memref<1x4x16x128xf32, #tpu.memory_space<vmem>>, vector<1x1x16x128xf32>,
    %c0_155 = arith.constant 0 : index
    %c2_156 = arith.constant 2 : index
    %c0_157 = arith.constant 0 : index
    %c0_158 = arith.constant 0 : index
    %266 = vector.load %arg8[%c0_155, %c2_156, %c0_157, %c0_158] : memref<1x4x16x128xf32, #tpu.memory_space<vmem>>, vector<1x1x16x128xf32>
    %267 = vector.shape_cast %266 : vector<1x1x16x128xf32> to vector<16x128xf32>
    %c0_159 = arith.constant 0 : index
    %c2_160 = arith.constant 2 : index
    %c0_161 = arith.constant 0 : index
    %c0_162 = arith.constant 0 : index
    %268 = vector.load %arg9[%c0_159, %c2_160, %c0_161, %c0_162] : memref<1x4x16x128xf32, #tpu.memory_space<vmem>>, vector<1x1x16x128xf32>
    %269 = vector.shape_cast %268 : vector<1x1x16x128xf32> to vector<16x128xf32>
    %270 = arith.mulf %267, %253 : vector<16x128xf32>
    %271 = arith.addf %181, %270 : vector<16x128xf32>
    %272 = arith.mulf %269, %259 : vector<16x128xf32>
    %273 = arith.addf %271, %272 : vector<16x128xf32>
    %274 = arith.mulf %269, %253 : vector<16x128xf32>
    %275 = arith.addf %185, %274 : vector<16x128xf32>
    %276 = arith.mulf %267, %259 : vector<16x128xf32>
    %277 = arith.subf %275, %276 : vector<16x128xf32>
    %cst_163 = arith.constant 0.000000e+00 : f32
    %278 = vector.broadcast %cst_163 : f32 to vector<16x128xf32>
    %cst_164 = arith.constant 0.000000e+00 : f32
    %279 = vector.broadcast %cst_164 : f32 to vector<16x128xf32>
    %c12 = arith.constant 12 : index
    %280 = memref.load %arg2[%c12] : memref<16xf32, #tpu.memory_space<smem>>
    %c12_165 = arith.constant 12 : index
    %281 = memref.load %arg3[%c12_165] : memref<16xf32, #tpu.memory_space<smem>>
    %c0_166 = arith.constant 0 : index
    %c0_167 = arith.constant 0 : index
    %c0_168 = arith.constant 0 : index
    %c0_169 = arith.constant 0 : index
    %282 = vector.load %arg10[%c0_166, %c0_167, %c0_168, %c0_169] : memref<1x4x16x128xf32, #tpu.memory_space<vmem>>, vector<1x1x16x128xf32>
    %283 = vector.shape_cast %282 : vector<1x1x16x128xf32> to vector<16x128xf32>
    %c0_170 = arith.constant 0 : index
    %c0_171 = arith.constant 0 : index
    %c0_172 = arith.constant 0 : index
    %c0_173 = arith.constant 0 : index
    %284 = vector.load %arg11[%c0_170, %c0_171, %c0_172, %c0_173] : memref<1x4x16x128xf32, #tpu.memory_space<vmem>>, vector<1x1x16x128xf32>
    %285 = vector.shape_cast %284 : vector<1x1x16x128xf32> to vector<16x128xf32>
    %286 = vector.broadcast %280 : f32 to vector<16x128xf32>
    %287 = arith.mulf %286, %283 : vector<16x128xf32>
    %288 = arith.addf %278, %287 : vector<16x128xf32>
    %289 = vector.broadcast %281 : f32 to vector<16x128xf32>
    %290 = arith.mulf %289, %285 : vector<16x128xf32>
    %291 = arith.subf %288, %290 : vector<16x128xf32>
    %292 = vector.broadcast %280 : f32 to vector<16x128xf32>
    %293 = arith.mulf %292, %285 : vector<16x128xf32>
    %294 = arith.addf %279, %293 : vector<16x128xf32>
    %295 = vector.broadcast %281 : f32 to vector<16x128xf32>
    %296 = arith.mulf %295, %283 : vector<16x128xf32>
    %297 = arith.addf %294, %296 : vector<16x128xf32>
    %c13 = arith.constant 13 : index
    %298 = memref.load %arg2[%c13] : memref<16xf32, #tpu.memory_space<smem>>
    %c13_174 = arith.constant 13 : index
    %299 = memref.load %arg3[%c13_174] : memref<16xf32, #tpu.memory_space<smem>>
    %c0_175 = arith.constant 0 : index
    %c1_176 = arith.constant 1 : index
    %c0_177 = arith.constant 0 : index
    %c0_178 = arith.constant 0 : index
    %300 = vector.load %arg10[%c0_175, %c1_176, %c0_177, %c0_178] : memref<1x4x16x128xf32, #tpu.memory_space<vmem>>, vector<1x1x16x128xf32>
    %301 = vector.shape_cast %300 : vector<1x1x16x128xf32> to vector<16x128xf32>
    %c0_179 = arith.constant 0 : index
    %c1_180 = arith.constant 1 : index
    %c0_181 = arith.constant 0 : index
    %c0_182 = arith.constant 0 : index
    %302 = vector.load %arg11[%c0_179, %c1_180, %c0_181, %c0_182] : memref<1x4x16x128xf32, #tpu.memory_space<vmem>>, vector<1x1x16x128xf32>
    %303 = vector.shape_cast %302 : vector<1x1x16x128xf32> to vector<16x128xf32>
    %304 = vector.broadcast %298 : f32 to vector<16x128xf32>
    %305 = arith.mulf %304, %301 : vector<16x128xf32>
    %306 = arith.addf %291, %305 : vector<16x128xf32>
    %307 = vector.broadcast %299 : f32 to vector<16x128xf32>
    %308 = arith.mulf %307, %303 : vector<16x128xf32>
    %309 = arith.subf %306, %308 : vector<16x128xf32>
    %310 = vector.broadcast %298 : f32 to vector<16x128xf32>
    %311 = arith.mulf %310, %303 : vector<16x128xf32>
    %312 = arith.addf %297, %311 : vector<16x128xf32>
    %313 = vector.broadcast %299 : f32 to vector<16x128xf32>
    %314 = arith.mulf %313, %301 : vector<16x128xf32>
    %315 = arith.addf %312, %314 : vector<16x128xf32>
    %c14 = arith.constant 14 : index
    %316 = memref.load %arg2[%c14] : memref<16xf32, #tpu.memory_space<smem>>
    %c14_183 = arith.constant 14 : index
    %317 = memref.load %arg3[%c14_183] : memref<16xf32, #tpu.memory_space<smem>>
    %c0_184 = arith.constant 0 : index
    %c2_185 = arith.constant 2 : index
    %c0_186 = arith.constant 0 : index
    %c0_187 = arith.constant 0 : index
    %318 = vector.load %arg10[%c0_184, %c2_185, %c0_186, %c0_187] : memref<1x4x16x128xf32, #tpu.memory_space<vmem>>, vector<1x1x16x128xf32>
    %319 = vector.shape_cast %318 : vector<1x1x16x128xf32> to vector<16x128xf32>
    %c0_188 = arith.constant 0 : index
    %c2_189 = arith.constant 2 : index
    %c0_190 = arith.constant 0 : index
    %c0_191 = arith.constant 0 : index
    %320 = vector.load %arg11[%c0_188, %c2_189, %c0_190, %c0_191] : memref<1x4x16x128xf32, #tpu.memory_space<vmem>>, vector<1x1x16x128xf32>
    %321 = vector.shape_cast %320 : vector<1x1x16x128xf32> to vector<16x128xf32>
    %322 = vector.broadcast %316 : f32 to vector<16x128xf32>
    %323 = arith.mulf %322, %319 : vector<16x128xf32>
    %324 = arith.addf %309, %323 : vector<16x128xf32>
    %325 = vector.broadcast %317 : f32 to vector<16x128xf32>
    %326 = arith.mulf %325, %321 : vector<16x128xf32>
    %327 = arith.subf %324, %326 : vector<16x128xf32>
    %328 = vector.broadcast %316 : f32 to vector<16x128xf32>
    %329 = arith.mulf %328, %321 : vector<16x128xf32>
    %330 = arith.addf %315, %329 : vector<16x128xf32>
    %331 = vector.broadcast %317 : f32 to vector<16x128xf32>
    %332 = arith.mulf %331, %319 : vector<16x128xf32>
    %333 = arith.addf %330, %332 : vector<16x128xf32>
    %c15 = arith.constant 15 : index
    %334 = memref.load %arg2[%c15] : memref<16xf32, #tpu.memory_space<smem>>
    %c15_192 = arith.constant 15 : index
    %335 = memref.load %arg3[%c15_192] : memref<16xf32, #tpu.memory_space<smem>>
    %c0_193 = arith.constant 0 : index
    %c3_194 = arith.constant 3 : index
    %c0_195 = arith.constant 0 : index
    %c0_196 = arith.constant 0 : index
    %336 = vector.load %arg10[%c0_193, %c3_194, %c0_195, %c0_196] : memref<1x4x16x128xf32, #tpu.memory_space<vmem>>, vector<1x1x16x128xf32>
    %337 = vector.shape_cast %336 : vector<1x1x16x128xf32> to vector<16x128xf32>
    %c0_197 = arith.constant 0 : index
    %c3_198 = arith.constant 3 : index
    %c0_199 = arith.constant 0 : index
    %c0_200 = arith.constant 0 : index
    %338 = vector.load %arg11[%c0_197, %c3_198, %c0_199, %c0_200] : memref<1x4x16x128xf32, #tpu.memory_space<vmem>>, vector<1x1x16x128xf32>
    %339 = vector.shape_cast %338 : vector<1x1x16x128xf32> to vector<16x128xf32>
    %340 = vector.broadcast %334 : f32 to vector<16x128xf32>
    %341 = arith.mulf %340, %337 : vector<16x128xf32>
    %342 = arith.addf %327, %341 : vector<16x128xf32>
    %343 = vector.broadcast %335 : f32 to vector<16x128xf32>
    %344 = arith.mulf %343, %339 : vector<16x128xf32>
    %345 = arith.subf %342, %344 : vector<16x128xf32>
    %346 = vector.broadcast %334 : f32 to vector<16x128xf32>
    %347 = arith.mulf %346, %339 : vector<16x128xf32>
    %348 = arith.addf %333, %347 : vector<16x128xf32>
    %349 = vector.broadcast %335 : f32 to vector<16x128xf32>
    %350 = arith.mulf %349, %337 : vector<16x128xf32>
    %351 = arith.addf %348, %350 : vector<16x128xf32>
    %c0_201 = arith.constant 0 : index
    %c3_202 = arith.constant 3 : index
    %c0_203 = arith.constant 0 : index
    %c0_204 = arith.constant 0 : index
    %352 = vector.load %arg12[%c0_201, %c3_202, %c0_203, %c0_204] : memref<1x4x16x128xf32, #tpu.memory_space<vmem>>, vector<1x1x16x128xf32>
    %353 = vector.shape_cast %352 : vector<1x1x16x128xf32> to vector<16x128xf32>
    %354 = vector.shape_cast %345 : vector<16x128xf32> to vector<1x1x16x128xf32>
    tpu.vector_store %arg12[%c0_201, %c3_202, %c0_203, %c0_204], %354 {strides = array<i32>} : memref<1x4x16x128xf32, #tpu.memory_space<vmem>>, vector<1x1x16x128xf32>,
    %c0_205 = arith.constant 0 : index
    %c3_206 = arith.constant 3 : index
    %c0_207 = arith.constant 0 : index
    %c0_208 = arith.constant 0 : index
    %355 = vector.load %arg13[%c0_205, %c3_206, %c0_207, %c0_208] : memref<1x4x16x128xf32, #tpu.memory_space<vmem>>, vector<1x1x16x128xf32>
    %356 = vector.shape_cast %355 : vector<1x1x16x128xf32> to vector<16x128xf32>
    %357 = vector.shape_cast %351 : vector<16x128xf32> to vector<1x1x16x128xf32>
    tpu.vector_store %arg13[%c0_205, %c3_206, %c0_207, %c0_208], %357 {strides = array<i32>} : memref<1x4x16x128xf32, #tpu.memory_space<vmem>>, vector<1x1x16x128xf32>,
    %c0_209 = arith.constant 0 : index
    %c3_210 = arith.constant 3 : index
    %c0_211 = arith.constant 0 : index
    %c0_212 = arith.constant 0 : index
    %358 = vector.load %arg8[%c0_209, %c3_210, %c0_211, %c0_212] : memref<1x4x16x128xf32, #tpu.memory_space<vmem>>, vector<1x1x16x128xf32>
    %359 = vector.shape_cast %358 : vector<1x1x16x128xf32> to vector<16x128xf32>
    %c0_213 = arith.constant 0 : index
    %c3_214 = arith.constant 3 : index
    %c0_215 = arith.constant 0 : index
    %c0_216 = arith.constant 0 : index
    %360 = vector.load %arg9[%c0_213, %c3_214, %c0_215, %c0_216] : memref<1x4x16x128xf32, #tpu.memory_space<vmem>>, vector<1x1x16x128xf32>
    %361 = vector.shape_cast %360 : vector<1x1x16x128xf32> to vector<16x128xf32>
    %362 = arith.mulf %359, %345 : vector<16x128xf32>
    %363 = arith.addf %273, %362 : vector<16x128xf32>
    %364 = arith.mulf %361, %351 : vector<16x128xf32>
    %365 = arith.addf %363, %364 : vector<16x128xf32>
    %366 = arith.mulf %361, %345 : vector<16x128xf32>
    %367 = arith.addf %277, %366 : vector<16x128xf32>
    %368 = arith.mulf %359, %351 : vector<16x128xf32>
    %369 = arith.subf %367, %368 : vector<16x128xf32>
    %cst_217 = arith.constant 0.000000e+00 : f32
    %370 = vector.broadcast %cst_217 : f32 to vector<16x128xf32>
    %cst_218 = arith.constant 0.000000e+00 : f32
    %371 = vector.broadcast %cst_218 : f32 to vector<16x128xf32>
    %c0_219 = arith.constant 0 : index
    %372 = memref.load %arg4[%c0_219] : memref<64xf32, #tpu.memory_space<smem>>
    %373 = vector.broadcast %372 : f32 to vector<16x128xf32>
    %374 = arith.mulf %373, %365 : vector<16x128xf32>
    %c1_220 = arith.constant 1 : index
    %375 = memref.load %arg4[%c1_220] : memref<64xf32, #tpu.memory_space<smem>>
    %376 = vector.broadcast %375 : f32 to vector<16x128xf32>
    %377 = arith.mulf %376, %369 : vector<16x128xf32>
    %378 = arith.addf %374, %377 : vector<16x128xf32>
    %c0_221 = arith.constant 0 : index
    %379 = memref.load %arg5[%c0_221] : memref<32xf32, #tpu.memory_space<smem>>
    %380 = vector.broadcast %379 : f32 to vector<16x128xf32>
    %381 = arith.addf %378, %380 : vector<16x128xf32>
    %cst_222 = arith.constant 0.000000e+00 : f32
    %382 = vector.broadcast %cst_222 : f32 to vector<16x128xf32>
    %383 = arith.maximumf %381, %382 : vector<16x128xf32>
    %c0_223 = arith.constant 0 : index
    %384 = memref.load %arg6[%c0_223] : memref<64xf32, #tpu.memory_space<smem>>
    %385 = vector.broadcast %384 : f32 to vector<16x128xf32>
    %386 = arith.mulf %385, %383 : vector<16x128xf32>
    %387 = arith.addf %370, %386 : vector<16x128xf32>
    %c32 = arith.constant 32 : index
    %388 = memref.load %arg6[%c32] : memref<64xf32, #tpu.memory_space<smem>>
    %389 = vector.broadcast %388 : f32 to vector<16x128xf32>
    %390 = arith.mulf %389, %383 : vector<16x128xf32>
    %391 = arith.addf %371, %390 : vector<16x128xf32>
    %c2_224 = arith.constant 2 : index
    %392 = memref.load %arg4[%c2_224] : memref<64xf32, #tpu.memory_space<smem>>
    %393 = vector.broadcast %392 : f32 to vector<16x128xf32>
    %394 = arith.mulf %393, %365 : vector<16x128xf32>
    %c3_225 = arith.constant 3 : index
    %395 = memref.load %arg4[%c3_225] : memref<64xf32, #tpu.memory_space<smem>>
    %396 = vector.broadcast %395 : f32 to vector<16x128xf32>
    %397 = arith.mulf %396, %369 : vector<16x128xf32>
    %398 = arith.addf %394, %397 : vector<16x128xf32>
    %c1_226 = arith.constant 1 : index
    %399 = memref.load %arg5[%c1_226] : memref<32xf32, #tpu.memory_space<smem>>
    %400 = vector.broadcast %399 : f32 to vector<16x128xf32>
    %401 = arith.addf %398, %400 : vector<16x128xf32>
    %cst_227 = arith.constant 0.000000e+00 : f32
    %402 = vector.broadcast %cst_227 : f32 to vector<16x128xf32>
    %403 = arith.maximumf %401, %402 : vector<16x128xf32>
    %c1_228 = arith.constant 1 : index
    %404 = memref.load %arg6[%c1_228] : memref<64xf32, #tpu.memory_space<smem>>
    %405 = vector.broadcast %404 : f32 to vector<16x128xf32>
    %406 = arith.mulf %405, %403 : vector<16x128xf32>
    %407 = arith.addf %387, %406 : vector<16x128xf32>
    %c33 = arith.constant 33 : index
    %408 = memref.load %arg6[%c33] : memref<64xf32, #tpu.memory_space<smem>>
    %409 = vector.broadcast %408 : f32 to vector<16x128xf32>
    %410 = arith.mulf %409, %403 : vector<16x128xf32>
    %411 = arith.addf %391, %410 : vector<16x128xf32>
    %c4_229 = arith.constant 4 : index
    %412 = memref.load %arg4[%c4_229] : memref<64xf32, #tpu.memory_space<smem>>
    %413 = vector.broadcast %412 : f32 to vector<16x128xf32>
    %414 = arith.mulf %413, %365 : vector<16x128xf32>
    %c5_230 = arith.constant 5 : index
    %415 = memref.load %arg4[%c5_230] : memref<64xf32, #tpu.memory_space<smem>>
    %416 = vector.broadcast %415 : f32 to vector<16x128xf32>
    %417 = arith.mulf %416, %369 : vector<16x128xf32>
    %418 = arith.addf %414, %417 : vector<16x128xf32>
    %c2_231 = arith.constant 2 : index
    %419 = memref.load %arg5[%c2_231] : memref<32xf32, #tpu.memory_space<smem>>
    %420 = vector.broadcast %419 : f32 to vector<16x128xf32>
    %421 = arith.addf %418, %420 : vector<16x128xf32>
    %cst_232 = arith.constant 0.000000e+00 : f32
    %422 = vector.broadcast %cst_232 : f32 to vector<16x128xf32>
    %423 = arith.maximumf %421, %422 : vector<16x128xf32>
    %c2_233 = arith.constant 2 : index
    %424 = memref.load %arg6[%c2_233] : memref<64xf32, #tpu.memory_space<smem>>
    %425 = vector.broadcast %424 : f32 to vector<16x128xf32>
    %426 = arith.mulf %425, %423 : vector<16x128xf32>
    %427 = arith.addf %407, %426 : vector<16x128xf32>
    %c34 = arith.constant 34 : index
    %428 = memref.load %arg6[%c34] : memref<64xf32, #tpu.memory_space<smem>>
    %429 = vector.broadcast %428 : f32 to vector<16x128xf32>
    %430 = arith.mulf %429, %423 : vector<16x128xf32>
    %431 = arith.addf %411, %430 : vector<16x128xf32>
    %c6_234 = arith.constant 6 : index
    %432 = memref.load %arg4[%c6_234] : memref<64xf32, #tpu.memory_space<smem>>
    %433 = vector.broadcast %432 : f32 to vector<16x128xf32>
    %434 = arith.mulf %433, %365 : vector<16x128xf32>
    %c7_235 = arith.constant 7 : index
    %435 = memref.load %arg4[%c7_235] : memref<64xf32, #tpu.memory_space<smem>>
    %436 = vector.broadcast %435 : f32 to vector<16x128xf32>
    %437 = arith.mulf %436, %369 : vector<16x128xf32>
    %438 = arith.addf %434, %437 : vector<16x128xf32>
    %c3_236 = arith.constant 3 : index
    %439 = memref.load %arg5[%c3_236] : memref<32xf32, #tpu.memory_space<smem>>
    %440 = vector.broadcast %439 : f32 to vector<16x128xf32>
    %441 = arith.addf %438, %440 : vector<16x128xf32>
    %cst_237 = arith.constant 0.000000e+00 : f32
    %442 = vector.broadcast %cst_237 : f32 to vector<16x128xf32>
    %443 = arith.maximumf %441, %442 : vector<16x128xf32>
    %c3_238 = arith.constant 3 : index
    %444 = memref.load %arg6[%c3_238] : memref<64xf32, #tpu.memory_space<smem>>
    %445 = vector.broadcast %444 : f32 to vector<16x128xf32>
    %446 = arith.mulf %445, %443 : vector<16x128xf32>
    %447 = arith.addf %427, %446 : vector<16x128xf32>
    %c35 = arith.constant 35 : index
    %448 = memref.load %arg6[%c35] : memref<64xf32, #tpu.memory_space<smem>>
    %449 = vector.broadcast %448 : f32 to vector<16x128xf32>
    %450 = arith.mulf %449, %443 : vector<16x128xf32>
    %451 = arith.addf %431, %450 : vector<16x128xf32>
    %c8_239 = arith.constant 8 : index
    %452 = memref.load %arg4[%c8_239] : memref<64xf32, #tpu.memory_space<smem>>
    %453 = vector.broadcast %452 : f32 to vector<16x128xf32>
    %454 = arith.mulf %453, %365 : vector<16x128xf32>
    %c9_240 = arith.constant 9 : index
    %455 = memref.load %arg4[%c9_240] : memref<64xf32, #tpu.memory_space<smem>>
    %456 = vector.broadcast %455 : f32 to vector<16x128xf32>
    %457 = arith.mulf %456, %369 : vector<16x128xf32>
    %458 = arith.addf %454, %457 : vector<16x128xf32>
    %c4_241 = arith.constant 4 : index
    %459 = memref.load %arg5[%c4_241] : memref<32xf32, #tpu.memory_space<smem>>
    %460 = vector.broadcast %459 : f32 to vector<16x128xf32>
    %461 = arith.addf %458, %460 : vector<16x128xf32>
    %cst_242 = arith.constant 0.000000e+00 : f32
    %462 = vector.broadcast %cst_242 : f32 to vector<16x128xf32>
    %463 = arith.maximumf %461, %462 : vector<16x128xf32>
    %c4_243 = arith.constant 4 : index
    %464 = memref.load %arg6[%c4_243] : memref<64xf32, #tpu.memory_space<smem>>
    %465 = vector.broadcast %464 : f32 to vector<16x128xf32>
    %466 = arith.mulf %465, %463 : vector<16x128xf32>
    %467 = arith.addf %447, %466 : vector<16x128xf32>
    %c36 = arith.constant 36 : index
    %468 = memref.load %arg6[%c36] : memref<64xf32, #tpu.memory_space<smem>>
    %469 = vector.broadcast %468 : f32 to vector<16x128xf32>
    %470 = arith.mulf %469, %463 : vector<16x128xf32>
    %471 = arith.addf %451, %470 : vector<16x128xf32>
    %c10_244 = arith.constant 10 : index
    %472 = memref.load %arg4[%c10_244] : memref<64xf32, #tpu.memory_space<smem>>
    %473 = vector.broadcast %472 : f32 to vector<16x128xf32>
    %474 = arith.mulf %473, %365 : vector<16x128xf32>
    %c11_245 = arith.constant 11 : index
    %475 = memref.load %arg4[%c11_245] : memref<64xf32, #tpu.memory_space<smem>>
    %476 = vector.broadcast %475 : f32 to vector<16x128xf32>
    %477 = arith.mulf %476, %369 : vector<16x128xf32>
    %478 = arith.addf %474, %477 : vector<16x128xf32>
    %c5_246 = arith.constant 5 : index
    %479 = memref.load %arg5[%c5_246] : memref<32xf32, #tpu.memory_space<smem>>
    %480 = vector.broadcast %479 : f32 to vector<16x128xf32>
    %481 = arith.addf %478, %480 : vector<16x128xf32>
    %cst_247 = arith.constant 0.000000e+00 : f32
    %482 = vector.broadcast %cst_247 : f32 to vector<16x128xf32>
    %483 = arith.maximumf %481, %482 : vector<16x128xf32>
    %c5_248 = arith.constant 5 : index
    %484 = memref.load %arg6[%c5_248] : memref<64xf32, #tpu.memory_space<smem>>
    %485 = vector.broadcast %484 : f32 to vector<16x128xf32>
    %486 = arith.mulf %485, %483 : vector<16x128xf32>
    %487 = arith.addf %467, %486 : vector<16x128xf32>
    %c37 = arith.constant 37 : index
    %488 = memref.load %arg6[%c37] : memref<64xf32, #tpu.memory_space<smem>>
    %489 = vector.broadcast %488 : f32 to vector<16x128xf32>
    %490 = arith.mulf %489, %483 : vector<16x128xf32>
    %491 = arith.addf %471, %490 : vector<16x128xf32>
    %c12_249 = arith.constant 12 : index
    %492 = memref.load %arg4[%c12_249] : memref<64xf32, #tpu.memory_space<smem>>
    %493 = vector.broadcast %492 : f32 to vector<16x128xf32>
    %494 = arith.mulf %493, %365 : vector<16x128xf32>
    %c13_250 = arith.constant 13 : index
    %495 = memref.load %arg4[%c13_250] : memref<64xf32, #tpu.memory_space<smem>>
    %496 = vector.broadcast %495 : f32 to vector<16x128xf32>
    %497 = arith.mulf %496, %369 : vector<16x128xf32>
    %498 = arith.addf %494, %497 : vector<16x128xf32>
    %c6_251 = arith.constant 6 : index
    %499 = memref.load %arg5[%c6_251] : memref<32xf32, #tpu.memory_space<smem>>
    %500 = vector.broadcast %499 : f32 to vector<16x128xf32>
    %501 = arith.addf %498, %500 : vector<16x128xf32>
    %cst_252 = arith.constant 0.000000e+00 : f32
    %502 = vector.broadcast %cst_252 : f32 to vector<16x128xf32>
    %503 = arith.maximumf %501, %502 : vector<16x128xf32>
    %c6_253 = arith.constant 6 : index
    %504 = memref.load %arg6[%c6_253] : memref<64xf32, #tpu.memory_space<smem>>
    %505 = vector.broadcast %504 : f32 to vector<16x128xf32>
    %506 = arith.mulf %505, %503 : vector<16x128xf32>
    %507 = arith.addf %487, %506 : vector<16x128xf32>
    %c38 = arith.constant 38 : index
    %508 = memref.load %arg6[%c38] : memref<64xf32, #tpu.memory_space<smem>>
    %509 = vector.broadcast %508 : f32 to vector<16x128xf32>
    %510 = arith.mulf %509, %503 : vector<16x128xf32>
    %511 = arith.addf %491, %510 : vector<16x128xf32>
    %c14_254 = arith.constant 14 : index
    %512 = memref.load %arg4[%c14_254] : memref<64xf32, #tpu.memory_space<smem>>
    %513 = vector.broadcast %512 : f32 to vector<16x128xf32>
    %514 = arith.mulf %513, %365 : vector<16x128xf32>
    %c15_255 = arith.constant 15 : index
    %515 = memref.load %arg4[%c15_255] : memref<64xf32, #tpu.memory_space<smem>>
    %516 = vector.broadcast %515 : f32 to vector<16x128xf32>
    %517 = arith.mulf %516, %369 : vector<16x128xf32>
    %518 = arith.addf %514, %517 : vector<16x128xf32>
    %c7_256 = arith.constant 7 : index
    %519 = memref.load %arg5[%c7_256] : memref<32xf32, #tpu.memory_space<smem>>
    %520 = vector.broadcast %519 : f32 to vector<16x128xf32>
    %521 = arith.addf %518, %520 : vector<16x128xf32>
    %cst_257 = arith.constant 0.000000e+00 : f32
    %522 = vector.broadcast %cst_257 : f32 to vector<16x128xf32>
    %523 = arith.maximumf %521, %522 : vector<16x128xf32>
    %c7_258 = arith.constant 7 : index
    %524 = memref.load %arg6[%c7_258] : memref<64xf32, #tpu.memory_space<smem>>
    %525 = vector.broadcast %524 : f32 to vector<16x128xf32>
    %526 = arith.mulf %525, %523 : vector<16x128xf32>
    %527 = arith.addf %507, %526 : vector<16x128xf32>
    %c39 = arith.constant 39 : index
    %528 = memref.load %arg6[%c39] : memref<64xf32, #tpu.memory_space<smem>>
    %529 = vector.broadcast %528 : f32 to vector<16x128xf32>
    %530 = arith.mulf %529, %523 : vector<16x128xf32>
    %531 = arith.addf %511, %530 : vector<16x128xf32>
    %c16 = arith.constant 16 : index
    %532 = memref.load %arg4[%c16] : memref<64xf32, #tpu.memory_space<smem>>
    %533 = vector.broadcast %532 : f32 to vector<16x128xf32>
    %534 = arith.mulf %533, %365 : vector<16x128xf32>
    %c17 = arith.constant 17 : index
    %535 = memref.load %arg4[%c17] : memref<64xf32, #tpu.memory_space<smem>>
    %536 = vector.broadcast %535 : f32 to vector<16x128xf32>
    %537 = arith.mulf %536, %369 : vector<16x128xf32>
    %538 = arith.addf %534, %537 : vector<16x128xf32>
    %c8_259 = arith.constant 8 : index
    %539 = memref.load %arg5[%c8_259] : memref<32xf32, #tpu.memory_space<smem>>
    %540 = vector.broadcast %539 : f32 to vector<16x128xf32>
    %541 = arith.addf %538, %540 : vector<16x128xf32>
    %cst_260 = arith.constant 0.000000e+00 : f32
    %542 = vector.broadcast %cst_260 : f32 to vector<16x128xf32>
    %543 = arith.maximumf %541, %542 : vector<16x128xf32>
    %c8_261 = arith.constant 8 : index
    %544 = memref.load %arg6[%c8_261] : memref<64xf32, #tpu.memory_space<smem>>
    %545 = vector.broadcast %544 : f32 to vector<16x128xf32>
    %546 = arith.mulf %545, %543 : vector<16x128xf32>
    %547 = arith.addf %527, %546 : vector<16x128xf32>
    %c40 = arith.constant 40 : index
    %548 = memref.load %arg6[%c40] : memref<64xf32, #tpu.memory_space<smem>>
    %549 = vector.broadcast %548 : f32 to vector<16x128xf32>
    %550 = arith.mulf %549, %543 : vector<16x128xf32>
    %551 = arith.addf %531, %550 : vector<16x128xf32>
    %c18 = arith.constant 18 : index
    %552 = memref.load %arg4[%c18] : memref<64xf32, #tpu.memory_space<smem>>
    %553 = vector.broadcast %552 : f32 to vector<16x128xf32>
    %554 = arith.mulf %553, %365 : vector<16x128xf32>
    %c19 = arith.constant 19 : index
    %555 = memref.load %arg4[%c19] : memref<64xf32, #tpu.memory_space<smem>>
    %556 = vector.broadcast %555 : f32 to vector<16x128xf32>
    %557 = arith.mulf %556, %369 : vector<16x128xf32>
    %558 = arith.addf %554, %557 : vector<16x128xf32>
    %c9_262 = arith.constant 9 : index
    %559 = memref.load %arg5[%c9_262] : memref<32xf32, #tpu.memory_space<smem>>
    %560 = vector.broadcast %559 : f32 to vector<16x128xf32>
    %561 = arith.addf %558, %560 : vector<16x128xf32>
    %cst_263 = arith.constant 0.000000e+00 : f32
    %562 = vector.broadcast %cst_263 : f32 to vector<16x128xf32>
    %563 = arith.maximumf %561, %562 : vector<16x128xf32>
    %c9_264 = arith.constant 9 : index
    %564 = memref.load %arg6[%c9_264] : memref<64xf32, #tpu.memory_space<smem>>
    %565 = vector.broadcast %564 : f32 to vector<16x128xf32>
    %566 = arith.mulf %565, %563 : vector<16x128xf32>
    %567 = arith.addf %547, %566 : vector<16x128xf32>
    %c41 = arith.constant 41 : index
    %568 = memref.load %arg6[%c41] : memref<64xf32, #tpu.memory_space<smem>>
    %569 = vector.broadcast %568 : f32 to vector<16x128xf32>
    %570 = arith.mulf %569, %563 : vector<16x128xf32>
    %571 = arith.addf %551, %570 : vector<16x128xf32>
    %c20 = arith.constant 20 : index
    %572 = memref.load %arg4[%c20] : memref<64xf32, #tpu.memory_space<smem>>
    %573 = vector.broadcast %572 : f32 to vector<16x128xf32>
    %574 = arith.mulf %573, %365 : vector<16x128xf32>
    %c21 = arith.constant 21 : index
    %575 = memref.load %arg4[%c21] : memref<64xf32, #tpu.memory_space<smem>>
    %576 = vector.broadcast %575 : f32 to vector<16x128xf32>
    %577 = arith.mulf %576, %369 : vector<16x128xf32>
    %578 = arith.addf %574, %577 : vector<16x128xf32>
    %c10_265 = arith.constant 10 : index
    %579 = memref.load %arg5[%c10_265] : memref<32xf32, #tpu.memory_space<smem>>
    %580 = vector.broadcast %579 : f32 to vector<16x128xf32>
    %581 = arith.addf %578, %580 : vector<16x128xf32>
    %cst_266 = arith.constant 0.000000e+00 : f32
    %582 = vector.broadcast %cst_266 : f32 to vector<16x128xf32>
    %583 = arith.maximumf %581, %582 : vector<16x128xf32>
    %c10_267 = arith.constant 10 : index
    %584 = memref.load %arg6[%c10_267] : memref<64xf32, #tpu.memory_space<smem>>
    %585 = vector.broadcast %584 : f32 to vector<16x128xf32>
    %586 = arith.mulf %585, %583 : vector<16x128xf32>
    %587 = arith.addf %567, %586 : vector<16x128xf32>
    %c42 = arith.constant 42 : index
    %588 = memref.load %arg6[%c42] : memref<64xf32, #tpu.memory_space<smem>>
    %589 = vector.broadcast %588 : f32 to vector<16x128xf32>
    %590 = arith.mulf %589, %583 : vector<16x128xf32>
    %591 = arith.addf %571, %590 : vector<16x128xf32>
    %c22 = arith.constant 22 : index
    %592 = memref.load %arg4[%c22] : memref<64xf32, #tpu.memory_space<smem>>
    %593 = vector.broadcast %592 : f32 to vector<16x128xf32>
    %594 = arith.mulf %593, %365 : vector<16x128xf32>
    %c23 = arith.constant 23 : index
    %595 = memref.load %arg4[%c23] : memref<64xf32, #tpu.memory_space<smem>>
    %596 = vector.broadcast %595 : f32 to vector<16x128xf32>
    %597 = arith.mulf %596, %369 : vector<16x128xf32>
    %598 = arith.addf %594, %597 : vector<16x128xf32>
    %c11_268 = arith.constant 11 : index
    %599 = memref.load %arg5[%c11_268] : memref<32xf32, #tpu.memory_space<smem>>
    %600 = vector.broadcast %599 : f32 to vector<16x128xf32>
    %601 = arith.addf %598, %600 : vector<16x128xf32>
    %cst_269 = arith.constant 0.000000e+00 : f32
    %602 = vector.broadcast %cst_269 : f32 to vector<16x128xf32>
    %603 = arith.maximumf %601, %602 : vector<16x128xf32>
    %c11_270 = arith.constant 11 : index
    %604 = memref.load %arg6[%c11_270] : memref<64xf32, #tpu.memory_space<smem>>
    %605 = vector.broadcast %604 : f32 to vector<16x128xf32>
    %606 = arith.mulf %605, %603 : vector<16x128xf32>
    %607 = arith.addf %587, %606 : vector<16x128xf32>
    %c43 = arith.constant 43 : index
    %608 = memref.load %arg6[%c43] : memref<64xf32, #tpu.memory_space<smem>>
    %609 = vector.broadcast %608 : f32 to vector<16x128xf32>
    %610 = arith.mulf %609, %603 : vector<16x128xf32>
    %611 = arith.addf %591, %610 : vector<16x128xf32>
    %c24 = arith.constant 24 : index
    %612 = memref.load %arg4[%c24] : memref<64xf32, #tpu.memory_space<smem>>
    %613 = vector.broadcast %612 : f32 to vector<16x128xf32>
    %614 = arith.mulf %613, %365 : vector<16x128xf32>
    %c25 = arith.constant 25 : index
    %615 = memref.load %arg4[%c25] : memref<64xf32, #tpu.memory_space<smem>>
    %616 = vector.broadcast %615 : f32 to vector<16x128xf32>
    %617 = arith.mulf %616, %369 : vector<16x128xf32>
    %618 = arith.addf %614, %617 : vector<16x128xf32>
    %c12_271 = arith.constant 12 : index
    %619 = memref.load %arg5[%c12_271] : memref<32xf32, #tpu.memory_space<smem>>
    %620 = vector.broadcast %619 : f32 to vector<16x128xf32>
    %621 = arith.addf %618, %620 : vector<16x128xf32>
    %cst_272 = arith.constant 0.000000e+00 : f32
    %622 = vector.broadcast %cst_272 : f32 to vector<16x128xf32>
    %623 = arith.maximumf %621, %622 : vector<16x128xf32>
    %c12_273 = arith.constant 12 : index
    %624 = memref.load %arg6[%c12_273] : memref<64xf32, #tpu.memory_space<smem>>
    %625 = vector.broadcast %624 : f32 to vector<16x128xf32>
    %626 = arith.mulf %625, %623 : vector<16x128xf32>
    %627 = arith.addf %607, %626 : vector<16x128xf32>
    %c44 = arith.constant 44 : index
    %628 = memref.load %arg6[%c44] : memref<64xf32, #tpu.memory_space<smem>>
    %629 = vector.broadcast %628 : f32 to vector<16x128xf32>
    %630 = arith.mulf %629, %623 : vector<16x128xf32>
    %631 = arith.addf %611, %630 : vector<16x128xf32>
    %c26 = arith.constant 26 : index
    %632 = memref.load %arg4[%c26] : memref<64xf32, #tpu.memory_space<smem>>
    %633 = vector.broadcast %632 : f32 to vector<16x128xf32>
    %634 = arith.mulf %633, %365 : vector<16x128xf32>
    %c27 = arith.constant 27 : index
    %635 = memref.load %arg4[%c27] : memref<64xf32, #tpu.memory_space<smem>>
    %636 = vector.broadcast %635 : f32 to vector<16x128xf32>
    %637 = arith.mulf %636, %369 : vector<16x128xf32>
    %638 = arith.addf %634, %637 : vector<16x128xf32>
    %c13_274 = arith.constant 13 : index
    %639 = memref.load %arg5[%c13_274] : memref<32xf32, #tpu.memory_space<smem>>
    %640 = vector.broadcast %639 : f32 to vector<16x128xf32>
    %641 = arith.addf %638, %640 : vector<16x128xf32>
    %cst_275 = arith.constant 0.000000e+00 : f32
    %642 = vector.broadcast %cst_275 : f32 to vector<16x128xf32>
    %643 = arith.maximumf %641, %642 : vector<16x128xf32>
    %c13_276 = arith.constant 13 : index
    %644 = memref.load %arg6[%c13_276] : memref<64xf32, #tpu.memory_space<smem>>
    %645 = vector.broadcast %644 : f32 to vector<16x128xf32>
    %646 = arith.mulf %645, %643 : vector<16x128xf32>
    %647 = arith.addf %627, %646 : vector<16x128xf32>
    %c45 = arith.constant 45 : index
    %648 = memref.load %arg6[%c45] : memref<64xf32, #tpu.memory_space<smem>>
    %649 = vector.broadcast %648 : f32 to vector<16x128xf32>
    %650 = arith.mulf %649, %643 : vector<16x128xf32>
    %651 = arith.addf %631, %650 : vector<16x128xf32>
    %c28 = arith.constant 28 : index
    %652 = memref.load %arg4[%c28] : memref<64xf32, #tpu.memory_space<smem>>
    %653 = vector.broadcast %652 : f32 to vector<16x128xf32>
    %654 = arith.mulf %653, %365 : vector<16x128xf32>
    %c29 = arith.constant 29 : index
    %655 = memref.load %arg4[%c29] : memref<64xf32, #tpu.memory_space<smem>>
    %656 = vector.broadcast %655 : f32 to vector<16x128xf32>
    %657 = arith.mulf %656, %369 : vector<16x128xf32>
    %658 = arith.addf %654, %657 : vector<16x128xf32>
    %c14_277 = arith.constant 14 : index
    %659 = memref.load %arg5[%c14_277] : memref<32xf32, #tpu.memory_space<smem>>
    %660 = vector.broadcast %659 : f32 to vector<16x128xf32>
    %661 = arith.addf %658, %660 : vector<16x128xf32>
    %cst_278 = arith.constant 0.000000e+00 : f32
    %662 = vector.broadcast %cst_278 : f32 to vector<16x128xf32>
    %663 = arith.maximumf %661, %662 : vector<16x128xf32>
    %c14_279 = arith.constant 14 : index
    %664 = memref.load %arg6[%c14_279] : memref<64xf32, #tpu.memory_space<smem>>
    %665 = vector.broadcast %664 : f32 to vector<16x128xf32>
    %666 = arith.mulf %665, %663 : vector<16x128xf32>
    %667 = arith.addf %647, %666 : vector<16x128xf32>
    %c46 = arith.constant 46 : index
    %668 = memref.load %arg6[%c46] : memref<64xf32, #tpu.memory_space<smem>>
    %669 = vector.broadcast %668 : f32 to vector<16x128xf32>
    %670 = arith.mulf %669, %663 : vector<16x128xf32>
    %671 = arith.addf %651, %670 : vector<16x128xf32>
    %c30 = arith.constant 30 : index
    %672 = memref.load %arg4[%c30] : memref<64xf32, #tpu.memory_space<smem>>
    %673 = vector.broadcast %672 : f32 to vector<16x128xf32>
    %674 = arith.mulf %673, %365 : vector<16x128xf32>
    %c31 = arith.constant 31 : index
    %675 = memref.load %arg4[%c31] : memref<64xf32, #tpu.memory_space<smem>>
    %676 = vector.broadcast %675 : f32 to vector<16x128xf32>
    %677 = arith.mulf %676, %369 : vector<16x128xf32>
    %678 = arith.addf %674, %677 : vector<16x128xf32>
    %c15_280 = arith.constant 15 : index
    %679 = memref.load %arg5[%c15_280] : memref<32xf32, #tpu.memory_space<smem>>
    %680 = vector.broadcast %679 : f32 to vector<16x128xf32>
    %681 = arith.addf %678, %680 : vector<16x128xf32>
    %cst_281 = arith.constant 0.000000e+00 : f32
    %682 = vector.broadcast %cst_281 : f32 to vector<16x128xf32>
    %683 = arith.maximumf %681, %682 : vector<16x128xf32>
    %c15_282 = arith.constant 15 : index
    %684 = memref.load %arg6[%c15_282] : memref<64xf32, #tpu.memory_space<smem>>
    %685 = vector.broadcast %684 : f32 to vector<16x128xf32>
    %686 = arith.mulf %685, %683 : vector<16x128xf32>
    %687 = arith.addf %667, %686 : vector<16x128xf32>
    %c47 = arith.constant 47 : index
    %688 = memref.load %arg6[%c47] : memref<64xf32, #tpu.memory_space<smem>>
    %689 = vector.broadcast %688 : f32 to vector<16x128xf32>
    %690 = arith.mulf %689, %683 : vector<16x128xf32>
    %691 = arith.addf %671, %690 : vector<16x128xf32>
    %c32_283 = arith.constant 32 : index
    %692 = memref.load %arg4[%c32_283] : memref<64xf32, #tpu.memory_space<smem>>
    %693 = vector.broadcast %692 : f32 to vector<16x128xf32>
    %694 = arith.mulf %693, %365 : vector<16x128xf32>
    %c33_284 = arith.constant 33 : index
    %695 = memref.load %arg4[%c33_284] : memref<64xf32, #tpu.memory_space<smem>>
    %696 = vector.broadcast %695 : f32 to vector<16x128xf32>
    %697 = arith.mulf %696, %369 : vector<16x128xf32>
    %698 = arith.addf %694, %697 : vector<16x128xf32>
    %c16_285 = arith.constant 16 : index
    %699 = memref.load %arg5[%c16_285] : memref<32xf32, #tpu.memory_space<smem>>
    %700 = vector.broadcast %699 : f32 to vector<16x128xf32>
    %701 = arith.addf %698, %700 : vector<16x128xf32>
    %cst_286 = arith.constant 0.000000e+00 : f32
    %702 = vector.broadcast %cst_286 : f32 to vector<16x128xf32>
    %703 = arith.maximumf %701, %702 : vector<16x128xf32>
    %c16_287 = arith.constant 16 : index
    %704 = memref.load %arg6[%c16_287] : memref<64xf32, #tpu.memory_space<smem>>
    %705 = vector.broadcast %704 : f32 to vector<16x128xf32>
    %706 = arith.mulf %705, %703 : vector<16x128xf32>
    %707 = arith.addf %687, %706 : vector<16x128xf32>
    %c48 = arith.constant 48 : index
    %708 = memref.load %arg6[%c48] : memref<64xf32, #tpu.memory_space<smem>>
    %709 = vector.broadcast %708 : f32 to vector<16x128xf32>
    %710 = arith.mulf %709, %703 : vector<16x128xf32>
    %711 = arith.addf %691, %710 : vector<16x128xf32>
    %c34_288 = arith.constant 34 : index
    %712 = memref.load %arg4[%c34_288] : memref<64xf32, #tpu.memory_space<smem>>
    %713 = vector.broadcast %712 : f32 to vector<16x128xf32>
    %714 = arith.mulf %713, %365 : vector<16x128xf32>
    %c35_289 = arith.constant 35 : index
    %715 = memref.load %arg4[%c35_289] : memref<64xf32, #tpu.memory_space<smem>>
    %716 = vector.broadcast %715 : f32 to vector<16x128xf32>
    %717 = arith.mulf %716, %369 : vector<16x128xf32>
    %718 = arith.addf %714, %717 : vector<16x128xf32>
    %c17_290 = arith.constant 17 : index
    %719 = memref.load %arg5[%c17_290] : memref<32xf32, #tpu.memory_space<smem>>
    %720 = vector.broadcast %719 : f32 to vector<16x128xf32>
    %721 = arith.addf %718, %720 : vector<16x128xf32>
    %cst_291 = arith.constant 0.000000e+00 : f32
    %722 = vector.broadcast %cst_291 : f32 to vector<16x128xf32>
    %723 = arith.maximumf %721, %722 : vector<16x128xf32>
    %c17_292 = arith.constant 17 : index
    %724 = memref.load %arg6[%c17_292] : memref<64xf32, #tpu.memory_space<smem>>
    %725 = vector.broadcast %724 : f32 to vector<16x128xf32>
    %726 = arith.mulf %725, %723 : vector<16x128xf32>
    %727 = arith.addf %707, %726 : vector<16x128xf32>
    %c49 = arith.constant 49 : index
    %728 = memref.load %arg6[%c49] : memref<64xf32, #tpu.memory_space<smem>>
    %729 = vector.broadcast %728 : f32 to vector<16x128xf32>
    %730 = arith.mulf %729, %723 : vector<16x128xf32>
    %731 = arith.addf %711, %730 : vector<16x128xf32>
    %c36_293 = arith.constant 36 : index
    %732 = memref.load %arg4[%c36_293] : memref<64xf32, #tpu.memory_space<smem>>
    %733 = vector.broadcast %732 : f32 to vector<16x128xf32>
    %734 = arith.mulf %733, %365 : vector<16x128xf32>
    %c37_294 = arith.constant 37 : index
    %735 = memref.load %arg4[%c37_294] : memref<64xf32, #tpu.memory_space<smem>>
    %736 = vector.broadcast %735 : f32 to vector<16x128xf32>
    %737 = arith.mulf %736, %369 : vector<16x128xf32>
    %738 = arith.addf %734, %737 : vector<16x128xf32>
    %c18_295 = arith.constant 18 : index
    %739 = memref.load %arg5[%c18_295] : memref<32xf32, #tpu.memory_space<smem>>
    %740 = vector.broadcast %739 : f32 to vector<16x128xf32>
    %741 = arith.addf %738, %740 : vector<16x128xf32>
    %cst_296 = arith.constant 0.000000e+00 : f32
    %742 = vector.broadcast %cst_296 : f32 to vector<16x128xf32>
    %743 = arith.maximumf %741, %742 : vector<16x128xf32>
    %c18_297 = arith.constant 18 : index
    %744 = memref.load %arg6[%c18_297] : memref<64xf32, #tpu.memory_space<smem>>
    %745 = vector.broadcast %744 : f32 to vector<16x128xf32>
    %746 = arith.mulf %745, %743 : vector<16x128xf32>
    %747 = arith.addf %727, %746 : vector<16x128xf32>
    %c50 = arith.constant 50 : index
    %748 = memref.load %arg6[%c50] : memref<64xf32, #tpu.memory_space<smem>>
    %749 = vector.broadcast %748 : f32 to vector<16x128xf32>
    %750 = arith.mulf %749, %743 : vector<16x128xf32>
    %751 = arith.addf %731, %750 : vector<16x128xf32>
    %c38_298 = arith.constant 38 : index
    %752 = memref.load %arg4[%c38_298] : memref<64xf32, #tpu.memory_space<smem>>
    %753 = vector.broadcast %752 : f32 to vector<16x128xf32>
    %754 = arith.mulf %753, %365 : vector<16x128xf32>
    %c39_299 = arith.constant 39 : index
    %755 = memref.load %arg4[%c39_299] : memref<64xf32, #tpu.memory_space<smem>>
    %756 = vector.broadcast %755 : f32 to vector<16x128xf32>
    %757 = arith.mulf %756, %369 : vector<16x128xf32>
    %758 = arith.addf %754, %757 : vector<16x128xf32>
    %c19_300 = arith.constant 19 : index
    %759 = memref.load %arg5[%c19_300] : memref<32xf32, #tpu.memory_space<smem>>
    %760 = vector.broadcast %759 : f32 to vector<16x128xf32>
    %761 = arith.addf %758, %760 : vector<16x128xf32>
    %cst_301 = arith.constant 0.000000e+00 : f32
    %762 = vector.broadcast %cst_301 : f32 to vector<16x128xf32>
    %763 = arith.maximumf %761, %762 : vector<16x128xf32>
    %c19_302 = arith.constant 19 : index
    %764 = memref.load %arg6[%c19_302] : memref<64xf32, #tpu.memory_space<smem>>
    %765 = vector.broadcast %764 : f32 to vector<16x128xf32>
    %766 = arith.mulf %765, %763 : vector<16x128xf32>
    %767 = arith.addf %747, %766 : vector<16x128xf32>
    %c51 = arith.constant 51 : index
    %768 = memref.load %arg6[%c51] : memref<64xf32, #tpu.memory_space<smem>>
    %769 = vector.broadcast %768 : f32 to vector<16x128xf32>
    %770 = arith.mulf %769, %763 : vector<16x128xf32>
    %771 = arith.addf %751, %770 : vector<16x128xf32>
    %c40_303 = arith.constant 40 : index
    %772 = memref.load %arg4[%c40_303] : memref<64xf32, #tpu.memory_space<smem>>
    %773 = vector.broadcast %772 : f32 to vector<16x128xf32>
    %774 = arith.mulf %773, %365 : vector<16x128xf32>
    %c41_304 = arith.constant 41 : index
    %775 = memref.load %arg4[%c41_304] : memref<64xf32, #tpu.memory_space<smem>>
    %776 = vector.broadcast %775 : f32 to vector<16x128xf32>
    %777 = arith.mulf %776, %369 : vector<16x128xf32>
    %778 = arith.addf %774, %777 : vector<16x128xf32>
    %c20_305 = arith.constant 20 : index
    %779 = memref.load %arg5[%c20_305] : memref<32xf32, #tpu.memory_space<smem>>
    %780 = vector.broadcast %779 : f32 to vector<16x128xf32>
    %781 = arith.addf %778, %780 : vector<16x128xf32>
    %cst_306 = arith.constant 0.000000e+00 : f32
    %782 = vector.broadcast %cst_306 : f32 to vector<16x128xf32>
    %783 = arith.maximumf %781, %782 : vector<16x128xf32>
    %c20_307 = arith.constant 20 : index
    %784 = memref.load %arg6[%c20_307] : memref<64xf32, #tpu.memory_space<smem>>
    %785 = vector.broadcast %784 : f32 to vector<16x128xf32>
    %786 = arith.mulf %785, %783 : vector<16x128xf32>
    %787 = arith.addf %767, %786 : vector<16x128xf32>
    %c52 = arith.constant 52 : index
    %788 = memref.load %arg6[%c52] : memref<64xf32, #tpu.memory_space<smem>>
    %789 = vector.broadcast %788 : f32 to vector<16x128xf32>
    %790 = arith.mulf %789, %783 : vector<16x128xf32>
    %791 = arith.addf %771, %790 : vector<16x128xf32>
    %c42_308 = arith.constant 42 : index
    %792 = memref.load %arg4[%c42_308] : memref<64xf32, #tpu.memory_space<smem>>
    %793 = vector.broadcast %792 : f32 to vector<16x128xf32>
    %794 = arith.mulf %793, %365 : vector<16x128xf32>
    %c43_309 = arith.constant 43 : index
    %795 = memref.load %arg4[%c43_309] : memref<64xf32, #tpu.memory_space<smem>>
    %796 = vector.broadcast %795 : f32 to vector<16x128xf32>
    %797 = arith.mulf %796, %369 : vector<16x128xf32>
    %798 = arith.addf %794, %797 : vector<16x128xf32>
    %c21_310 = arith.constant 21 : index
    %799 = memref.load %arg5[%c21_310] : memref<32xf32, #tpu.memory_space<smem>>
    %800 = vector.broadcast %799 : f32 to vector<16x128xf32>
    %801 = arith.addf %798, %800 : vector<16x128xf32>
    %cst_311 = arith.constant 0.000000e+00 : f32
    %802 = vector.broadcast %cst_311 : f32 to vector<16x128xf32>
    %803 = arith.maximumf %801, %802 : vector<16x128xf32>
    %c21_312 = arith.constant 21 : index
    %804 = memref.load %arg6[%c21_312] : memref<64xf32, #tpu.memory_space<smem>>
    %805 = vector.broadcast %804 : f32 to vector<16x128xf32>
    %806 = arith.mulf %805, %803 : vector<16x128xf32>
    %807 = arith.addf %787, %806 : vector<16x128xf32>
    %c53 = arith.constant 53 : index
    %808 = memref.load %arg6[%c53] : memref<64xf32, #tpu.memory_space<smem>>
    %809 = vector.broadcast %808 : f32 to vector<16x128xf32>
    %810 = arith.mulf %809, %803 : vector<16x128xf32>
    %811 = arith.addf %791, %810 : vector<16x128xf32>
    %c44_313 = arith.constant 44 : index
    %812 = memref.load %arg4[%c44_313] : memref<64xf32, #tpu.memory_space<smem>>
    %813 = vector.broadcast %812 : f32 to vector<16x128xf32>
    %814 = arith.mulf %813, %365 : vector<16x128xf32>
    %c45_314 = arith.constant 45 : index
    %815 = memref.load %arg4[%c45_314] : memref<64xf32, #tpu.memory_space<smem>>
    %816 = vector.broadcast %815 : f32 to vector<16x128xf32>
    %817 = arith.mulf %816, %369 : vector<16x128xf32>
    %818 = arith.addf %814, %817 : vector<16x128xf32>
    %c22_315 = arith.constant 22 : index
    %819 = memref.load %arg5[%c22_315] : memref<32xf32, #tpu.memory_space<smem>>
    %820 = vector.broadcast %819 : f32 to vector<16x128xf32>
    %821 = arith.addf %818, %820 : vector<16x128xf32>
    %cst_316 = arith.constant 0.000000e+00 : f32
    %822 = vector.broadcast %cst_316 : f32 to vector<16x128xf32>
    %823 = arith.maximumf %821, %822 : vector<16x128xf32>
    %c22_317 = arith.constant 22 : index
    %824 = memref.load %arg6[%c22_317] : memref<64xf32, #tpu.memory_space<smem>>
    %825 = vector.broadcast %824 : f32 to vector<16x128xf32>
    %826 = arith.mulf %825, %823 : vector<16x128xf32>
    %827 = arith.addf %807, %826 : vector<16x128xf32>
    %c54 = arith.constant 54 : index
    %828 = memref.load %arg6[%c54] : memref<64xf32, #tpu.memory_space<smem>>
    %829 = vector.broadcast %828 : f32 to vector<16x128xf32>
    %830 = arith.mulf %829, %823 : vector<16x128xf32>
    %831 = arith.addf %811, %830 : vector<16x128xf32>
    %c46_318 = arith.constant 46 : index
    %832 = memref.load %arg4[%c46_318] : memref<64xf32, #tpu.memory_space<smem>>
    %833 = vector.broadcast %832 : f32 to vector<16x128xf32>
    %834 = arith.mulf %833, %365 : vector<16x128xf32>
    %c47_319 = arith.constant 47 : index
    %835 = memref.load %arg4[%c47_319] : memref<64xf32, #tpu.memory_space<smem>>
    %836 = vector.broadcast %835 : f32 to vector<16x128xf32>
    %837 = arith.mulf %836, %369 : vector<16x128xf32>
    %838 = arith.addf %834, %837 : vector<16x128xf32>
    %c23_320 = arith.constant 23 : index
    %839 = memref.load %arg5[%c23_320] : memref<32xf32, #tpu.memory_space<smem>>
    %840 = vector.broadcast %839 : f32 to vector<16x128xf32>
    %841 = arith.addf %838, %840 : vector<16x128xf32>
    %cst_321 = arith.constant 0.000000e+00 : f32
    %842 = vector.broadcast %cst_321 : f32 to vector<16x128xf32>
    %843 = arith.maximumf %841, %842 : vector<16x128xf32>
    %c23_322 = arith.constant 23 : index
    %844 = memref.load %arg6[%c23_322] : memref<64xf32, #tpu.memory_space<smem>>
    %845 = vector.broadcast %844 : f32 to vector<16x128xf32>
    %846 = arith.mulf %845, %843 : vector<16x128xf32>
    %847 = arith.addf %827, %846 : vector<16x128xf32>
    %c55 = arith.constant 55 : index
    %848 = memref.load %arg6[%c55] : memref<64xf32, #tpu.memory_space<smem>>
    %849 = vector.broadcast %848 : f32 to vector<16x128xf32>
    %850 = arith.mulf %849, %843 : vector<16x128xf32>
    %851 = arith.addf %831, %850 : vector<16x128xf32>
    %c48_323 = arith.constant 48 : index
    %852 = memref.load %arg4[%c48_323] : memref<64xf32, #tpu.memory_space<smem>>
    %853 = vector.broadcast %852 : f32 to vector<16x128xf32>
    %854 = arith.mulf %853, %365 : vector<16x128xf32>
    %c49_324 = arith.constant 49 : index
    %855 = memref.load %arg4[%c49_324] : memref<64xf32, #tpu.memory_space<smem>>
    %856 = vector.broadcast %855 : f32 to vector<16x128xf32>
    %857 = arith.mulf %856, %369 : vector<16x128xf32>
    %858 = arith.addf %854, %857 : vector<16x128xf32>
    %c24_325 = arith.constant 24 : index
    %859 = memref.load %arg5[%c24_325] : memref<32xf32, #tpu.memory_space<smem>>
    %860 = vector.broadcast %859 : f32 to vector<16x128xf32>
    %861 = arith.addf %858, %860 : vector<16x128xf32>
    %cst_326 = arith.constant 0.000000e+00 : f32
    %862 = vector.broadcast %cst_326 : f32 to vector<16x128xf32>
    %863 = arith.maximumf %861, %862 : vector<16x128xf32>
    %c24_327 = arith.constant 24 : index
    %864 = memref.load %arg6[%c24_327] : memref<64xf32, #tpu.memory_space<smem>>
    %865 = vector.broadcast %864 : f32 to vector<16x128xf32>
    %866 = arith.mulf %865, %863 : vector<16x128xf32>
    %867 = arith.addf %847, %866 : vector<16x128xf32>
    %c56 = arith.constant 56 : index
    %868 = memref.load %arg6[%c56] : memref<64xf32, #tpu.memory_space<smem>>
    %869 = vector.broadcast %868 : f32 to vector<16x128xf32>
    %870 = arith.mulf %869, %863 : vector<16x128xf32>
    %871 = arith.addf %851, %870 : vector<16x128xf32>
    %c50_328 = arith.constant 50 : index
    %872 = memref.load %arg4[%c50_328] : memref<64xf32, #tpu.memory_space<smem>>
    %873 = vector.broadcast %872 : f32 to vector<16x128xf32>
    %874 = arith.mulf %873, %365 : vector<16x128xf32>
    %c51_329 = arith.constant 51 : index
    %875 = memref.load %arg4[%c51_329] : memref<64xf32, #tpu.memory_space<smem>>
    %876 = vector.broadcast %875 : f32 to vector<16x128xf32>
    %877 = arith.mulf %876, %369 : vector<16x128xf32>
    %878 = arith.addf %874, %877 : vector<16x128xf32>
    %c25_330 = arith.constant 25 : index
    %879 = memref.load %arg5[%c25_330] : memref<32xf32, #tpu.memory_space<smem>>
    %880 = vector.broadcast %879 : f32 to vector<16x128xf32>
    %881 = arith.addf %878, %880 : vector<16x128xf32>
    %cst_331 = arith.constant 0.000000e+00 : f32
    %882 = vector.broadcast %cst_331 : f32 to vector<16x128xf32>
    %883 = arith.maximumf %881, %882 : vector<16x128xf32>
    %c25_332 = arith.constant 25 : index
    %884 = memref.load %arg6[%c25_332] : memref<64xf32, #tpu.memory_space<smem>>
    %885 = vector.broadcast %884 : f32 to vector<16x128xf32>
    %886 = arith.mulf %885, %883 : vector<16x128xf32>
    %887 = arith.addf %867, %886 : vector<16x128xf32>
    %c57 = arith.constant 57 : index
    %888 = memref.load %arg6[%c57] : memref<64xf32, #tpu.memory_space<smem>>
    %889 = vector.broadcast %888 : f32 to vector<16x128xf32>
    %890 = arith.mulf %889, %883 : vector<16x128xf32>
    %891 = arith.addf %871, %890 : vector<16x128xf32>
    %c52_333 = arith.constant 52 : index
    %892 = memref.load %arg4[%c52_333] : memref<64xf32, #tpu.memory_space<smem>>
    %893 = vector.broadcast %892 : f32 to vector<16x128xf32>
    %894 = arith.mulf %893, %365 : vector<16x128xf32>
    %c53_334 = arith.constant 53 : index
    %895 = memref.load %arg4[%c53_334] : memref<64xf32, #tpu.memory_space<smem>>
    %896 = vector.broadcast %895 : f32 to vector<16x128xf32>
    %897 = arith.mulf %896, %369 : vector<16x128xf32>
    %898 = arith.addf %894, %897 : vector<16x128xf32>
    %c26_335 = arith.constant 26 : index
    %899 = memref.load %arg5[%c26_335] : memref<32xf32, #tpu.memory_space<smem>>
    %900 = vector.broadcast %899 : f32 to vector<16x128xf32>
    %901 = arith.addf %898, %900 : vector<16x128xf32>
    %cst_336 = arith.constant 0.000000e+00 : f32
    %902 = vector.broadcast %cst_336 : f32 to vector<16x128xf32>
    %903 = arith.maximumf %901, %902 : vector<16x128xf32>
    %c26_337 = arith.constant 26 : index
    %904 = memref.load %arg6[%c26_337] : memref<64xf32, #tpu.memory_space<smem>>
    %905 = vector.broadcast %904 : f32 to vector<16x128xf32>
    %906 = arith.mulf %905, %903 : vector<16x128xf32>
    %907 = arith.addf %887, %906 : vector<16x128xf32>
    %c58 = arith.constant 58 : index
    %908 = memref.load %arg6[%c58] : memref<64xf32, #tpu.memory_space<smem>>
    %909 = vector.broadcast %908 : f32 to vector<16x128xf32>
    %910 = arith.mulf %909, %903 : vector<16x128xf32>
    %911 = arith.addf %891, %910 : vector<16x128xf32>
    %c54_338 = arith.constant 54 : index
    %912 = memref.load %arg4[%c54_338] : memref<64xf32, #tpu.memory_space<smem>>
    %913 = vector.broadcast %912 : f32 to vector<16x128xf32>
    %914 = arith.mulf %913, %365 : vector<16x128xf32>
    %c55_339 = arith.constant 55 : index
    %915 = memref.load %arg4[%c55_339] : memref<64xf32, #tpu.memory_space<smem>>
    %916 = vector.broadcast %915 : f32 to vector<16x128xf32>
    %917 = arith.mulf %916, %369 : vector<16x128xf32>
    %918 = arith.addf %914, %917 : vector<16x128xf32>
    %c27_340 = arith.constant 27 : index
    %919 = memref.load %arg5[%c27_340] : memref<32xf32, #tpu.memory_space<smem>>
    %920 = vector.broadcast %919 : f32 to vector<16x128xf32>
    %921 = arith.addf %918, %920 : vector<16x128xf32>
    %cst_341 = arith.constant 0.000000e+00 : f32
    %922 = vector.broadcast %cst_341 : f32 to vector<16x128xf32>
    %923 = arith.maximumf %921, %922 : vector<16x128xf32>
    %c27_342 = arith.constant 27 : index
    %924 = memref.load %arg6[%c27_342] : memref<64xf32, #tpu.memory_space<smem>>
    %925 = vector.broadcast %924 : f32 to vector<16x128xf32>
    %926 = arith.mulf %925, %923 : vector<16x128xf32>
    %927 = arith.addf %907, %926 : vector<16x128xf32>
    %c59 = arith.constant 59 : index
    %928 = memref.load %arg6[%c59] : memref<64xf32, #tpu.memory_space<smem>>
    %929 = vector.broadcast %928 : f32 to vector<16x128xf32>
    %930 = arith.mulf %929, %923 : vector<16x128xf32>
    %931 = arith.addf %911, %930 : vector<16x128xf32>
    %c56_343 = arith.constant 56 : index
    %932 = memref.load %arg4[%c56_343] : memref<64xf32, #tpu.memory_space<smem>>
    %933 = vector.broadcast %932 : f32 to vector<16x128xf32>
    %934 = arith.mulf %933, %365 : vector<16x128xf32>
    %c57_344 = arith.constant 57 : index
    %935 = memref.load %arg4[%c57_344] : memref<64xf32, #tpu.memory_space<smem>>
    %936 = vector.broadcast %935 : f32 to vector<16x128xf32>
    %937 = arith.mulf %936, %369 : vector<16x128xf32>
    %938 = arith.addf %934, %937 : vector<16x128xf32>
    %c28_345 = arith.constant 28 : index
    %939 = memref.load %arg5[%c28_345] : memref<32xf32, #tpu.memory_space<smem>>
    %940 = vector.broadcast %939 : f32 to vector<16x128xf32>
    %941 = arith.addf %938, %940 : vector<16x128xf32>
    %cst_346 = arith.constant 0.000000e+00 : f32
    %942 = vector.broadcast %cst_346 : f32 to vector<16x128xf32>
    %943 = arith.maximumf %941, %942 : vector<16x128xf32>
    %c28_347 = arith.constant 28 : index
    %944 = memref.load %arg6[%c28_347] : memref<64xf32, #tpu.memory_space<smem>>
    %945 = vector.broadcast %944 : f32 to vector<16x128xf32>
    %946 = arith.mulf %945, %943 : vector<16x128xf32>
    %947 = arith.addf %927, %946 : vector<16x128xf32>
    %c60 = arith.constant 60 : index
    %948 = memref.load %arg6[%c60] : memref<64xf32, #tpu.memory_space<smem>>
    %949 = vector.broadcast %948 : f32 to vector<16x128xf32>
    %950 = arith.mulf %949, %943 : vector<16x128xf32>
    %951 = arith.addf %931, %950 : vector<16x128xf32>
    %c58_348 = arith.constant 58 : index
    %952 = memref.load %arg4[%c58_348] : memref<64xf32, #tpu.memory_space<smem>>
    %953 = vector.broadcast %952 : f32 to vector<16x128xf32>
    %954 = arith.mulf %953, %365 : vector<16x128xf32>
    %c59_349 = arith.constant 59 : index
    %955 = memref.load %arg4[%c59_349] : memref<64xf32, #tpu.memory_space<smem>>
    %956 = vector.broadcast %955 : f32 to vector<16x128xf32>
    %957 = arith.mulf %956, %369 : vector<16x128xf32>
    %958 = arith.addf %954, %957 : vector<16x128xf32>
    %c29_350 = arith.constant 29 : index
    %959 = memref.load %arg5[%c29_350] : memref<32xf32, #tpu.memory_space<smem>>
    %960 = vector.broadcast %959 : f32 to vector<16x128xf32>
    %961 = arith.addf %958, %960 : vector<16x128xf32>
    %cst_351 = arith.constant 0.000000e+00 : f32
    %962 = vector.broadcast %cst_351 : f32 to vector<16x128xf32>
    %963 = arith.maximumf %961, %962 : vector<16x128xf32>
    %c29_352 = arith.constant 29 : index
    %964 = memref.load %arg6[%c29_352] : memref<64xf32, #tpu.memory_space<smem>>
    %965 = vector.broadcast %964 : f32 to vector<16x128xf32>
    %966 = arith.mulf %965, %963 : vector<16x128xf32>
    %967 = arith.addf %947, %966 : vector<16x128xf32>
    %c61 = arith.constant 61 : index
    %968 = memref.load %arg6[%c61] : memref<64xf32, #tpu.memory_space<smem>>
    %969 = vector.broadcast %968 : f32 to vector<16x128xf32>
    %970 = arith.mulf %969, %963 : vector<16x128xf32>
    %971 = arith.addf %951, %970 : vector<16x128xf32>
    %c60_353 = arith.constant 60 : index
    %972 = memref.load %arg4[%c60_353] : memref<64xf32, #tpu.memory_space<smem>>
    %973 = vector.broadcast %972 : f32 to vector<16x128xf32>
    %974 = arith.mulf %973, %365 : vector<16x128xf32>
    %c61_354 = arith.constant 61 : index
    %975 = memref.load %arg4[%c61_354] : memref<64xf32, #tpu.memory_space<smem>>
    %976 = vector.broadcast %975 : f32 to vector<16x128xf32>
    %977 = arith.mulf %976, %369 : vector<16x128xf32>
    %978 = arith.addf %974, %977 : vector<16x128xf32>
    %c30_355 = arith.constant 30 : index
    %979 = memref.load %arg5[%c30_355] : memref<32xf32, #tpu.memory_space<smem>>
    %980 = vector.broadcast %979 : f32 to vector<16x128xf32>
    %981 = arith.addf %978, %980 : vector<16x128xf32>
    %cst_356 = arith.constant 0.000000e+00 : f32
    %982 = vector.broadcast %cst_356 : f32 to vector<16x128xf32>
    %983 = arith.maximumf %981, %982 : vector<16x128xf32>
    %c30_357 = arith.constant 30 : index
    %984 = memref.load %arg6[%c30_357] : memref<64xf32, #tpu.memory_space<smem>>
    %985 = vector.broadcast %984 : f32 to vector<16x128xf32>
    %986 = arith.mulf %985, %983 : vector<16x128xf32>
    %987 = arith.addf %967, %986 : vector<16x128xf32>
    %c62 = arith.constant 62 : index
    %988 = memref.load %arg6[%c62] : memref<64xf32, #tpu.memory_space<smem>>
    %989 = vector.broadcast %988 : f32 to vector<16x128xf32>
    %990 = arith.mulf %989, %983 : vector<16x128xf32>
    %991 = arith.addf %971, %990 : vector<16x128xf32>
    %c62_358 = arith.constant 62 : index
    %992 = memref.load %arg4[%c62_358] : memref<64xf32, #tpu.memory_space<smem>>
    %993 = vector.broadcast %992 : f32 to vector<16x128xf32>
    %994 = arith.mulf %993, %365 : vector<16x128xf32>
    %c63 = arith.constant 63 : index
    %995 = memref.load %arg4[%c63] : memref<64xf32, #tpu.memory_space<smem>>
    %996 = vector.broadcast %995 : f32 to vector<16x128xf32>
    %997 = arith.mulf %996, %369 : vector<16x128xf32>
    %998 = arith.addf %994, %997 : vector<16x128xf32>
    %c31_359 = arith.constant 31 : index
    %999 = memref.load %arg5[%c31_359] : memref<32xf32, #tpu.memory_space<smem>>
    %1000 = vector.broadcast %999 : f32 to vector<16x128xf32>
    %1001 = arith.addf %998, %1000 : vector<16x128xf32>
    %cst_360 = arith.constant 0.000000e+00 : f32
    %1002 = vector.broadcast %cst_360 : f32 to vector<16x128xf32>
    %1003 = arith.maximumf %1001, %1002 : vector<16x128xf32>
    %c31_361 = arith.constant 31 : index
    %1004 = memref.load %arg6[%c31_361] : memref<64xf32, #tpu.memory_space<smem>>
    %1005 = vector.broadcast %1004 : f32 to vector<16x128xf32>
    %1006 = arith.mulf %1005, %1003 : vector<16x128xf32>
    %1007 = arith.addf %987, %1006 : vector<16x128xf32>
    %c63_362 = arith.constant 63 : index
    %1008 = memref.load %arg6[%c63_362] : memref<64xf32, #tpu.memory_space<smem>>
    %1009 = vector.broadcast %1008 : f32 to vector<16x128xf32>
    %1010 = arith.mulf %1009, %1003 : vector<16x128xf32>
    %1011 = arith.addf %991, %1010 : vector<16x128xf32>
    %c0_363 = arith.constant 0 : index
    %1012 = memref.load %arg7[%c0_363] : memref<2xf32, #tpu.memory_space<smem>>
    %1013 = vector.broadcast %1012 : f32 to vector<16x128xf32>
    %1014 = arith.addf %1007, %1013 : vector<16x128xf32>
    %c1_364 = arith.constant 1 : index
    %1015 = memref.load %arg7[%c1_364] : memref<2xf32, #tpu.memory_space<smem>>
    %1016 = vector.broadcast %1015 : f32 to vector<16x128xf32>
    %1017 = arith.addf %1011, %1016 : vector<16x128xf32>
    %c0_365 = arith.constant 0 : index
    %c0_366 = arith.constant 0 : index
    %c0_367 = arith.constant 0 : index
    %c0_368 = arith.constant 0 : index
    %1018 = vector.load %arg12[%c0_365, %c0_366, %c0_367, %c0_368] : memref<1x4x16x128xf32, #tpu.memory_space<vmem>>, vector<1x1x16x128xf32>
    %1019 = vector.shape_cast %1018 : vector<1x1x16x128xf32> to vector<16x128xf32>
    %c0_369 = arith.constant 0 : index
    %c0_370 = arith.constant 0 : index
    %c0_371 = arith.constant 0 : index
    %c0_372 = arith.constant 0 : index
    %1020 = vector.load %arg13[%c0_369, %c0_370, %c0_371, %c0_372] : memref<1x4x16x128xf32, #tpu.memory_space<vmem>>, vector<1x1x16x128xf32>
    %1021 = vector.shape_cast %1020 : vector<1x1x16x128xf32> to vector<16x128xf32>
    %1022 = arith.mulf %1014, %1019 : vector<16x128xf32>
    %1023 = arith.mulf %1017, %1021 : vector<16x128xf32>
    %1024 = arith.subf %1022, %1023 : vector<16x128xf32>
    %c0_373 = arith.constant 0 : index
    %c0_374 = arith.constant 0 : index
    %c0_375 = arith.constant 0 : index
    %c0_376 = arith.constant 0 : index
    %1025 = vector.load %arg14[%c0_373, %c0_374, %c0_375, %c0_376] : memref<1x4x16x128xf32, #tpu.memory_space<vmem>>, vector<1x1x16x128xf32>
    %1026 = vector.shape_cast %1025 : vector<1x1x16x128xf32> to vector<16x128xf32>
    %1027 = vector.shape_cast %1024 : vector<16x128xf32> to vector<1x1x16x128xf32>
    tpu.vector_store %arg14[%c0_373, %c0_374, %c0_375, %c0_376], %1027 {strides = array<i32>} : memref<1x4x16x128xf32, #tpu.memory_space<vmem>>, vector<1x1x16x128xf32>,
    %1028 = arith.mulf %1014, %1021 : vector<16x128xf32>
    %1029 = arith.mulf %1017, %1019 : vector<16x128xf32>
    %1030 = arith.addf %1028, %1029 : vector<16x128xf32>
    %c0_377 = arith.constant 0 : index
    %c0_378 = arith.constant 0 : index
    %c0_379 = arith.constant 0 : index
    %c0_380 = arith.constant 0 : index
    %1031 = vector.load %arg15[%c0_377, %c0_378, %c0_379, %c0_380] : memref<1x4x16x128xf32, #tpu.memory_space<vmem>>, vector<1x1x16x128xf32>
    %1032 = vector.shape_cast %1031 : vector<1x1x16x128xf32> to vector<16x128xf32>
    %1033 = vector.shape_cast %1030 : vector<16x128xf32> to vector<1x1x16x128xf32>
    tpu.vector_store %arg15[%c0_377, %c0_378, %c0_379, %c0_380], %1033 {strides = array<i32>} : memref<1x4x16x128xf32, #tpu.memory_space<vmem>>, vector<1x1x16x128xf32>,
    %c0_381 = arith.constant 0 : index
    %c1_382 = arith.constant 1 : index
    %c0_383 = arith.constant 0 : index
    %c0_384 = arith.constant 0 : index
    %1034 = vector.load %arg12[%c0_381, %c1_382, %c0_383, %c0_384] : memref<1x4x16x128xf32, #tpu.memory_space<vmem>>, vector<1x1x16x128xf32>
    %1035 = vector.shape_cast %1034 : vector<1x1x16x128xf32> to vector<16x128xf32>
    %c0_385 = arith.constant 0 : index
    %c1_386 = arith.constant 1 : index
    %c0_387 = arith.constant 0 : index
    %c0_388 = arith.constant 0 : index
    %1036 = vector.load %arg13[%c0_385, %c1_386, %c0_387, %c0_388] : memref<1x4x16x128xf32, #tpu.memory_space<vmem>>, vector<1x1x16x128xf32>
    %1037 = vector.shape_cast %1036 : vector<1x1x16x128xf32> to vector<16x128xf32>
    %1038 = arith.mulf %1014, %1035 : vector<16x128xf32>
    %1039 = arith.mulf %1017, %1037 : vector<16x128xf32>
    %1040 = arith.subf %1038, %1039 : vector<16x128xf32>
    %c0_389 = arith.constant 0 : index
    %c1_390 = arith.constant 1 : index
    %c0_391 = arith.constant 0 : index
    %c0_392 = arith.constant 0 : index
    %1041 = vector.load %arg14[%c0_389, %c1_390, %c0_391, %c0_392] : memref<1x4x16x128xf32, #tpu.memory_space<vmem>>, vector<1x1x16x128xf32>
    %1042 = vector.shape_cast %1041 : vector<1x1x16x128xf32> to vector<16x128xf32>
    %1043 = vector.shape_cast %1040 : vector<16x128xf32> to vector<1x1x16x128xf32>
    tpu.vector_store %arg14[%c0_389, %c1_390, %c0_391, %c0_392], %1043 {strides = array<i32>} : memref<1x4x16x128xf32, #tpu.memory_space<vmem>>, vector<1x1x16x128xf32>,
    %1044 = arith.mulf %1014, %1037 : vector<16x128xf32>
    %1045 = arith.mulf %1017, %1035 : vector<16x128xf32>
    %1046 = arith.addf %1044, %1045 : vector<16x128xf32>
    %c0_393 = arith.constant 0 : index
    %c1_394 = arith.constant 1 : index
    %c0_395 = arith.constant 0 : index
    %c0_396 = arith.constant 0 : index
    %1047 = vector.load %arg15[%c0_393, %c1_394, %c0_395, %c0_396] : memref<1x4x16x128xf32, #tpu.memory_space<vmem>>, vector<1x1x16x128xf32>
    %1048 = vector.shape_cast %1047 : vector<1x1x16x128xf32> to vector<16x128xf32>
    %1049 = vector.shape_cast %1046 : vector<16x128xf32> to vector<1x1x16x128xf32>
    tpu.vector_store %arg15[%c0_393, %c1_394, %c0_395, %c0_396], %1049 {strides = array<i32>} : memref<1x4x16x128xf32, #tpu.memory_space<vmem>>, vector<1x1x16x128xf32>,
    %c0_397 = arith.constant 0 : index
    %c2_398 = arith.constant 2 : index
    %c0_399 = arith.constant 0 : index
    %c0_400 = arith.constant 0 : index
    %1050 = vector.load %arg12[%c0_397, %c2_398, %c0_399, %c0_400] : memref<1x4x16x128xf32, #tpu.memory_space<vmem>>, vector<1x1x16x128xf32>
    %1051 = vector.shape_cast %1050 : vector<1x1x16x128xf32> to vector<16x128xf32>
    %c0_401 = arith.constant 0 : index
    %c2_402 = arith.constant 2 : index
    %c0_403 = arith.constant 0 : index
    %c0_404 = arith.constant 0 : index
    %1052 = vector.load %arg13[%c0_401, %c2_402, %c0_403, %c0_404] : memref<1x4x16x128xf32, #tpu.memory_space<vmem>>, vector<1x1x16x128xf32>
    %1053 = vector.shape_cast %1052 : vector<1x1x16x128xf32> to vector<16x128xf32>
    %1054 = arith.mulf %1014, %1051 : vector<16x128xf32>
    %1055 = arith.mulf %1017, %1053 : vector<16x128xf32>
    %1056 = arith.subf %1054, %1055 : vector<16x128xf32>
    %c0_405 = arith.constant 0 : index
    %c2_406 = arith.constant 2 : index
    %c0_407 = arith.constant 0 : index
    %c0_408 = arith.constant 0 : index
    %1057 = vector.load %arg14[%c0_405, %c2_406, %c0_407, %c0_408] : memref<1x4x16x128xf32, #tpu.memory_space<vmem>>, vector<1x1x16x128xf32>
    %1058 = vector.shape_cast %1057 : vector<1x1x16x128xf32> to vector<16x128xf32>
    %1059 = vector.shape_cast %1056 : vector<16x128xf32> to vector<1x1x16x128xf32>
    tpu.vector_store %arg14[%c0_405, %c2_406, %c0_407, %c0_408], %1059 {strides = array<i32>} : memref<1x4x16x128xf32, #tpu.memory_space<vmem>>, vector<1x1x16x128xf32>,
    %1060 = arith.mulf %1014, %1053 : vector<16x128xf32>
    %1061 = arith.mulf %1017, %1051 : vector<16x128xf32>
    %1062 = arith.addf %1060, %1061 : vector<16x128xf32>
    %c0_409 = arith.constant 0 : index
    %c2_410 = arith.constant 2 : index
    %c0_411 = arith.constant 0 : index
    %c0_412 = arith.constant 0 : index
    %1063 = vector.load %arg15[%c0_409, %c2_410, %c0_411, %c0_412] : memref<1x4x16x128xf32, #tpu.memory_space<vmem>>, vector<1x1x16x128xf32>
    %1064 = vector.shape_cast %1063 : vector<1x1x16x128xf32> to vector<16x128xf32>
    %1065 = vector.shape_cast %1062 : vector<16x128xf32> to vector<1x1x16x128xf32>
    tpu.vector_store %arg15[%c0_409, %c2_410, %c0_411, %c0_412], %1065 {strides = array<i32>} : memref<1x4x16x128xf32, #tpu.memory_space<vmem>>, vector<1x1x16x128xf32>,
    %c0_413 = arith.constant 0 : index
    %c3_414 = arith.constant 3 : index
    %c0_415 = arith.constant 0 : index
    %c0_416 = arith.constant 0 : index
    %1066 = vector.load %arg12[%c0_413, %c3_414, %c0_415, %c0_416] : memref<1x4x16x128xf32, #tpu.memory_space<vmem>>, vector<1x1x16x128xf32>
    %1067 = vector.shape_cast %1066 : vector<1x1x16x128xf32> to vector<16x128xf32>
    %c0_417 = arith.constant 0 : index
    %c3_418 = arith.constant 3 : index
    %c0_419 = arith.constant 0 : index
    %c0_420 = arith.constant 0 : index
    %1068 = vector.load %arg13[%c0_417, %c3_418, %c0_419, %c0_420] : memref<1x4x16x128xf32, #tpu.memory_space<vmem>>, vector<1x1x16x128xf32>
    %1069 = vector.shape_cast %1068 : vector<1x1x16x128xf32> to vector<16x128xf32>
    %1070 = arith.mulf %1014, %1067 : vector<16x128xf32>
    %1071 = arith.mulf %1017, %1069 : vector<16x128xf32>
    %1072 = arith.subf %1070, %1071 : vector<16x128xf32>
    %c0_421 = arith.constant 0 : index
    %c3_422 = arith.constant 3 : index
    %c0_423 = arith.constant 0 : index
    %c0_424 = arith.constant 0 : index
    %1073 = vector.load %arg14[%c0_421, %c3_422, %c0_423, %c0_424] : memref<1x4x16x128xf32, #tpu.memory_space<vmem>>, vector<1x1x16x128xf32>
    %1074 = vector.shape_cast %1073 : vector<1x1x16x128xf32> to vector<16x128xf32>
    %1075 = vector.shape_cast %1072 : vector<16x128xf32> to vector<1x1x16x128xf32>
    tpu.vector_store %arg14[%c0_421, %c3_422, %c0_423, %c0_424], %1075 {strides = array<i32>} : memref<1x4x16x128xf32, #tpu.memory_space<vmem>>, vector<1x1x16x128xf32>,
    %1076 = arith.mulf %1014, %1069 : vector<16x128xf32>
    %1077 = arith.mulf %1017, %1067 : vector<16x128xf32>
    %1078 = arith.addf %1076, %1077 : vector<16x128xf32>
    %c0_425 = arith.constant 0 : index
    %c3_426 = arith.constant 3 : index
    %c0_427 = arith.constant 0 : index
    %c0_428 = arith.constant 0 : index
    %1079 = vector.load %arg15[%c0_425, %c3_426, %c0_427, %c0_428] : memref<1x4x16x128xf32, #tpu.memory_space<vmem>>, vector<1x1x16x128xf32>
    %1080 = vector.shape_cast %1079 : vector<1x1x16x128xf32> to vector<16x128xf32>
    %1081 = vector.shape_cast %1078 : vector<16x128xf32> to vector<1x1x16x128xf32>
    tpu.vector_store %arg15[%c0_425, %c3_426, %c0_427, %c0_428], %1081 {strides = array<i32>} : memref<1x4x16x128xf32, #tpu.memory_space<vmem>>, vector<1x1x16x128xf32>,
    return
  }
  func.func @transform_0(%arg0: i32, %arg1: i32) -> i32 {
    %c0_i32 = arith.constant 0 : i32
    %c0_i32_0 = arith.constant 0 : i32
    return %c0_i32 : i32
  }
  func.func @transform_1(%arg0: i32, %arg1: i32) -> i32 {
    %c0_i32 = arith.constant 0 : i32
    %c0_i32_0 = arith.constant 0 : i32
    return %c0_i32 : i32
  }
  func.func @transform_2(%arg0: i32, %arg1: i32) -> i32 {
    %c0_i32 = arith.constant 0 : i32
    %c0_i32_0 = arith.constant 0 : i32
    return %c0_i32 : i32
  }
  func.func @transform_3(%arg0: i32, %arg1: i32) -> i32 {
    %c0_i32 = arith.constant 0 : i32
    %c0_i32_0 = arith.constant 0 : i32
    return %c0_i32 : i32
  }
  func.func @transform_4(%arg0: i32, %arg1: i32) -> i32 {
    %c0_i32 = arith.constant 0 : i32
    %c0_i32_0 = arith.constant 0 : i32
    return %c0_i32 : i32
  }
  func.func @transform_5(%arg0: i32, %arg1: i32) -> i32 {
    %c0_i32 = arith.constant 0 : i32
    %c0_i32_0 = arith.constant 0 : i32
    return %c0_i32 : i32
  }
  func.func @transform_6(%arg0: i32, %arg1: i32) -> (i32, i32, i32, i32) {
    %c0_i32 = arith.constant 0 : i32
    %c0_i32_0 = arith.constant 0 : i32
    %c0_i32_1 = arith.constant 0 : i32
    return %arg0, %c0_i32, %arg1, %c0_i32_0 : i32, i32, i32, i32
  }
  func.func @transform_7(%arg0: i32, %arg1: i32) -> (i32, i32, i32, i32) {
    %c0_i32 = arith.constant 0 : i32
    %c0_i32_0 = arith.constant 0 : i32
    %c0_i32_1 = arith.constant 0 : i32
    return %arg0, %c0_i32, %arg1, %c0_i32_0 : i32, i32, i32, i32
  }
  func.func @transform_8(%arg0: i32, %arg1: i32) -> (i32, i32, i32, i32) {
    %c0_i32 = arith.constant 0 : i32
    %c0_i32_0 = arith.constant 0 : i32
    %c0_i32_1 = arith.constant 0 : i32
    return %arg0, %c0_i32, %arg1, %c0_i32_0 : i32, i32, i32, i32
  }
  func.func @transform_9(%arg0: i32, %arg1: i32) -> (i32, i32, i32, i32) {
    %c0_i32 = arith.constant 0 : i32
    %c0_i32_0 = arith.constant 0 : i32
    %c0_i32_1 = arith.constant 0 : i32
    return %arg0, %c0_i32, %arg1, %c0_i32_0 : i32, i32, i32, i32
  }
  func.func @transform_10(%arg0: i32, %arg1: i32) -> (i32, i32, i32, i32) {
    %c0_i32 = arith.constant 0 : i32
    %c0_i32_0 = arith.constant 0 : i32
    %c0_i32_1 = arith.constant 0 : i32
    return %arg0, %c0_i32, %arg1, %c0_i32_0 : i32, i32, i32, i32
  }
  func.func @transform_11(%arg0: i32, %arg1: i32) -> (i32, i32, i32, i32) {
    %c0_i32 = arith.constant 0 : i32
    %c0_i32_0 = arith.constant 0 : i32
    %c0_i32_1 = arith.constant 0 : i32
    return %arg0, %c0_i32, %arg1, %c0_i32_0 : i32, i32, i32, i32
  }
  func.func @transform_12(%arg0: i32, %arg1: i32) -> (i32, i32, i32, i32) {
    %c0_i32 = arith.constant 0 : i32
    %c0_i32_0 = arith.constant 0 : i32
    %c0_i32_1 = arith.constant 0 : i32
    return %arg0, %c0_i32, %arg1, %c0_i32_0 : i32, i32, i32, i32
  }
  func.func @transform_13(%arg0: i32, %arg1: i32) -> (i32, i32, i32, i32) {
    %c0_i32 = arith.constant 0 : i32
    %c0_i32_0 = arith.constant 0 : i32
    %c0_i32_1 = arith.constant 0 : i32
    return %arg0, %c0_i32, %arg1, %c0_i32_0 : i32, i32, i32, i32
  }
}

</mosaic_0001>

<llo_original>
// kernel: custom-call
$region0: #{custom-call}
  %s0 = inlined_call_operand.hbm [shape: c64[2,4,16,128], index: 0, kind: input, shape index: {}]
  %s1 = inlined_call_operand.vmem [shape: f32[2,4,16,128], index: 1, kind: output, shape index: {}]
  $region1: #{custom-call} parent=0
    #allocation0 [shape = 's32[1]{0}', space=sflag, size = 0x4, scoped, tag = 'scoped memory for custom-call']
    %2 = vsyncpa [#allocation0], 0
    %s3 = sshll.u32 %s1, 4
    %s4 = int_to_ptr.vmem [resolvable:$true] %s3
    %6 = dma.hbm_to_vmem [thread:$0]  %s0, 2048, %s4, [#allocation0]
    %7 = dma.done [#allocation0], 2048
    %8 = vsyncpa [#allocation0], 1

// kernel: custom-call.1
$region0: #{custom-call.1}
  %s0 = inlined_call_operand.hbm [shape: c64[2,4,16,128], index: 0, kind: input, shape index: {}]
  %s1 = inlined_call_operand.vmem [shape: f32[2,4,16,128], index: 1, kind: output, shape index: {}]
  %s2 = scalar_lea.hbm %s0, 2048
  $region1: #{custom-call.1} parent=0
    #allocation0 [shape = 's32[1]{0}', space=sflag, size = 0x4, scoped, tag = 'scoped memory for custom-call.1']
    %3 = vsyncpa [#allocation0], 0
    %s4 = sshll.u32 %s1, 4
    %s5 = int_to_ptr.vmem [resolvable:$true] %s4
    %7 = dma.hbm_to_vmem [thread:$0]  %s2, 2048, %s5, [#allocation0]
    %8 = dma.done [#allocation0], 2048
    %9 = vsyncpa [#allocation0], 1

// kernel: custom-call.4
$region0: #{custom-call.4}
  %s0 = inlined_call_operand.vmem [shape: f32[2,4,16,128], index: 0, kind: input, shape index: {}]
  %s1 = inlined_call_operand.vmem [shape: f32[2,4,16,128], index: 1, kind: input, shape index: {}]
  %s2 = inlined_call_operand.hbm [shape: c64[2,4,16,128], index: 2, kind: output, shape index: {}]
  %s3 = scalar_lea.hbm %s2, 2048
  $region1: #{custom-call.4} parent=0
    #allocation0 [shape = 's32[1]{0}', space=sflag, size = 0x4, scoped, tag = 'scoped memory for custom-call.4']
    %4 = vsyncpa [#allocation0], 0
    %s5 = sshll.u32 %s0, 4
    %s6 = int_to_ptr.vmem [resolvable:$true] %s5
    %8 = dma.vmem_to_hbm [thread:$0]  %s6, 2048, %s2, [#allocation0]
    %9 = dma.done [#allocation0], 2048
    %10 = vsyncpa [#allocation0], 1
  $region2: #{custom-call.4} parent=0
    #allocation1 [shape = 's32[1]{0}', space=sflag, size = 0x4, scoped, tag = 'scoped memory for custom-call.4']
    %11 = vsyncpa [#allocation1], 0
    %s12 = sshll.u32 %s1, 4
    %s13 = int_to_ptr.vmem [resolvable:$true] %s12
    %15 = dma.vmem_to_hbm [thread:$0]  %s13, 2048, %s3, [#allocation1]
    %16 = dma.done [#allocation1], 2048
    %17 = vsyncpa [#allocation1], 1

// kernel: p2p_cse_regularization.1
$region0: #{p2p_cse_regularization.1}
  #allocation0 [shape = 'u32[]', space=smem, size = 0x4, offset = 0x4, fixed_abs, tag = 'smem constant byte address 0x4 - core index']
  #allocation1 [shape = 'u32[144,128]{1,0:T(1,128)}', space=vmem, size = 0x12000, scoped, tag = 'internal scratch']
  %s0 = inlined_call_operand.vmem [shape: f32[16], index: 0, kind: input, shape index: {}]
  %s1 = inlined_call_operand.vmem [shape: f32[16], index: 1, kind: input, shape index: {}]
  %s2 = inlined_call_operand.vmem [shape: f32[64], index: 2, kind: input, shape index: {}]
  %s3 = inlined_call_operand.vmem [shape: f32[32], index: 3, kind: input, shape index: {}]
  %s4 = inlined_call_operand.vmem [shape: f32[64], index: 4, kind: input, shape index: {}]
  %s5 = inlined_call_operand.vmem [shape: f32[2], index: 5, kind: input, shape index: {}]
  %s6 = inlined_call_operand.vmem [shape: f32[2,4,16,128], index: 6, kind: input, shape index: {}]
  %s7 = inlined_call_operand.vmem [shape: f32[2,4,16,128], index: 7, kind: input, shape index: {}]
  %s8 = inlined_call_operand.vmem [shape: f32[2,4,16,128], index: 8, kind: input, shape index: {}]
  %s9 = inlined_call_operand.vmem [shape: f32[2,4,16,128], index: 9, kind: input, shape index: {}]
  %s10 = inlined_call_operand.vmem [shape: f32[2,4,16,128], index: 10, kind: output, shape index: {0}]
  %s11 = inlined_call_operand.vmem [shape: f32[2,4,16,128], index: 11, kind: output, shape index: {1}]
  %s12 = inlined_call_operand.vmem [shape: f32[2,4,16,128], index: 12, kind: output, shape index: {2}]
  %s13 = inlined_call_operand.vmem [shape: f32[2,4,16,128], index: 13, kind: output, shape index: {3}]
  %14 = xla_tuple %s10, %s11, %s12, %s13
  %s15 = sld [smem:[#allocation0]]
  $region121: #{p2p_cse_regularization.1} parent=0
    _
  %s17 = ssub.s32 1, %s15
  %s18 = scalar_select 0, %s17, %s15
  $region1: #{p2p_cse_regularization.1} parent=0
    #allocation2 [shape = 'u8[512]{0}', space=smem, size = 0x200, scoped, tag = 'input window, operand 0, single buffered']
    #allocation3 [shape = 's32[2]{0}', space=sflag, size = 0x8, scoped, tag = 'scoped memory for p2p_cse_regularization.1']
    #allocation4 [shape = 'u8[512]{0}', space=smem, size = 0x200, scoped, tag = 'input window, operand 1, single buffered']
    #allocation5 [shape = 's32[1]{0}', space=sflag, size = 0x4, scoped, tag = 'scoped memory for p2p_cse_regularization.1']
    #allocation6 [shape = 'u8[512]{0}', space=smem, size = 0x200, scoped, tag = 'input window, operand 2, single buffered']
    #allocation7 [shape = 'u8[512]{0}', space=smem, size = 0x200, scoped, tag = 'input window, operand 3, single buffered']
    #allocation8 [shape = 's32[1]{0}', space=sflag, size = 0x4, scoped, tag = 'scoped memory for p2p_cse_regularization.1']
    #allocation9 [shape = 'u8[512]{0}', space=smem, size = 0x200, scoped, tag = 'input window, operand 4, single buffered']
    #allocation10 [shape = 'u8[512]{0}', space=smem, size = 0x200, scoped, tag = 'input window, operand 5, single buffered']
    #allocation11 [shape = 's32[1]{0}', space=sflag, size = 0x4, scoped, tag = 'scoped memory for p2p_cse_regularization.1']
    %19 = vsyncpa [#allocation3], 0
    %20 = vsyncpa [#allocation5], 0
    %21 = vsyncpa [#allocation8], 0
    %22 = vsyncpa [#allocation11], 0
    loop: start=0, step=1, limit=4
    $region2: #{p2p_cse_regularization.1} parent=1 // loop_pre_header
      _
    $region3: #{p2p_cse_regularization.1} parent=1 // loop_header
      %s24 = sphi 0, %s28
      %p25 = scmp.ge.s32.totalorder %s24, 4
      %s31 = sphi 0, %s43
      %s32 = sphi 0, %s39
      %s33 = sphi 0, %s31
      %s34 = sphi 0, %s32
      %s35 = sphi 0, %s33
      %s36 = sphi 0, %s34
      %s44 = sphi 0, %s44
      %s46 = sphi 0, %s44
      %s47 = sphi 0, %s46
      %s61 = sphi 0, %s47
      %s65 = sphi 0, %s65
      %s67 = sphi 0, %s65
      %s68 = sphi 0, %s67
      %s82 = sphi 0, %s68
      %s86 = sphi 0, %s86
      %s88 = sphi 0, %s86
      %s89 = sphi 0, %s88
      %s103 = sphi 0, %s89
      %s107 = sphi 0, %s107
      %s109 = sphi 0, %s107
      %s110 = sphi 0, %s109
      %s124 = sphi 0, %s110
      %s128 = sphi 0, %s128
      %s130 = sphi 0, %s128
      %s131 = sphi 0, %s130
      %s145 = sphi 0, %s131
      %s149 = sphi 0, %s149
      %s151 = sphi 0, %s149
      %s152 = sphi 0, %s151
      %s166 = sphi 0, %s152
      %s174 = sphi 0, %s176
      %s177 = sphi 0, %s174
      %s178 = sphi 0, %s177
      %s194 = sphi 0, %s178
      %s202 = sphi 0, %s204
      %s205 = sphi 0, %s202
      %s206 = sphi 0, %s205
      %s222 = sphi 0, %s206
      %s230 = sphi 0, %s232
      %s233 = sphi 0, %s230
      %s234 = sphi 0, %s233
      %s250 = sphi 0, %s234
      %s258 = sphi 0, %s260
      %s261 = sphi 0, %s258
      %s262 = sphi 0, %s261
      %s278 = sphi 0, %s262
      %s286 = sphi 0, %s288
      %s289 = sphi 0, %s286
      %s290 = sphi 0, %s289
      %s306 = sphi 0, %s290
      %s314 = sphi 0, %s316
      %s317 = sphi 0, %s314
      %s318 = sphi 0, %s317
      %s334 = sphi 0, %s318
      %s342 = sphi 0, %s344
      %s345 = sphi 0, %s342
      %s346 = sphi 0, %s345
      %s362 = sphi 0, %s346
      %s370 = sphi 0, %s372
      %s373 = sphi 0, %s370
      %s374 = sphi 0, %s373
      %s390 = sphi 0, %s374
    $region4: #{p2p_cse_regularization.1} parent=1 // loop_header_branch
      %27 = sbr.rel (%p25) target = $region8
    $region5: #{p2p_cse_regularization.1} parent=1 // loop_body
      %s29 = ssub.s32 %s24, 1
      %s30 = ssub.s32 %s24, 2
      %s37 = sadd.s32 1, %s32
      %p38 = scmp.ge.s32.totalorder %s37, 1
      %s39 = scalar_select %p38, 0, %s37
      %s40 = sadd.s32 1, %s31
      %s41 = scalar_select %p38, %s40, %s31
      %p42 = scmp.ge.s32.totalorder %s41, 2
      %s43 = scalar_select %p42, 0, %s41
      %s45 = sadd.s32 %s44, 1
      %p48 = scmp.eq.s32.totalorder %s24, 1
      %p49 = scmp.ne.s32.totalorder %s44, %s46
      %p50 = scmp.eq.s32.totalorder %s24, 0
      %p51 = por %p49, %p50
      %p52 = scmp.ne.s32.totalorder %s44, %s46
      %p53 = scmp.eq.s32.totalorder %s29, 1
      %p54 = por %p52, %p53
      %p55 = scmp.ne.s32.totalorder %s46, %s47
      %p56 = scmp.eq.s32.totalorder %s29, 0
      %p57 = por %p55, %p56
      %p58 = scmp.ne.s32.totalorder %s46, %s47
      %p59 = scmp.eq.s32.totalorder %s30, 1
      %p60 = por %p58, %p59
      %p62 = scmp.ne.s32.totalorder %s47, %s61
      %p63 = scmp.eq.s32.totalorder %s30, 0
      %p64 = por %p62, %p63
      %s66 = sadd.s32 %s65, 1
      %p69 = scmp.eq.s32.totalorder %s24, 1
      %p70 = scmp.ne.s32.totalorder %s65, %s67
      %p71 = scmp.eq.s32.totalorder %s24, 0
      %p72 = por %p70, %p71
      %p73 = scmp.ne.s32.totalorder %s65, %s67
      %p74 = scmp.eq.s32.totalorder %s29, 1
      %p75 = por %p73, %p74
      %p76 = scmp.ne.s32.totalorder %s67, %s68
      %p77 = scmp.eq.s32.totalorder %s29, 0
      %p78 = por %p76, %p77
      %p79 = scmp.ne.s32.totalorder %s67, %s68
      %p80 = scmp.eq.s32.totalorder %s30, 1
      %p81 = por %p79, %p80
      %p83 = scmp.ne.s32.totalorder %s68, %s82
      %p84 = scmp.eq.s32.totalorder %s30, 0
      %p85 = por %p83, %p84
      %s87 = sadd.s32 %s86, 1
      %p90 = scmp.eq.s32.totalorder %s24, 1
      %p91 = scmp.ne.s32.totalorder %s86, %s88
      %p92 = scmp.eq.s32.totalorder %s24, 0
      %p93 = por %p91, %p92
      %p94 = scmp.ne.s32.totalorder %s86, %s88
      %p95 = scmp.eq.s32.totalorder %s29, 1
      %p96 = por %p94, %p95
      %p97 = scmp.ne.s32.totalorder %s88, %s89
      %p98 = scmp.eq.s32.totalorder %s29, 0
      %p99 = por %p97, %p98
      %p100 = scmp.ne.s32.totalorder %s88, %s89
      %p101 = scmp.eq.s32.totalorder %s30, 1
      %p102 = por %p100, %p101
      %p104 = scmp.ne.s32.totalorder %s89, %s103
      %p105 = scmp.eq.s32.totalorder %s30, 0
      %p106 = por %p104, %p105
      %s108 = sadd.s32 %s107, 1
      %p111 = scmp.eq.s32.totalorder %s24, 1
      %p112 = scmp.ne.s32.totalorder %s107, %s109
      %p113 = scmp.eq.s32.totalorder %s24, 0
      %p114 = por %p112, %p113
      %p115 = scmp.ne.s32.totalorder %s107, %s109
      %p116 = scmp.eq.s32.totalorder %s29, 1
      %p117 = por %p115, %p116
      %p118 = scmp.ne.s32.totalorder %s109, %s110
      %p119 = scmp.eq.s32.totalorder %s29, 0
      %p120 = por %p118, %p119
      %p121 = scmp.ne.s32.totalorder %s109, %s110
      %p122 = scmp.eq.s32.totalorder %s30, 1
      %p123 = por %p121, %p122
      %p125 = scmp.ne.s32.totalorder %s110, %s124
      %p126 = scmp.eq.s32.totalorder %s30, 0
      %p127 = por %p125, %p126
      %s129 = sadd.s32 %s128, 1
      %p132 = scmp.eq.s32.totalorder %s24, 1
      %p133 = scmp.ne.s32.totalorder %s128, %s130
      %p134 = scmp.eq.s32.totalorder %s24, 0
      %p135 = por %p133, %p134
      %p136 = scmp.ne.s32.totalorder %s128, %s130
      %p137 = scmp.eq.s32.totalorder %s29, 1
      %p138 = por %p136, %p137
      %p139 = scmp.ne.s32.totalorder %s130, %s131
      %p140 = scmp.eq.s32.totalorder %s29, 0
      %p141 = por %p139, %p140
      %p142 = scmp.ne.s32.totalorder %s130, %s131
      %p143 = scmp.eq.s32.totalorder %s30, 1
      %p144 = por %p142, %p143
      %p146 = scmp.ne.s32.totalorder %s131, %s145
      %p147 = scmp.eq.s32.totalorder %s30, 0
      %p148 = por %p146, %p147
      %s150 = sadd.s32 %s149, 1
      %p153 = scmp.eq.s32.totalorder %s24, 1
      %p154 = scmp.ne.s32.totalorder %s149, %s151
      %p155 = scmp.eq.s32.totalorder %s24, 0
      %p156 = por %p154, %p155
      %p157 = scmp.ne.s32.totalorder %s149, %s151
      %p158 = scmp.eq.s32.totalorder %s29, 1
      %p159 = por %p157, %p158
      %p160 = scmp.ne.s32.totalorder %s151, %s152
      %p161 = scmp.eq.s32.totalorder %s29, 0
      %p162 = por %p160, %p161
      %p163 = scmp.ne.s32.totalorder %s151, %s152
      %p164 = scmp.eq.s32.totalorder %s30, 1
      %p165 = por %p163, %p164
      %p167 = scmp.ne.s32.totalorder %s152, %s166
      %p168 = scmp.eq.s32.totalorder %s30, 0
      %p169 = por %p167, %p168
      %s170 = ssub.s32 %s31, %s43
      %s171 = ssub.s32 %s32, %s39
      %s172 = sor.u32 %s170, %s171
      %p173 = scmp.eq.s32.totalorder %s172, 0
      %s175 = sadd.s32 %s174, 1
      %s176 = scalar_select %p173, %s174, %s175
      %p179 = pneg %p173
      %p180 = scmp.eq.s32.totalorder %s24, 1
      %p181 = por %p179, %p180
      %p182 = scmp.ne.s32.totalorder %s174, %s177
      %p183 = scmp.eq.s32.totalorder %s24, 0
      %p184 = por %p182, %p183
      %p185 = scmp.ne.s32.totalorder %s174, %s177
      %p186 = scmp.eq.s32.totalorder %s29, 1
      %p187 = por %p185, %p186
      %p188 = scmp.ne.s32.totalorder %s177, %s178
      %p189 = scmp.eq.s32.totalorder %s29, 0
      %p190 = por %p188, %p189
      %p191 = scmp.ne.s32.totalorder %s177, %s178
      %p192 = scmp.eq.s32.totalorder %s30, 1
      %p193 = por %p191, %p192
      %p195 = scmp.ne.s32.totalorder %s178, %s194
      %p196 = scmp.eq.s32.totalorder %s30, 0
      %p197 = por %p195, %p196
      %s198 = ssub.s32 %s31, %s43
      %s199 = ssub.s32 %s32, %s39
      %s200 = sor.u32 %s198, %s199
      %p201 = scmp.eq.s32.totalorder %s200, 0
      %s203 = sadd.s32 %s202, 1
      %s204 = scalar_select %p201, %s202, %s203
      %p207 = pneg %p201
      %p208 = scmp.eq.s32.totalorder %s24, 1
      %p209 = por %p207, %p208
      %p210 = scmp.ne.s32.totalorder %s202, %s205
      %p211 = scmp.eq.s32.totalorder %s24, 0
      %p212 = por %p210, %p211
      %p213 = scmp.ne.s32.totalorder %s202, %s205
      %p214 = scmp.eq.s32.totalorder %s29, 1
      %p215 = por %p213, %p214
      %p216 = scmp.ne.s32.totalorder %s205, %s206
      %p217 = scmp.eq.s32.totalorder %s29, 0
      %p218 = por %p216, %p217
      %p219 = scmp.ne.s32.totalorder %s205, %s206
      %p220 = scmp.eq.s32.totalorder %s30, 1
      %p221 = por %p219, %p220
      %p223 = scmp.ne.s32.totalorder %s206, %s222
      %p224 = scmp.eq.s32.totalorder %s30, 0
      %p225 = por %p223, %p224
      %s226 = ssub.s32 %s31, %s43
      %s227 = ssub.s32 %s32, %s39
      %s228 = sor.u32 %s226, %s227
      %p229 = scmp.eq.s32.totalorder %s228, 0
      %s231 = sadd.s32 %s230, 1
      %s232 = scalar_select %p229, %s230, %s231
      %p235 = pneg %p229
      %p236 = scmp.eq.s32.totalorder %s24, 1
      %p237 = por %p235, %p236
      %p238 = scmp.ne.s32.totalorder %s230, %s233
      %p239 = scmp.eq.s32.totalorder %s24, 0
      %p240 = por %p238, %p239
      %p241 = scmp.ne.s32.totalorder %s230, %s233
      %p242 = scmp.eq.s32.totalorder %s29, 1
      %p243 = por %p241, %p242
      %p244 = scmp.ne.s32.totalorder %s233, %s234
      %p245 = scmp.eq.s32.totalorder %s29, 0
      %p246 = por %p244, %p245
      %p247 = scmp.ne.s32.totalorder %s233, %s234
      %p248 = scmp.eq.s32.totalorder %s30, 1
      %p249 = por %p247, %p248
      %p251 = scmp.ne.s32.totalorder %s234, %s250
      %p252 = scmp.eq.s32.totalorder %s30, 0
      %p253 = por %p251, %p252
      %s254 = ssub.s32 %s31, %s43
      %s255 = ssub.s32 %s32, %s39
      %s256 = sor.u32 %s254, %s255
      %p257 = scmp.eq.s32.totalorder %s256, 0
      %s259 = sadd.s32 %s258, 1
      %s260 = scalar_select %p257, %s258, %s259
      %p263 = pneg %p257
      %p264 = scmp.eq.s32.totalorder %s24, 1
      %p265 = por %p263, %p264
      %p266 = scmp.ne.s32.totalorder %s258, %s261
      %p267 = scmp.eq.s32.totalorder %s24, 0
      %p268 = por %p266, %p267
      %p269 = scmp.ne.s32.totalorder %s258, %s261
      %p270 = scmp.eq.s32.totalorder %s29, 1
      %p271 = por %p269, %p270
      %p272 = scmp.ne.s32.totalorder %s261, %s262
      %p273 = scmp.eq.s32.totalorder %s29, 0
      %p274 = por %p272, %p273
      %p275 = scmp.ne.s32.totalorder %s261, %s262
      %p276 = scmp.eq.s32.totalorder %s30, 1
      %p277 = por %p275, %p276
      %p279 = scmp.ne.s32.totalorder %s262, %s278
      %p280 = scmp.eq.s32.totalorder %s30, 0
      %p281 = por %p279, %p280
      %s282 = ssub.s32 %s31, %s43
      %s283 = ssub.s32 %s32, %s39
      %s284 = sor.u32 %s282, %s283
      %p285 = scmp.eq.s32.totalorder %s284, 0
      %s287 = sadd.s32 %s286, 1
      %s288 = scalar_select %p285, %s286, %s287
      %p291 = pneg %p285
      %p292 = scmp.eq.s32.totalorder %s24, 1
      %p293 = por %p291, %p292
      %p294 = scmp.ne.s32.totalorder %s286, %s289
      %p295 = scmp.eq.s32.totalorder %s24, 0
      %p296 = por %p294, %p295
      %p297 = scmp.ne.s32.totalorder %s286, %s289
      %p298 = scmp.eq.s32.totalorder %s29, 1
      %p299 = por %p297, %p298
      %p300 = scmp.ne.s32.totalorder %s289, %s290
      %p301 = scmp.eq.s32.totalorder %s29, 0
      %p302 = por %p300, %p301
      %p303 = scmp.ne.s32.totalorder %s289, %s290
      %p304 = scmp.eq.s32.totalorder %s30, 1
      %p305 = por %p303, %p304
      %p307 = scmp.ne.s32.totalorder %s290, %s306
      %p308 = scmp.eq.s32.totalorder %s30, 0
      %p309 = por %p307, %p308
      %s310 = ssub.s32 %s31, %s43
      %s311 = ssub.s32 %s32, %s39
      %s312 = sor.u32 %s310, %s311
      %p313 = scmp.eq.s32.totalorder %s312, 0
      %s315 = sadd.s32 %s314, 1
      %s316 = scalar_select %p313, %s314, %s315
      %p319 = pneg %p313
      %p320 = scmp.eq.s32.totalorder %s24, 1
      %p321 = por %p319, %p320
      %p322 = scmp.ne.s32.totalorder %s314, %s317
      %p323 = scmp.eq.s32.totalorder %s24, 0
      %p324 = por %p322, %p323
      %p325 = scmp.ne.s32.totalorder %s314, %s317
      %p326 = scmp.eq.s32.totalorder %s29, 1
      %p327 = por %p325, %p326
      %p328 = scmp.ne.s32.totalorder %s317, %s318
      %p329 = scmp.eq.s32.totalorder %s29, 0
      %p330 = por %p328, %p329
      %p331 = scmp.ne.s32.totalorder %s317, %s318
      %p332 = scmp.eq.s32.totalorder %s30, 1
      %p333 = por %p331, %p332
      %p335 = scmp.ne.s32.totalorder %s318, %s334
      %p336 = scmp.eq.s32.totalorder %s30, 0
      %p337 = por %p335, %p336
      %s338 = ssub.s32 %s31, %s43
      %s339 = ssub.s32 %s32, %s39
      %s340 = sor.u32 %s338, %s339
      %p341 = scmp.eq.s32.totalorder %s340, 0
      %s343 = sadd.s32 %s342, 1
      %s344 = scalar_select %p341, %s342, %s343
      %p347 = pneg %p341
      %p348 = scmp.eq.s32.totalorder %s24, 1
      %p349 = por %p347, %p348
      %p350 = scmp.ne.s32.totalorder %s342, %s345
      %p351 = scmp.eq.s32.totalorder %s24, 0
      %p352 = por %p350, %p351
      %p353 = scmp.ne.s32.totalorder %s342, %s345
      %p354 = scmp.eq.s32.totalorder %s29, 1
      %p355 = por %p353, %p354
      %p356 = scmp.ne.s32.totalorder %s345, %s346
      %p357 = scmp.eq.s32.totalorder %s29, 0
      %p358 = por %p356, %p357
      %p359 = scmp.ne.s32.totalorder %s345, %s346
      %p360 = scmp.eq.s32.totalorder %s30, 1
      %p361 = por %p359, %p360
      %p363 = scmp.ne.s32.totalorder %s346, %s362
      %p364 = scmp.eq.s32.totalorder %s30, 0
      %p365 = por %p363, %p364
      %s366 = ssub.s32 %s31, %s43
      %s367 = ssub.s32 %s32, %s39
      %s368 = sor.u32 %s366, %s367
      %p369 = scmp.eq.s32.totalorder %s368, 0
      %s371 = sadd.s32 %s370, 1
      %s372 = scalar_select %p369, %s370, %s371
      %p375 = pneg %p369
      %p376 = scmp.eq.s32.totalorder %s24, 1
      %p377 = por %p375, %p376
      %p378 = scmp.ne.s32.totalorder %s370, %s373
      %p379 = scmp.eq.s32.totalorder %s24, 0
      %p380 = por %p378, %p379
      %p381 = scmp.ne.s32.totalorder %s370, %s373
      %p382 = scmp.eq.s32.totalorder %s29, 1
      %p383 = por %p381, %p382
      %p384 = scmp.ne.s32.totalorder %s373, %s374
      %p385 = scmp.eq.s32.totalorder %s29, 0
      %p386 = por %p384, %p385
      %p387 = scmp.ne.s32.totalorder %s373, %s374
      %p388 = scmp.eq.s32.totalorder %s30, 1
      %p389 = por %p387, %p388
      %p391 = scmp.ne.s32.totalorder %s374, %s390
      %p392 = scmp.eq.s32.totalorder %s30, 0
      %p393 = por %p391, %p392
      %p394 = scmp.le.s32.totalorder 1, %s24
      %p395 = scmp.lt.s32.totalorder %s24, 3
      %p396 = pnand %p394, %p395
      %p397 = pneg %p396
      // Predicated region
      $region9: #{p2p_cse_regularization.1} parent=5 // pred_check
        _
      $region10: #{p2p_cse_regularization.1} parent=5 // pred_check_branch
        %399 = sbr.rel (%p396) target = $region12
      $region11: #{p2p_cse_regularization.1} parent=5 // pred_region
        %s400 = ssub.s32 %s24, 1
        // Predicated region
        $region13: #{p2p_cse_regularization.1} parent=11 // pred_check
          %p401 = pneg %p57
        $region14: #{p2p_cse_regularization.1} parent=11 // pred_check_branch
          %403 = sbr.rel (%p401) target = $region16
        $region15: #{p2p_cse_regularization.1} parent=11 // pred_region
          %s405 = ssub.s32 16, 16
          %406 = vsyncadd [#allocation3], %s405
          %s408 = sshll.u32 %s0, 4
          %s409 = int_to_ptr.vmem [resolvable:$true] %s408
          %411 = dma.vmem_to_smem %s409, 16, [#allocation2], [#allocation3]
        $region16: #{p2p_cse_regularization.1} parent=11 // pred_fallthru
          _
        // Predicated region
        $region17: #{p2p_cse_regularization.1} parent=11 // pred_check
          %p412 = pneg %p78
        $region18: #{p2p_cse_regularization.1} parent=11 // pred_check_branch
          %414 = sbr.rel (%p412) target = $region20
        $region19: #{p2p_cse_regularization.1} parent=11 // pred_region
          %s416 = ssub.s32 16, 16
          %417 = vsyncadd [#allocation5], %s416
          %s419 = sshll.u32 %s1, 4
          %s420 = int_to_ptr.vmem [resolvable:$true] %s419
          %422 = dma.vmem_to_smem %s420, 16, [#allocation4], [#allocation5]
        $region20: #{p2p_cse_regularization.1} parent=11 // pred_fallthru
          _
        // Predicated region
        $region21: #{p2p_cse_regularization.1} parent=11 // pred_check
          %p423 = pneg %p99
        $region22: #{p2p_cse_regularization.1} parent=11 // pred_check_branch
          %425 = sbr.rel (%p423) target = $region24
        $region23: #{p2p_cse_regularization.1} parent=11 // pred_region
          %s427 = ssub.s32 16, 16
          %428 = vsyncadd [#allocation5], %s427
          %s430 = sshll.u32 %s2, 4
          %s431 = int_to_ptr.vmem [resolvable:$true] %s430
          %433 = dma.vmem_to_smem %s431, 16, [#allocation6], [#allocation5]
        $region24: #{p2p_cse_regularization.1} parent=11 // pred_fallthru
          _
        // Predicated region
        $region25: #{p2p_cse_regularization.1} parent=11 // pred_check
          %p434 = pneg %p120
        $region26: #{p2p_cse_regularization.1} parent=11 // pred_check_branch
          %436 = sbr.rel (%p434) target = $region28
        $region27: #{p2p_cse_regularization.1} parent=11 // pred_region
          %s438 = ssub.s32 16, 16
          %439 = vsyncadd [#allocation8], %s438
          %s441 = sshll.u32 %s3, 4
          %s442 = int_to_ptr.vmem [resolvable:$true] %s441
          %444 = dma.vmem_to_smem %s442, 16, [#allocation7], [#allocation8]
        $region28: #{p2p_cse_regularization.1} parent=11 // pred_fallthru
          _
        // Predicated region
        $region29: #{p2p_cse_regularization.1} parent=11 // pred_check
          %p445 = pneg %p141
        $region30: #{p2p_cse_regularization.1} parent=11 // pred_check_branch
          %447 = sbr.rel (%p445) target = $region32
        $region31: #{p2p_cse_regularization.1} parent=11 // pred_region
          %s449 = ssub.s32 16, 16
          %450 = vsyncadd [#allocation8], %s449
          %s452 = sshll.u32 %s4, 4
          %s453 = int_to_ptr.vmem [resolvable:$true] %s452
          %455 = dma.vmem_to_smem %s453, 16, [#allocation9], [#allocation8]
        $region32: #{p2p_cse_regularization.1} parent=11 // pred_fallthru
          _
        // Predicated region
        $region33: #{p2p_cse_regularization.1} parent=11 // pred_check
          %p456 = pneg %p162
        $region34: #{p2p_cse_regularization.1} parent=11 // pred_check_branch
          %458 = sbr.rel (%p456) target = $region36
        $region35: #{p2p_cse_regularization.1} parent=11 // pred_region
          %s460 = ssub.s32 16, 16
          %461 = vsyncadd [#allocation11], %s460
          %s463 = sshll.u32 %s5, 4
          %s464 = int_to_ptr.vmem [resolvable:$true] %s463
          %466 = dma.vmem_to_smem %s464, 16, [#allocation10], [#allocation11]
        $region36: #{p2p_cse_regularization.1} parent=11 // pred_fallthru
          _
      $region12: #{p2p_cse_regularization.1} parent=5 // pred_fallthru
        _
      %p467 = scmp.lt.s32.totalorder %s24, 2
      // Predicated region
      $region37: #{p2p_cse_regularization.1} parent=5 // pred_check
        %p468 = pneg %p467
      $region38: #{p2p_cse_regularization.1} parent=5 // pred_check_branch
        %470 = sbr.rel (%p468) target = $region40
      $region39: #{p2p_cse_regularization.1} parent=5 // pred_region
        // Predicated region
        $region41: #{p2p_cse_regularization.1} parent=39 // pred_check
          %p471 = pneg %p184
        $region42: #{p2p_cse_regularization.1} parent=39 // pred_check_branch
          %473 = sbr.rel (%p471) target = $region44
        $region43: #{p2p_cse_regularization.1} parent=39 // pred_region
          %s474 = smul.u32 2, %s32
          %p475 = scmp.lt.s32.totalorder %s31, 1
          %s476 = scalar_select %p475, %s31, 1
          %p477 = scmp.lt.s32.totalorder %s474, 1
          %s478 = scalar_select %p477, %s474, 1
          %s479 = smul.addr %s476, 8
          %s480 = sadd.s32 %s478, %s479
          %s481 = smul.addr %s480, 8
          %s482 = scalar_lea.vmem %s6, %s481
          %s483 = smul.u32 2, %s32
        $region44: #{p2p_cse_regularization.1} parent=39 // pred_fallthru
          _
        // Predicated region
        $region45: #{p2p_cse_regularization.1} parent=39 // pred_check
          %p484 = pneg %p212
        $region46: #{p2p_cse_regularization.1} parent=39 // pred_check_branch
          %486 = sbr.rel (%p484) target = $region48
        $region47: #{p2p_cse_regularization.1} parent=39 // pred_region
          %s487 = smul.u32 2, %s32
          %p488 = scmp.lt.s32.totalorder %s31, 1
          %s489 = scalar_select %p488, %s31, 1
          %p490 = scmp.lt.s32.totalorder %s487, 1
          %s491 = scalar_select %p490, %s487, 1
          %s492 = smul.addr %s489, 8
          %s493 = sadd.s32 %s491, %s492
          %s494 = smul.addr %s493, 8
          %s495 = scalar_lea.vmem %s7, %s494
          %s496 = smul.u32 2, %s32
        $region48: #{p2p_cse_regularization.1} parent=39 // pred_fallthru
          _
        // Predicated region
        $region49: #{p2p_cse_regularization.1} parent=39 // pred_check
          %p497 = pneg %p240
        $region50: #{p2p_cse_regularization.1} parent=39 // pred_check_branch
          %499 = sbr.rel (%p497) target = $region52
        $region51: #{p2p_cse_regularization.1} parent=39 // pred_region
          %s500 = smul.u32 2, %s32
          %p501 = scmp.lt.s32.totalorder %s31, 1
          %s502 = scalar_select %p501, %s31, 1
          %p503 = scmp.lt.s32.totalorder %s500, 1
          %s504 = scalar_select %p503, %s500, 1
          %s505 = smul.addr %s502, 8
          %s506 = sadd.s32 %s504, %s505
          %s507 = smul.addr %s506, 8
          %s508 = scalar_lea.vmem %s8, %s507
          %s509 = smul.u32 2, %s32
        $region52: #{p2p_cse_regularization.1} parent=39 // pred_fallthru
          _
        // Predicated region
        $region53: #{p2p_cse_regularization.1} parent=39 // pred_check
          %p510 = pneg %p268
        $region54: #{p2p_cse_regularization.1} parent=39 // pred_check_branch
          %512 = sbr.rel (%p510) target = $region56
        $region55: #{p2p_cse_regularization.1} parent=39 // pred_region
          %s513 = smul.u32 2, %s32
          %p514 = scmp.lt.s32.totalorder %s31, 1
          %s515 = scalar_select %p514, %s31, 1
          %p516 = scmp.lt.s32.totalorder %s513, 1
          %s517 = scalar_select %p516, %s513, 1
          %s518 = smul.addr %s515, 8
          %s519 = sadd.s32 %s517, %s518
          %s520 = smul.addr %s519, 8
          %s521 = scalar_lea.vmem %s9, %s520
          %s522 = smul.u32 2, %s32
        $region56: #{p2p_cse_regularization.1} parent=39 // pred_fallthru
          _
      $region40: #{p2p_cse_regularization.1} parent=5 // pred_fallthru
        _
      %p523 = scmp.le.s32.totalorder 1, %s24
      %p524 = scmp.lt.s32.totalorder %s24, 3
      %p525 = pnand %p523, %p524
      %p526 = pneg %p525
      // Predicated region
      $region57: #{p2p_cse_regularization.1} parent=5 // pred_check
        _
      $region58: #{p2p_cse_regularization.1} parent=5 // pred_check_branch
        %528 = sbr.rel (%p525) target = $region60
      $region59: #{p2p_cse_regularization.1} parent=5 // pred_region
        %s529 = ssub.s32 %s24, 1
        // Predicated region
        $region61: #{p2p_cse_regularization.1} parent=59 // pred_check
          %p530 = pneg %p57
        $region62: #{p2p_cse_regularization.1} parent=59 // pred_check_branch
          %532 = sbr.rel (%p530) target = $region64
        $region63: #{p2p_cse_regularization.1} parent=59 // pred_region
          %533 = dma.done [#allocation3], 16
        $region64: #{p2p_cse_regularization.1} parent=59 // pred_fallthru
          _
        // Predicated region
        $region65: #{p2p_cse_regularization.1} parent=59 // pred_check
          %p534 = pneg %p78
        $region66: #{p2p_cse_regularization.1} parent=59 // pred_check_branch
          %536 = sbr.rel (%p534) target = $region68
        $region67: #{p2p_cse_regularization.1} parent=59 // pred_region
          %537 = dma.done [#allocation5], 16
        $region68: #{p2p_cse_regularization.1} parent=59 // pred_fallthru
          _
        // Predicated region
        $region69: #{p2p_cse_regularization.1} parent=59 // pred_check
          %p538 = pneg %p99
        $region70: #{p2p_cse_regularization.1} parent=59 // pred_check_branch
          %540 = sbr.rel (%p538) target = $region72
        $region71: #{p2p_cse_regularization.1} parent=59 // pred_region
          %541 = dma.done [#allocation5], 16
        $region72: #{p2p_cse_regularization.1} parent=59 // pred_fallthru
          _
        // Predicated region
        $region73: #{p2p_cse_regularization.1} parent=59 // pred_check
          %p542 = pneg %p120
        $region74: #{p2p_cse_regularization.1} parent=59 // pred_check_branch
          %544 = sbr.rel (%p542) target = $region76
        $region75: #{p2p_cse_regularization.1} parent=59 // pred_region
          %545 = dma.done [#allocation8], 16
        $region76: #{p2p_cse_regularization.1} parent=59 // pred_fallthru
          _
        // Predicated region
        $region77: #{p2p_cse_regularization.1} parent=59 // pred_check
          %p546 = pneg %p141
        $region78: #{p2p_cse_regularization.1} parent=59 // pred_check_branch
          %548 = sbr.rel (%p546) target = $region80
        $region79: #{p2p_cse_regularization.1} parent=59 // pred_region
          %549 = dma.done [#allocation8], 16
        $region80: #{p2p_cse_regularization.1} parent=59 // pred_fallthru
          _
        // Predicated region
        $region81: #{p2p_cse_regularization.1} parent=59 // pred_check
          %p550 = pneg %p162
        $region82: #{p2p_cse_regularization.1} parent=59 // pred_check_branch
          %552 = sbr.rel (%p550) target = $region84
        $region83: #{p2p_cse_regularization.1} parent=59 // pred_region
          %553 = dma.done [#allocation11], 16
        $region84: #{p2p_cse_regularization.1} parent=59 // pred_fallthru
          _
        %554 = sfence
        %p555 = pneg %p57
        %p556 = pneg %p54
        %p557 = pneg %p78
        %p558 = pneg %p75
        %p559 = pneg %p99
        %p560 = pneg %p96
        %p561 = pneg %p120
        %p562 = pneg %p117
        %p563 = pneg %p141
        %p564 = pneg %p138
        %p565 = pneg %p162
        %p566 = pneg %p159
        %s567 = smul.u32 2, %s34
        %p568 = scmp.lt.s32.totalorder %s33, 1
        %s569 = scalar_select %p568, %s33, 1
        %p570 = scmp.lt.s32.totalorder %s567, 1
        %s571 = scalar_select %p570, %s567, 1
        %s572 = smul.addr %s569, 8
        %s573 = sadd.s32 %s571, %s572
        %s574 = smul.addr %s573, 8
        %s575 = scalar_lea.vmem %s6, %s574
        %p576 = pneg %p190
        %p577 = pneg %p187
        %s578 = smul.u32 2, %s34
        %p579 = scmp.lt.s32.totalorder %s33, 1
        %s580 = scalar_select %p579, %s33, 1
        %p581 = scmp.lt.s32.totalorder %s578, 1
        %s582 = scalar_select %p581, %s578, 1
        %s583 = smul.addr %s580, 8
        %s584 = sadd.s32 %s582, %s583
        %s585 = smul.addr %s584, 8
        %s586 = scalar_lea.vmem %s7, %s585
        %p587 = pneg %p218
        %p588 = pneg %p215
        %s589 = smul.u32 2, %s34
        %p590 = scmp.lt.s32.totalorder %s33, 1
        %s591 = scalar_select %p590, %s33, 1
        %p592 = scmp.lt.s32.totalorder %s589, 1
        %s593 = scalar_select %p592, %s589, 1
        %s594 = smul.addr %s591, 8
        %s595 = sadd.s32 %s593, %s594
        %s596 = smul.addr %s595, 8
        %s597 = scalar_lea.vmem %s8, %s596
        %p598 = pneg %p246
        %p599 = pneg %p243
        %s600 = smul.u32 2, %s34
        %p601 = scmp.lt.s32.totalorder %s33, 1
        %s602 = scalar_select %p601, %s33, 1
        %p603 = scmp.lt.s32.totalorder %s600, 1
        %s604 = scalar_select %p603, %s600, 1
        %s605 = smul.addr %s602, 8
        %s606 = sadd.s32 %s604, %s605
        %s607 = smul.addr %s606, 8
        %s608 = scalar_lea.vmem %s9, %s607
        %p609 = pneg %p274
        %p610 = pneg %p271
        %p611 = pneg %p302
        %p612 = pneg %p299
        %s613 = smul.u32 2, %s34
        %p614 = scmp.lt.s32.totalorder %s33, 1
        %s615 = scalar_select %p614, %s33, 1
        %p616 = scmp.lt.s32.totalorder %s613, 1
        %s617 = scalar_select %p616, %s613, 1
        %s618 = smul.addr %s615, 8
        %s619 = sadd.s32 %s617, %s618
        %s620 = smul.addr %s619, 8
        %s621 = scalar_lea.vmem %s10, %s620
        %p622 = pneg %p330
        %p623 = pneg %p327
        %s624 = smul.u32 2, %s34
        %p625 = scmp.lt.s32.totalorder %s33, 1
        %s626 = scalar_select %p625, %s33, 1
        %p627 = scmp.lt.s32.totalorder %s624, 1
        %s628 = scalar_select %p627, %s624, 1
        %s629 = smul.addr %s626, 8
        %s630 = sadd.s32 %s628, %s629
        %s631 = smul.addr %s630, 8
        %s632 = scalar_lea.vmem %s11, %s631
        %p633 = pneg %p358
        %p634 = pneg %p355
        %s635 = smul.u32 2, %s34
        %p636 = scmp.lt.s32.totalorder %s33, 1
        %s637 = scalar_select %p636, %s33, 1
        %p638 = scmp.lt.s32.totalorder %s635, 1
        %s639 = scalar_select %p638, %s635, 1
        %s640 = smul.addr %s637, 8
        %s641 = sadd.s32 %s639, %s640
        %s642 = smul.addr %s641, 8
        %s643 = scalar_lea.vmem %s12, %s642
        %p644 = pneg %p386
        %p645 = pneg %p383
        %s646 = smul.u32 2, %s34
        %p647 = scmp.lt.s32.totalorder %s33, 1
        %s648 = scalar_select %p647, %s33, 1
        %p649 = scmp.lt.s32.totalorder %s646, 1
        %s650 = scalar_select %p649, %s646, 1
        %s651 = smul.addr %s648, 8
        %s652 = sadd.s32 %s650, %s651
        %s653 = smul.addr %s652, 8
        %s654 = scalar_lea.vmem %s13, %s653
        %s655 = smul.u32 2, %s34
        %p656 = scmp.lt.s32.totalorder %s33, 1
        %s657 = scalar_select %p656, %s33, 1
        %p658 = scmp.lt.s32.totalorder %s655, 1
        %s659 = scalar_select %p658, %s655, 1
        %s660 = smul.addr %s657, 8
        %s661 = sadd.s32 %s659, %s660
        %s662 = smul.addr %s661, 8
        %s663 = scalar_lea.vmem %s6, %s662
        %s664 = smul.u32 2, %s34
        %s665 = smul.u32 2, %s34
        %p666 = scmp.lt.s32.totalorder %s33, 1
        %s667 = scalar_select %p666, %s33, 1
        %p668 = scmp.lt.s32.totalorder %s665, 1
        %s669 = scalar_select %p668, %s665, 1
        %s670 = smul.addr %s667, 8
        %s671 = sadd.s32 %s669, %s670
        %s672 = smul.addr %s671, 8
        %s673 = scalar_lea.vmem %s7, %s672
        %s674 = smul.u32 2, %s34
        %s675 = smul.u32 2, %s34
        %p676 = scmp.lt.s32.totalorder %s33, 1
        %s677 = scalar_select %p676, %s33, 1
        %p678 = scmp.lt.s32.totalorder %s675, 1
        %s679 = scalar_select %p678, %s675, 1
        %s680 = smul.addr %s677, 8
        %s681 = sadd.s32 %s679, %s680
        %s682 = smul.addr %s681, 8
        %s683 = scalar_lea.vmem %s8, %s682
        %s684 = smul.u32 2, %s34
        %s685 = smul.u32 2, %s34
        %p686 = scmp.lt.s32.totalorder %s33, 1
        %s687 = scalar_select %p686, %s33, 1
        %p688 = scmp.lt.s32.totalorder %s685, 1
        %s689 = scalar_select %p688, %s685, 1
        %s690 = smul.addr %s687, 8
        %s691 = sadd.s32 %s689, %s690
        %s692 = smul.addr %s691, 8
        %s693 = scalar_lea.vmem %s9, %s692
        %s694 = smul.u32 2, %s34
        %s695 = smul.u32 2, %s34
        %p696 = scmp.lt.s32.totalorder %s33, 1
        %s697 = scalar_select %p696, %s33, 1
        %p698 = scmp.lt.s32.totalorder %s695, 1
        %s699 = scalar_select %p698, %s695, 1
        %s700 = smul.addr %s697, 8
        %s701 = sadd.s32 %s699, %s700
        %s702 = smul.addr %s701, 8
        %s703 = scalar_lea.vmem %s10, %s702
        %s704 = smul.u32 2, %s34
        %s705 = smul.u32 2, %s34
        %p706 = scmp.lt.s32.totalorder %s33, 1
        %s707 = scalar_select %p706, %s33, 1
        %p708 = scmp.lt.s32.totalorder %s705, 1
        %s709 = scalar_select %p708, %s705, 1
        %s710 = smul.addr %s707, 8
        %s711 = sadd.s32 %s709, %s710
        %s712 = smul.addr %s711, 8
        %s713 = scalar_lea.vmem %s11, %s712
        %s714 = smul.u32 2, %s34
        %s715 = smul.u32 2, %s34
        %p716 = scmp.lt.s32.totalorder %s33, 1
        %s717 = scalar_select %p716, %s33, 1
        %p718 = scmp.lt.s32.totalorder %s715, 1
        %s719 = scalar_select %p718, %s715, 1
        %s720 = smul.addr %s717, 8
        %s721 = sadd.s32 %s719, %s720
        %s722 = smul.addr %s721, 8
        %s723 = scalar_lea.vmem %s12, %s722
        %s724 = smul.u32 2, %s34
        %s725 = smul.u32 2, %s34
        %p726 = scmp.lt.s32.totalorder %s33, 1
        %s727 = scalar_select %p726, %s33, 1
        %p728 = scmp.lt.s32.totalorder %s725, 1
        %s729 = scalar_select %p728, %s725, 1
        %s730 = smul.addr %s727, 8
        %s731 = sadd.s32 %s729, %s730
        %s732 = smul.addr %s731, 8
        %s733 = scalar_lea.vmem %s13, %s732
        %s734 = smul.u32 2, %s34
        %s735 = sld [smem:[#allocation2]]
        %s736 = sld [smem:[#allocation4]]
        %v737 = vld [vmem:[%s683] sm:$0xff]
        %v738 = vld [vmem:[%s683 + $0x8] sm:$0xff]
        %v739 = vld [vmem:[%s693] sm:$0xff]
        %v740 = vld [vmem:[%s693 + $0x8] sm:$0xff]
        %v741 = vstv %s735
        %v742 = vmul.f32 %v741, %v737
        %v743 = vmul.f32 %v741, %v738
        %v744 = vadd.f32 %v742, 0.0
        %v745 = vadd.f32 %v743, 0.0
        %v746 = vstv %s736
        %v747 = vmul.f32 %v746, %v739
        %v748 = vmul.f32 %v746, %v740
        %v749 = vsub.f32 %v744, %v747
        %v750 = vsub.f32 %v745, %v748
        %v751 = vmul.f32 %v741, %v739
        %v752 = vmul.f32 %v741, %v740
        %v753 = vadd.f32 %v751, 0.0
        %v754 = vadd.f32 %v752, 0.0
        %v755 = vmul.f32 %v746, %v737
        %v756 = vmul.f32 %v746, %v738
        %v757 = vadd.f32 %v753, %v755
        %v758 = vadd.f32 %v754, %v756
        %s759 = sld [smem:[#allocation2 + $0x1]]
        %s760 = sld [smem:[#allocation4 + $0x1]]
        %s761 = scalar_lea.vmem %s683, 16
        %v762 = vld [vmem:[%s761] sm:$0xff]
        %v763 = vld [vmem:[%s761 + $0x8] sm:$0xff]
        %s764 = scalar_lea.vmem %s693, 16
        %v765 = vld [vmem:[%s764] sm:$0xff]
        %v766 = vld [vmem:[%s764 + $0x8] sm:$0xff]
        %v767 = vstv %s759
        %v768 = vmul.f32 %v767, %v762
        %v769 = vmul.f32 %v767, %v763
        %v770 = vadd.f32 %v749, %v768
        %v771 = vadd.f32 %v750, %v769
        %v772 = vstv %s760
        %v773 = vmul.f32 %v772, %v765
        %v774 = vmul.f32 %v772, %v766
        %v775 = vsub.f32 %v770, %v773
        %v776 = vsub.f32 %v771, %v774
        %v777 = vmul.f32 %v767, %v765
        %v778 = vmul.f32 %v767, %v766
        %v779 = vadd.f32 %v757, %v777
        %v780 = vadd.f32 %v758, %v778
        %v781 = vmul.f32 %v772, %v762
        %v782 = vmul.f32 %v772, %v763
        %v783 = vadd.f32 %v779, %v781
        %v784 = vadd.f32 %v780, %v782
        %s785 = sld [smem:[#allocation2 + $0x2]]
        %s786 = sld [smem:[#allocation4 + $0x2]]
        %s787 = scalar_lea.vmem %s683, 32
        %v788 = vld [vmem:[%s787] sm:$0xff]
        %v789 = vld [vmem:[%s787 + $0x8] sm:$0xff]
        %s790 = scalar_lea.vmem %s693, 32
        %v791 = vld [vmem:[%s790] sm:$0xff]
        %v792 = vld [vmem:[%s790 + $0x8] sm:$0xff]
        %v793 = vstv %s785
        %v794 = vmul.f32 %v793, %v788
        %v795 = vmul.f32 %v793, %v789
        %v796 = vadd.f32 %v775, %v794
        %v797 = vadd.f32 %v776, %v795
        %v798 = vstv %s786
        %v799 = vmul.f32 %v798, %v791
        %v800 = vmul.f32 %v798, %v792
        %v801 = vsub.f32 %v796, %v799
        %v802 = vsub.f32 %v797, %v800
        %v803 = vmul.f32 %v793, %v791
        %v804 = vmul.f32 %v793, %v792
        %v805 = vadd.f32 %v783, %v803
        %v806 = vadd.f32 %v784, %v804
        %v807 = vmul.f32 %v798, %v788
        %v808 = vmul.f32 %v798, %v789
        %v809 = vadd.f32 %v805, %v807
        %v810 = vadd.f32 %v806, %v808
        %s811 = sld [smem:[#allocation2 + $0x3]]
        %s812 = sld [smem:[#allocation4 + $0x3]]
        %s813 = scalar_lea.vmem %s683, 48
        %v814 = vld [vmem:[%s813] sm:$0xff]
        %v815 = vld [vmem:[%s813 + $0x8] sm:$0xff]
        %s816 = scalar_lea.vmem %s693, 48
        %v817 = vld [vmem:[%s816] sm:$0xff]
        %v818 = vld [vmem:[%s816 + $0x8] sm:$0xff]
        %v819 = vstv %s811
        %v820 = vmul.f32 %v819, %v814
        %v821 = vmul.f32 %v819, %v815
        %v822 = vadd.f32 %v801, %v820
        %v823 = vadd.f32 %v802, %v821
        %v824 = vstv %s812
        %v825 = vmul.f32 %v824, %v817
        %v826 = vmul.f32 %v824, %v818
        %v827 = vsub.f32 %v822, %v825
        %v828 = vsub.f32 %v823, %v826
        %v829 = vmul.f32 %v819, %v817
        %v830 = vmul.f32 %v819, %v818
        %v831 = vadd.f32 %v809, %v829
        %v832 = vadd.f32 %v810, %v830
        %v833 = vmul.f32 %v824, %v814
        %v834 = vmul.f32 %v824, %v815
        %v835 = vadd.f32 %v831, %v833
        %v836 = vadd.f32 %v832, %v834
        %837 = vst [vmem:[%s703] sm:$0xff] %v827
        %838 = vst [vmem:[%s703 + $0x8] sm:$0xff] %v828
        %839 = vst [vmem:[%s713] sm:$0xff] %v835
        %840 = vst [vmem:[%s713 + $0x8] sm:$0xff] %v836
        %v841 = vld [vmem:[%s663] sm:$0xff]
        %v842 = vld [vmem:[%s663 + $0x8] sm:$0xff]
        %v843 = vld [vmem:[%s673] sm:$0xff]
        %v844 = vld [vmem:[%s673 + $0x8] sm:$0xff]
        %v845 = vmul.f32 %v841, %v827
        %v846 = vmul.f32 %v842, %v828
        %v847 = vadd.f32 %v845, 0.0
        %v848 = vadd.f32 %v846, 0.0
        %v849 = vmul.f32 %v843, %v835
        %v850 = vmul.f32 %v844, %v836
        %v851 = vadd.f32 %v847, %v849
        %v852 = vadd.f32 %v848, %v850
        %v853 = vmul.f32 %v843, %v827
        %v854 = vmul.f32 %v844, %v828
        %v855 = vadd.f32 %v853, 0.0
        %v856 = vadd.f32 %v854, 0.0
        %v857 = vmul.f32 %v841, %v835
        %v858 = vmul.f32 %v842, %v836
        %v859 = vsub.f32 %v855, %v857
        %v860 = vsub.f32 %v856, %v858
        %s861 = sld [smem:[#allocation2 + $0x4]]
        %s862 = sld [smem:[#allocation4 + $0x4]]
        %v863 = vld [vmem:[%s683] sm:$0xff]
        %v864 = vld [vmem:[%s683 + $0x8] sm:$0xff]
        %v865 = vld [vmem:[%s693] sm:$0xff]
        %v866 = vld [vmem:[%s693 + $0x8] sm:$0xff]
        %v867 = vstv %s861
        %v868 = vmul.f32 %v867, %v863
        %v869 = vmul.f32 %v867, %v864
        %v870 = vadd.f32 %v868, 0.0
        %v871 = vadd.f32 %v869, 0.0
        %v872 = vstv %s862
        %v873 = vmul.f32 %v872, %v865
        %v874 = vmul.f32 %v872, %v866
        %v875 = vsub.f32 %v870, %v873
        %v876 = vsub.f32 %v871, %v874
        %v877 = vmul.f32 %v867, %v865
        %v878 = vmul.f32 %v867, %v866
        %v879 = vadd.f32 %v877, 0.0
        %v880 = vadd.f32 %v878, 0.0
        %v881 = vmul.f32 %v872, %v863
        %v882 = vmul.f32 %v872, %v864
        %v883 = vadd.f32 %v879, %v881
        %v884 = vadd.f32 %v880, %v882
        %s885 = sld [smem:[#allocation2 + $0x5]]
        %s886 = sld [smem:[#allocation4 + $0x5]]
        %v887 = vld [vmem:[%s761] sm:$0xff]
        %v888 = vld [vmem:[%s761 + $0x8] sm:$0xff]
        %v889 = vld [vmem:[%s764] sm:$0xff]
        %v890 = vld [vmem:[%s764 + $0x8] sm:$0xff]
        %v891 = vstv %s885
        %v892 = vmul.f32 %v891, %v887
        %v893 = vmul.f32 %v891, %v888
        %v894 = vadd.f32 %v875, %v892
        %v895 = vadd.f32 %v876, %v893
        %v896 = vstv %s886
        %v897 = vmul.f32 %v896, %v889
        %v898 = vmul.f32 %v896, %v890
        %v899 = vsub.f32 %v894, %v897
        %v900 = vsub.f32 %v895, %v898
        %v901 = vmul.f32 %v891, %v889
        %v902 = vmul.f32 %v891, %v890
        %v903 = vadd.f32 %v883, %v901
        %v904 = vadd.f32 %v884, %v902
        %v905 = vmul.f32 %v896, %v887
        %v906 = vmul.f32 %v896, %v888
        %v907 = vadd.f32 %v903, %v905
        %v908 = vadd.f32 %v904, %v906
        %s909 = sld [smem:[#allocation2 + $0x6]]
        %s910 = sld [smem:[#allocation4 + $0x6]]
        %v911 = vld [vmem:[%s787] sm:$0xff]
        %v912 = vld [vmem:[%s787 + $0x8] sm:$0xff]
        %v913 = vld [vmem:[%s790] sm:$0xff]
        %v914 = vld [vmem:[%s790 + $0x8] sm:$0xff]
        %v915 = vstv %s909
        %v916 = vmul.f32 %v915, %v911
        %v917 = vmul.f32 %v915, %v912
        %v918 = vadd.f32 %v899, %v916
        %v919 = vadd.f32 %v900, %v917
        %v920 = vstv %s910
        %v921 = vmul.f32 %v920, %v913
        %v922 = vmul.f32 %v920, %v914
        %v923 = vsub.f32 %v918, %v921
        %v924 = vsub.f32 %v919, %v922
        %v925 = vmul.f32 %v915, %v913
        %v926 = vmul.f32 %v915, %v914
        %v927 = vadd.f32 %v907, %v925
        %v928 = vadd.f32 %v908, %v926
        %v929 = vmul.f32 %v920, %v911
        %v930 = vmul.f32 %v920, %v912
        %v931 = vadd.f32 %v927, %v929
        %v932 = vadd.f32 %v928, %v930
        %s933 = sld [smem:[#allocation2 + $0x7]]
        %s934 = sld [smem:[#allocation4 + $0x7]]
        %v935 = vld [vmem:[%s813] sm:$0xff]
        %v936 = vld [vmem:[%s813 + $0x8] sm:$0xff]
        %v937 = vld [vmem:[%s816] sm:$0xff]
        %v938 = vld [vmem:[%s816 + $0x8] sm:$0xff]
        %v939 = vstv %s933
        %v940 = vmul.f32 %v939, %v935
        %v941 = vmul.f32 %v939, %v936
        %v942 = vadd.f32 %v923, %v940
        %v943 = vadd.f32 %v924, %v941
        %v944 = vstv %s934
        %v945 = vmul.f32 %v944, %v937
        %v946 = vmul.f32 %v944, %v938
        %v947 = vsub.f32 %v942, %v945
        %v948 = vsub.f32 %v943, %v946
        %v949 = vmul.f32 %v939, %v937
        %v950 = vmul.f32 %v939, %v938
        %v951 = vadd.f32 %v931, %v949
        %v952 = vadd.f32 %v932, %v950
        %v953 = vmul.f32 %v944, %v935
        %v954 = vmul.f32 %v944, %v936
        %v955 = vadd.f32 %v951, %v953
        %v956 = vadd.f32 %v952, %v954
        %s957 = scalar_lea.vmem %s703, 16
        %958 = vst [vmem:[%s957] sm:$0xff] %v947
        %959 = vst [vmem:[%s957 + $0x8] sm:$0xff] %v948
        %s960 = scalar_lea.vmem %s713, 16
        %961 = vst [vmem:[%s960] sm:$0xff] %v955
        %962 = vst [vmem:[%s960 + $0x8] sm:$0xff] %v956
        %s963 = scalar_lea.vmem %s663, 16
        %v964 = vld [vmem:[%s963] sm:$0xff]
        %v965 = vld [vmem:[%s963 + $0x8] sm:$0xff]
        %s966 = scalar_lea.vmem %s673, 16
        %v967 = vld [vmem:[%s966] sm:$0xff]
        %v968 = vld [vmem:[%s966 + $0x8] sm:$0xff]
        %v969 = vmul.f32 %v964, %v947
        %v970 = vmul.f32 %v965, %v948
        %v971 = vadd.f32 %v851, %v969
        %v972 = vadd.f32 %v852, %v970
        %v973 = vmul.f32 %v967, %v955
        %v974 = vmul.f32 %v968, %v956
        %v975 = vadd.f32 %v971, %v973
        %v976 = vadd.f32 %v972, %v974
        %v977 = vmul.f32 %v967, %v947
        %v978 = vmul.f32 %v968, %v948
        %v979 = vadd.f32 %v859, %v977
        %v980 = vadd.f32 %v860, %v978
        %v981 = vmul.f32 %v964, %v955
        %v982 = vmul.f32 %v965, %v956
        %v983 = vsub.f32 %v979, %v981
        %v984 = vsub.f32 %v980, %v982
        %s985 = sld [smem:[#allocation2 + $0x8]]
        %s986 = sld [smem:[#allocation4 + $0x8]]
        %v987 = vld [vmem:[%s683] sm:$0xff]
        %v988 = vld [vmem:[%s683 + $0x8] sm:$0xff]
        %v989 = vld [vmem:[%s693] sm:$0xff]
        %v990 = vld [vmem:[%s693 + $0x8] sm:$0xff]
        %v991 = vstv %s985
        %v992 = vmul.f32 %v991, %v987
        %v993 = vmul.f32 %v991, %v988
        %v994 = vadd.f32 %v992, 0.0
        %v995 = vadd.f32 %v993, 0.0
        %v996 = vstv %s986
        %v997 = vmul.f32 %v996, %v989
        %v998 = vmul.f32 %v996, %v990
        %v999 = vsub.f32 %v994, %v997
        %v1000 = vsub.f32 %v995, %v998
        %v1001 = vmul.f32 %v991, %v989
        %v1002 = vmul.f32 %v991, %v990
        %v1003 = vadd.f32 %v1001, 0.0
        %v1004 = vadd.f32 %v1002, 0.0
        %v1005 = vmul.f32 %v996, %v987
        %v1006 = vmul.f32 %v996, %v988
        %v1007 = vadd.f32 %v1003, %v1005
        %v1008 = vadd.f32 %v1004, %v1006
        %s1009 = sld [smem:[#allocation2 + $0x9]]
        %s1010 = sld [smem:[#allocation4 + $0x9]]
        %v1011 = vld [vmem:[%s761] sm:$0xff]
        %v1012 = vld [vmem:[%s761 + $0x8] sm:$0xff]
        %v1013 = vld [vmem:[%s764] sm:$0xff]
        %v1014 = vld [vmem:[%s764 + $0x8] sm:$0xff]
        %v1015 = vstv %s1009
        %v1016 = vmul.f32 %v1015, %v1011
        %v1017 = vmul.f32 %v1015, %v1012
        %v1018 = vadd.f32 %v999, %v1016
        %v1019 = vadd.f32 %v1000, %v1017
        %v1020 = vstv %s1010
        %v1021 = vmul.f32 %v1020, %v1013
        %v1022 = vmul.f32 %v1020, %v1014
        %v1023 = vsub.f32 %v1018, %v1021
        %v1024 = vsub.f32 %v1019, %v1022
        %v1025 = vmul.f32 %v1015, %v1013
        %v1026 = vmul.f32 %v1015, %v1014
        %v1027 = vadd.f32 %v1007, %v1025
        %v1028 = vadd.f32 %v1008, %v1026
        %v1029 = vmul.f32 %v1020, %v1011
        %v1030 = vmul.f32 %v1020, %v1012
        %v1031 = vadd.f32 %v1027, %v1029
        %v1032 = vadd.f32 %v1028, %v1030
        %s1033 = sld [smem:[#allocation2 + $0xa]]
        %s1034 = sld [smem:[#allocation4 + $0xa]]
        %v1035 = vld [vmem:[%s787] sm:$0xff]
        %v1036 = vld [vmem:[%s787 + $0x8] sm:$0xff]
        %v1037 = vld [vmem:[%s790] sm:$0xff]
        %v1038 = vld [vmem:[%s790 + $0x8] sm:$0xff]
        %v1039 = vstv %s1033
        %v1040 = vmul.f32 %v1039, %v1035
        %v1041 = vmul.f32 %v1039, %v1036
        %v1042 = vadd.f32 %v1023, %v1040
        %v1043 = vadd.f32 %v1024, %v1041
        %v1044 = vstv %s1034
        %v1045 = vmul.f32 %v1044, %v1037
        %v1046 = vmul.f32 %v1044, %v1038
        %v1047 = vsub.f32 %v1042, %v1045
        %v1048 = vsub.f32 %v1043, %v1046
        %v1049 = vmul.f32 %v1039, %v1037
        %v1050 = vmul.f32 %v1039, %v1038
        %v1051 = vadd.f32 %v1031, %v1049
        %v1052 = vadd.f32 %v1032, %v1050
        %v1053 = vmul.f32 %v1044, %v1035
        %v1054 = vmul.f32 %v1044, %v1036
        %v1055 = vadd.f32 %v1051, %v1053
        %v1056 = vadd.f32 %v1052, %v1054
        %s1057 = sld [smem:[#allocation2 + $0xb]]
        %s1058 = sld [smem:[#allocation4 + $0xb]]
        %v1059 = vld [vmem:[%s813] sm:$0xff]
        %v1060 = vld [vmem:[%s813 + $0x8] sm:$0xff]
        %v1061 = vld [vmem:[%s816] sm:$0xff]
        %v1062 = vld [vmem:[%s816 + $0x8] sm:$0xff]
        %v1063 = vstv %s1057
        %v1064 = vmul.f32 %v1063, %v1059
        %v1065 = vmul.f32 %v1063, %v1060
        %v1066 = vadd.f32 %v1047, %v1064
        %v1067 = vadd.f32 %v1048, %v1065
        %v1068 = vstv %s1058
        %v1069 = vmul.f32 %v1068, %v1061
        %v1070 = vmul.f32 %v1068, %v1062
        %v1071 = vsub.f32 %v1066, %v1069
        %v1072 = vsub.f32 %v1067, %v1070
        %v1073 = vmul.f32 %v1063, %v1061
        %v1074 = vmul.f32 %v1063, %v1062
        %v1075 = vadd.f32 %v1055, %v1073
        %v1076 = vadd.f32 %v1056, %v1074
        %v1077 = vmul.f32 %v1068, %v1059
        %v1078 = vmul.f32 %v1068, %v1060
        %v1079 = vadd.f32 %v1075, %v1077
        %v1080 = vadd.f32 %v1076, %v1078
        %s1081 = scalar_lea.vmem %s703, 32
        %1082 = vst [vmem:[%s1081] sm:$0xff] %v1071
        %1083 = vst [vmem:[%s1081 + $0x8] sm:$0xff] %v1072
        %s1084 = scalar_lea.vmem %s713, 32
        %1085 = vst [vmem:[%s1084] sm:$0xff] %v1079
        %1086 = vst [vmem:[%s1084 + $0x8] sm:$0xff] %v1080
        %s1087 = scalar_lea.vmem %s663, 32
        %v1088 = vld [vmem:[%s1087] sm:$0xff]
        %v1089 = vld [vmem:[%s1087 + $0x8] sm:$0xff]
        %s1090 = scalar_lea.vmem %s673, 32
        %v1091 = vld [vmem:[%s1090] sm:$0xff]
        %v1092 = vld [vmem:[%s1090 + $0x8] sm:$0xff]
        %v1093 = vmul.f32 %v1088, %v1071
        %v1094 = vmul.f32 %v1089, %v1072
        %v1095 = vadd.f32 %v975, %v1093
        %v1096 = vadd.f32 %v976, %v1094
        %v1097 = vmul.f32 %v1091, %v1079
        %v1098 = vmul.f32 %v1092, %v1080
        %v1099 = vadd.f32 %v1095, %v1097
        %v1100 = vadd.f32 %v1096, %v1098
        %v1101 = vmul.f32 %v1091, %v1071
        %v1102 = vmul.f32 %v1092, %v1072
        %v1103 = vadd.f32 %v983, %v1101
        %v1104 = vadd.f32 %v984, %v1102
        %v1105 = vmul.f32 %v1088, %v1079
        %v1106 = vmul.f32 %v1089, %v1080
        %v1107 = vsub.f32 %v1103, %v1105
        %v1108 = vsub.f32 %v1104, %v1106
        %s1109 = sld [smem:[#allocation2 + $0xc]]
        %s1110 = sld [smem:[#allocation4 + $0xc]]
        %v1111 = vld [vmem:[%s683] sm:$0xff]
        %v1112 = vld [vmem:[%s683 + $0x8] sm:$0xff]
        %v1113 = vld [vmem:[%s693] sm:$0xff]
        %v1114 = vld [vmem:[%s693 + $0x8] sm:$0xff]
        %v1115 = vstv %s1109
        %v1116 = vmul.f32 %v1115, %v1111
        %v1117 = vmul.f32 %v1115, %v1112
        %v1118 = vadd.f32 %v1116, 0.0
        %v1119 = vadd.f32 %v1117, 0.0
        %v1120 = vstv %s1110
        %v1121 = vmul.f32 %v1120, %v1113
        %v1122 = vmul.f32 %v1120, %v1114
        %v1123 = vsub.f32 %v1118, %v1121
        %v1124 = vsub.f32 %v1119, %v1122
        %v1125 = vmul.f32 %v1115, %v1113
        %v1126 = vmul.f32 %v1115, %v1114
        %v1127 = vadd.f32 %v1125, 0.0
        %v1128 = vadd.f32 %v1126, 0.0
        %v1129 = vmul.f32 %v1120, %v1111
        %v1130 = vmul.f32 %v1120, %v1112
        %v1131 = vadd.f32 %v1127, %v1129
        %v1132 = vadd.f32 %v1128, %v1130
        %s1133 = sld [smem:[#allocation2 + $0xd]]
        %s1134 = sld [smem:[#allocation4 + $0xd]]
        %v1135 = vld [vmem:[%s761] sm:$0xff]
        %v1136 = vld [vmem:[%s761 + $0x8] sm:$0xff]
        %v1137 = vld [vmem:[%s764] sm:$0xff]
        %v1138 = vld [vmem:[%s764 + $0x8] sm:$0xff]
        %v1139 = vstv %s1133
        %v1140 = vmul.f32 %v1139, %v1135
        %v1141 = vmul.f32 %v1139, %v1136
        %v1142 = vadd.f32 %v1123, %v1140
        %v1143 = vadd.f32 %v1124, %v1141
        %v1144 = vstv %s1134
        %v1145 = vmul.f32 %v1144, %v1137
        %v1146 = vmul.f32 %v1144, %v1138
        %v1147 = vsub.f32 %v1142, %v1145
        %v1148 = vsub.f32 %v1143, %v1146
        %v1149 = vmul.f32 %v1139, %v1137
        %v1150 = vmul.f32 %v1139, %v1138
        %v1151 = vadd.f32 %v1131, %v1149
        %v1152 = vadd.f32 %v1132, %v1150
        %v1153 = vmul.f32 %v1144, %v1135
        %v1154 = vmul.f32 %v1144, %v1136
        %v1155 = vadd.f32 %v1151, %v1153
        %v1156 = vadd.f32 %v1152, %v1154
        %s1157 = sld [smem:[#allocation2 + $0xe]]
        %s1158 = sld [smem:[#allocation4 + $0xe]]
        %v1159 = vld [vmem:[%s787] sm:$0xff]
        %v1160 = vld [vmem:[%s787 + $0x8] sm:$0xff]
        %v1161 = vld [vmem:[%s790] sm:$0xff]
        %v1162 = vld [vmem:[%s790 + $0x8] sm:$0xff]
        %v1163 = vstv %s1157
        %v1164 = vmul.f32 %v1163, %v1159
        %v1165 = vmul.f32 %v1163, %v1160
        %v1166 = vadd.f32 %v1147, %v1164
        %v1167 = vadd.f32 %v1148, %v1165
        %v1168 = vstv %s1158
        %v1169 = vmul.f32 %v1168, %v1161
        %v1170 = vmul.f32 %v1168, %v1162
        %v1171 = vsub.f32 %v1166, %v1169
        %v1172 = vsub.f32 %v1167, %v1170
        %v1173 = vmul.f32 %v1163, %v1161
        %v1174 = vmul.f32 %v1163, %v1162
        %v1175 = vadd.f32 %v1155, %v1173
        %v1176 = vadd.f32 %v1156, %v1174
        %v1177 = vmul.f32 %v1168, %v1159
        %v1178 = vmul.f32 %v1168, %v1160
        %v1179 = vadd.f32 %v1175, %v1177
        %v1180 = vadd.f32 %v1176, %v1178
        %s1181 = sld [smem:[#allocation2 + $0xf]]
        %s1182 = sld [smem:[#allocation4 + $0xf]]
        %v1183 = vld [vmem:[%s813] sm:$0xff]
        %v1184 = vld [vmem:[%s813 + $0x8] sm:$0xff]
        %v1185 = vld [vmem:[%s816] sm:$0xff]
        %v1186 = vld [vmem:[%s816 + $0x8] sm:$0xff]
        %v1187 = vstv %s1181
        %v1188 = vmul.f32 %v1187, %v1183
        %v1189 = vmul.f32 %v1187, %v1184
        %v1190 = vadd.f32 %v1171, %v1188
        %v1191 = vadd.f32 %v1172, %v1189
        %v1192 = vstv %s1182
        %v1193 = vmul.f32 %v1192, %v1185
        %v1194 = vmul.f32 %v1192, %v1186
        %v1195 = vsub.f32 %v1190, %v1193
        %v1196 = vsub.f32 %v1191, %v1194
        %v1197 = vmul.f32 %v1187, %v1185
        %v1198 = vmul.f32 %v1187, %v1186
        %v1199 = vadd.f32 %v1179, %v1197
        %v1200 = vadd.f32 %v1180, %v1198
        %v1201 = vmul.f32 %v1192, %v1183
        %v1202 = vmul.f32 %v1192, %v1184
        %v1203 = vadd.f32 %v1199, %v1201
        %v1204 = vadd.f32 %v1200, %v1202
        %s1205 = scalar_lea.vmem %s703, 48
        %1206 = vst [vmem:[%s1205] sm:$0xff] %v1195
        %1207 = vst [vmem:[%s1205 + $0x8] sm:$0xff] %v1196
        %s1208 = scalar_lea.vmem %s713, 48
        %1209 = vst [vmem:[%s1208] sm:$0xff] %v1203
        %1210 = vst [vmem:[%s1208 + $0x8] sm:$0xff] %v1204
        %s1211 = scalar_lea.vmem %s663, 48
        %v1212 = vld [vmem:[%s1211] sm:$0xff]
        %v1213 = vld [vmem:[%s1211 + $0x8] sm:$0xff]
        %s1214 = scalar_lea.vmem %s673, 48
        %v1215 = vld [vmem:[%s1214] sm:$0xff]
        %v1216 = vld [vmem:[%s1214 + $0x8] sm:$0xff]
        %v1217 = vmul.f32 %v1212, %v1195
        %v1218 = vmul.f32 %v1213, %v1196
        %v1219 = vadd.f32 %v1099, %v1217
        %v1220 = vadd.f32 %v1100, %v1218
        %v1221 = vmul.f32 %v1215, %v1203
        %v1222 = vmul.f32 %v1216, %v1204
        %v1223 = vadd.f32 %v1219, %v1221
        %v1224 = vadd.f32 %v1220, %v1222
        %v1225 = vmul.f32 %v1215, %v1195
        %v1226 = vmul.f32 %v1216, %v1196
        %v1227 = vadd.f32 %v1107, %v1225
        %v1228 = vadd.f32 %v1108, %v1226
        %v1229 = vmul.f32 %v1212, %v1203
        %v1230 = vmul.f32 %v1213, %v1204
        %v1231 = vsub.f32 %v1227, %v1229
        %v1232 = vsub.f32 %v1228, %v1230
        %s1233 = sld [smem:[#allocation6]]
        %v1234 = vstv %s1233
        %v1235 = vmul.f32 %v1234, %v1223
        %v1236 = vmul.f32 %v1234, %v1224
        %s1237 = sld [smem:[#allocation6 + $0x1]]
        %v1238 = vstv %s1237
        %v1239 = vmul.f32 %v1238, %v1231
        %v1240 = vmul.f32 %v1238, %v1232
        %v1241 = vadd.f32 %v1235, %v1239
        %v1242 = vadd.f32 %v1236, %v1240
        %s1243 = sld [smem:[#allocation7]]
        %v1244 = vstv %s1243
        %v1245 = vadd.f32 %v1241, %v1244
        %v1246 = vadd.f32 %v1242, %v1244
        %v1247 = vmax.f32 %v1245, 0.0
        %v1248 = vmax.f32 %v1246, 0.0
        %s1249 = sld [smem:[#allocation9]]
        %v1250 = vstv %s1249
        %v1251 = vmul.f32 %v1250, %v1247
        %v1252 = vmul.f32 %v1250, %v1248
        %v1253 = vadd.f32 %v1251, 0.0
        %v1254 = vadd.f32 %v1252, 0.0
        %s1255 = sld [smem:[#allocation9 + $0x20]]
        %v1256 = vstv %s1255
        %v1257 = vmul.f32 %v1256, %v1247
        %v1258 = vmul.f32 %v1256, %v1248
        %v1259 = vadd.f32 %v1257, 0.0
        %v1260 = vadd.f32 %v1258, 0.0
        %s1261 = sld [smem:[#allocation6 + $0x2]]
        %v1262 = vstv %s1261
        %v1263 = vmul.f32 %v1262, %v1223
        %v1264 = vmul.f32 %v1262, %v1224
        %s1265 = sld [smem:[#allocation6 + $0x3]]
        %v1266 = vstv %s1265
        %v1267 = vmul.f32 %v1266, %v1231
        %v1268 = vmul.f32 %v1266, %v1232
        %v1269 = vadd.f32 %v1263, %v1267
        %v1270 = vadd.f32 %v1264, %v1268
        %s1271 = sld [smem:[#allocation7 + $0x1]]
        %v1272 = vstv %s1271
        %v1273 = vadd.f32 %v1269, %v1272
        %v1274 = vadd.f32 %v1270, %v1272
        %v1275 = vmax.f32 %v1273, 0.0
        %v1276 = vmax.f32 %v1274, 0.0
        %s1277 = sld [smem:[#allocation9 + $0x1]]
        %v1278 = vstv %s1277
        %v1279 = vmul.f32 %v1278, %v1275
        %v1280 = vmul.f32 %v1278, %v1276
        %v1281 = vadd.f32 %v1253, %v1279
        %v1282 = vadd.f32 %v1254, %v1280
        %s1283 = sld [smem:[#allocation9 + $0x21]]
        %v1284 = vstv %s1283
        %v1285 = vmul.f32 %v1284, %v1275
        %v1286 = vmul.f32 %v1284, %v1276
        %v1287 = vadd.f32 %v1259, %v1285
        %v1288 = vadd.f32 %v1260, %v1286
        %s1289 = sld [smem:[#allocation6 + $0x4]]
        %v1290 = vstv %s1289
        %v1291 = vmul.f32 %v1290, %v1223
        %v1292 = vmul.f32 %v1290, %v1224
        %s1293 = sld [smem:[#allocation6 + $0x5]]
        %v1294 = vstv %s1293
        %v1295 = vmul.f32 %v1294, %v1231
        %v1296 = vmul.f32 %v1294, %v1232
        %v1297 = vadd.f32 %v1291, %v1295
        %v1298 = vadd.f32 %v1292, %v1296
        %s1299 = sld [smem:[#allocation7 + $0x2]]
        %v1300 = vstv %s1299
        %v1301 = vadd.f32 %v1297, %v1300
        %v1302 = vadd.f32 %v1298, %v1300
        %v1303 = vmax.f32 %v1301, 0.0
        %v1304 = vmax.f32 %v1302, 0.0
        %s1305 = sld [smem:[#allocation9 + $0x2]]
        %v1306 = vstv %s1305
        %v1307 = vmul.f32 %v1306, %v1303
        %v1308 = vmul.f32 %v1306, %v1304
        %v1309 = vadd.f32 %v1281, %v1307
        %v1310 = vadd.f32 %v1282, %v1308
        %s1311 = sld [smem:[#allocation9 + $0x22]]
        %v1312 = vstv %s1311
        %v1313 = vmul.f32 %v1312, %v1303
        %v1314 = vmul.f32 %v1312, %v1304
        %v1315 = vadd.f32 %v1287, %v1313
        %v1316 = vadd.f32 %v1288, %v1314
        %s1317 = sld [smem:[#allocation6 + $0x6]]
        %v1318 = vstv %s1317
        %v1319 = vmul.f32 %v1318, %v1223
        %v1320 = vmul.f32 %v1318, %v1224
        %s1321 = sld [smem:[#allocation6 + $0x7]]
        %v1322 = vstv %s1321
        %v1323 = vmul.f32 %v1322, %v1231
        %v1324 = vmul.f32 %v1322, %v1232
        %v1325 = vadd.f32 %v1319, %v1323
        %v1326 = vadd.f32 %v1320, %v1324
        %s1327 = sld [smem:[#allocation7 + $0x3]]
        %v1328 = vstv %s1327
        %v1329 = vadd.f32 %v1325, %v1328
        %v1330 = vadd.f32 %v1326, %v1328
        %v1331 = vmax.f32 %v1329, 0.0
        %v1332 = vmax.f32 %v1330, 0.0
        %s1333 = sld [smem:[#allocation9 + $0x3]]
        %v1334 = vstv %s1333
        %v1335 = vmul.f32 %v1334, %v1331
        %v1336 = vmul.f32 %v1334, %v1332
        %v1337 = vadd.f32 %v1309, %v1335
        %v1338 = vadd.f32 %v1310, %v1336
        %s1339 = sld [smem:[#allocation9 + $0x23]]
        %v1340 = vstv %s1339
        %v1341 = vmul.f32 %v1340, %v1331
        %v1342 = vmul.f32 %v1340, %v1332
        %v1343 = vadd.f32 %v1315, %v1341
        %v1344 = vadd.f32 %v1316, %v1342
        %s1345 = sld [smem:[#allocation6 + $0x8]]
        %v1346 = vstv %s1345
        %v1347 = vmul.f32 %v1346, %v1223
        %v1348 = vmul.f32 %v1346, %v1224
        %s1349 = sld [smem:[#allocation6 + $0x9]]
        %v1350 = vstv %s1349
        %v1351 = vmul.f32 %v1350, %v1231
        %v1352 = vmul.f32 %v1350, %v1232
        %v1353 = vadd.f32 %v1347, %v1351
        %v1354 = vadd.f32 %v1348, %v1352
        %s1355 = sld [smem:[#allocation7 + $0x4]]
        %v1356 = vstv %s1355
        %v1357 = vadd.f32 %v1353, %v1356
        %v1358 = vadd.f32 %v1354, %v1356
        %v1359 = vmax.f32 %v1357, 0.0
        %v1360 = vmax.f32 %v1358, 0.0
        %s1361 = sld [smem:[#allocation9 + $0x4]]
        %v1362 = vstv %s1361
        %v1363 = vmul.f32 %v1362, %v1359
        %v1364 = vmul.f32 %v1362, %v1360
        %v1365 = vadd.f32 %v1337, %v1363
        %v1366 = vadd.f32 %v1338, %v1364
        %s1367 = sld [smem:[#allocation9 + $0x24]]
        %v1368 = vstv %s1367
        %v1369 = vmul.f32 %v1368, %v1359
        %v1370 = vmul.f32 %v1368, %v1360
        %v1371 = vadd.f32 %v1343, %v1369
        %v1372 = vadd.f32 %v1344, %v1370
        %s1373 = sld [smem:[#allocation6 + $0xa]]
        %v1374 = vstv %s1373
        %v1375 = vmul.f32 %v1374, %v1223
        %v1376 = vmul.f32 %v1374, %v1224
        %s1377 = sld [smem:[#allocation6 + $0xb]]
        %v1378 = vstv %s1377
        %v1379 = vmul.f32 %v1378, %v1231
        %v1380 = vmul.f32 %v1378, %v1232
        %v1381 = vadd.f32 %v1375, %v1379
        %v1382 = vadd.f32 %v1376, %v1380
        %s1383 = sld [smem:[#allocation7 + $0x5]]
        %v1384 = vstv %s1383
        %v1385 = vadd.f32 %v1381, %v1384
        %v1386 = vadd.f32 %v1382, %v1384
        %v1387 = vmax.f32 %v1385, 0.0
        %v1388 = vmax.f32 %v1386, 0.0
        %s1389 = sld [smem:[#allocation9 + $0x5]]
        %v1390 = vstv %s1389
        %v1391 = vmul.f32 %v1390, %v1387
        %v1392 = vmul.f32 %v1390, %v1388
        %v1393 = vadd.f32 %v1365, %v1391
        %v1394 = vadd.f32 %v1366, %v1392
        %s1395 = sld [smem:[#allocation9 + $0x25]]
        %v1396 = vstv %s1395
        %v1397 = vmul.f32 %v1396, %v1387
        %v1398 = vmul.f32 %v1396, %v1388
        %v1399 = vadd.f32 %v1371, %v1397
        %v1400 = vadd.f32 %v1372, %v1398
        %s1401 = sld [smem:[#allocation6 + $0xc]]
        %v1402 = vstv %s1401
        %v1403 = vmul.f32 %v1402, %v1223
        %v1404 = vmul.f32 %v1402, %v1224
        %s1405 = sld [smem:[#allocation6 + $0xd]]
        %v1406 = vstv %s1405
        %v1407 = vmul.f32 %v1406, %v1231
        %v1408 = vmul.f32 %v1406, %v1232
        %v1409 = vadd.f32 %v1403, %v1407
        %v1410 = vadd.f32 %v1404, %v1408
        %s1411 = sld [smem:[#allocation7 + $0x6]]
        %v1412 = vstv %s1411
        %v1413 = vadd.f32 %v1409, %v1412
        %v1414 = vadd.f32 %v1410, %v1412
        %v1415 = vmax.f32 %v1413, 0.0
        %v1416 = vmax.f32 %v1414, 0.0
        %s1417 = sld [smem:[#allocation9 + $0x6]]
        %v1418 = vstv %s1417
        %v1419 = vmul.f32 %v1418, %v1415
        %v1420 = vmul.f32 %v1418, %v1416
        %v1421 = vadd.f32 %v1393, %v1419
        %v1422 = vadd.f32 %v1394, %v1420
        %s1423 = sld [smem:[#allocation9 + $0x26]]
        %v1424 = vstv %s1423
        %v1425 = vmul.f32 %v1424, %v1415
        %v1426 = vmul.f32 %v1424, %v1416
        %v1427 = vadd.f32 %v1399, %v1425
        %v1428 = vadd.f32 %v1400, %v1426
        %s1429 = sld [smem:[#allocation6 + $0xe]]
        %v1430 = vstv %s1429
        %v1431 = vmul.f32 %v1430, %v1223
        %v1432 = vmul.f32 %v1430, %v1224
        %s1433 = sld [smem:[#allocation6 + $0xf]]
        %v1434 = vstv %s1433
        %v1435 = vmul.f32 %v1434, %v1231
        %v1436 = vmul.f32 %v1434, %v1232
        %v1437 = vadd.f32 %v1431, %v1435
        %v1438 = vadd.f32 %v1432, %v1436
        %s1439 = sld [smem:[#allocation7 + $0x7]]
        %v1440 = vstv %s1439
        %v1441 = vadd.f32 %v1437, %v1440
        %v1442 = vadd.f32 %v1438, %v1440
        %v1443 = vmax.f32 %v1441, 0.0
        %v1444 = vmax.f32 %v1442, 0.0
        %s1445 = sld [smem:[#allocation9 + $0x7]]
        %v1446 = vstv %s1445
        %v1447 = vmul.f32 %v1446, %v1443
        %v1448 = vmul.f32 %v1446, %v1444
        %v1449 = vadd.f32 %v1421, %v1447
        %v1450 = vadd.f32 %v1422, %v1448
        %s1451 = sld [smem:[#allocation9 + $0x27]]
        %v1452 = vstv %s1451
        %v1453 = vmul.f32 %v1452, %v1443
        %v1454 = vmul.f32 %v1452, %v1444
        %v1455 = vadd.f32 %v1427, %v1453
        %v1456 = vadd.f32 %v1428, %v1454
        %s1457 = sld [smem:[#allocation6 + $0x10]]
        %v1458 = vstv %s1457
        %v1459 = vmul.f32 %v1458, %v1223
        %v1460 = vmul.f32 %v1458, %v1224
        %s1461 = sld [smem:[#allocation6 + $0x11]]
        %v1462 = vstv %s1461
        %v1463 = vmul.f32 %v1462, %v1231
        %v1464 = vmul.f32 %v1462, %v1232
        %v1465 = vadd.f32 %v1459, %v1463
        %v1466 = vadd.f32 %v1460, %v1464
        %s1467 = sld [smem:[#allocation7 + $0x8]]
        %v1468 = vstv %s1467
        %v1469 = vadd.f32 %v1465, %v1468
        %v1470 = vadd.f32 %v1466, %v1468
        %v1471 = vmax.f32 %v1469, 0.0
        %v1472 = vmax.f32 %v1470, 0.0
        %s1473 = sld [smem:[#allocation9 + $0x8]]
        %v1474 = vstv %s1473
        %v1475 = vmul.f32 %v1474, %v1471
        %v1476 = vmul.f32 %v1474, %v1472
        %v1477 = vadd.f32 %v1449, %v1475
        %v1478 = vadd.f32 %v1450, %v1476
        %s1479 = sld [smem:[#allocation9 + $0x28]]
        %v1480 = vstv %s1479
        %v1481 = vmul.f32 %v1480, %v1471
        %v1482 = vmul.f32 %v1480, %v1472
        %v1483 = vadd.f32 %v1455, %v1481
        %v1484 = vadd.f32 %v1456, %v1482
        %s1485 = sld [smem:[#allocation6 + $0x12]]
        %v1486 = vstv %s1485
        %v1487 = vmul.f32 %v1486, %v1223
        %v1488 = vmul.f32 %v1486, %v1224
        %s1489 = sld [smem:[#allocation6 + $0x13]]
        %v1490 = vstv %s1489
        %v1491 = vmul.f32 %v1490, %v1231
        %v1492 = vmul.f32 %v1490, %v1232
        %v1493 = vadd.f32 %v1487, %v1491
        %v1494 = vadd.f32 %v1488, %v1492
        %s1495 = sld [smem:[#allocation7 + $0x9]]
        %v1496 = vstv %s1495
        %v1497 = vadd.f32 %v1493, %v1496
        %v1498 = vadd.f32 %v1494, %v1496
        %v1499 = vmax.f32 %v1497, 0.0
        %v1500 = vmax.f32 %v1498, 0.0
        %s1501 = sld [smem:[#allocation9 + $0x9]]
        %v1502 = vstv %s1501
        %v1503 = vmul.f32 %v1502, %v1499
        %v1504 = vmul.f32 %v1502, %v1500
        %v1505 = vadd.f32 %v1477, %v1503
        %v1506 = vadd.f32 %v1478, %v1504
        %s1507 = sld [smem:[#allocation9 + $0x29]]
        %v1508 = vstv %s1507
        %v1509 = vmul.f32 %v1508, %v1499
        %v1510 = vmul.f32 %v1508, %v1500
        %v1511 = vadd.f32 %v1483, %v1509
        %v1512 = vadd.f32 %v1484, %v1510
        %s1513 = sld [smem:[#allocation6 + $0x14]]
        %v1514 = vstv %s1513
        %v1515 = vmul.f32 %v1514, %v1223
        %v1516 = vmul.f32 %v1514, %v1224
        %s1517 = sld [smem:[#allocation6 + $0x15]]
        %v1518 = vstv %s1517
        %v1519 = vmul.f32 %v1518, %v1231
        %v1520 = vmul.f32 %v1518, %v1232
        %v1521 = vadd.f32 %v1515, %v1519
        %v1522 = vadd.f32 %v1516, %v1520
        %s1523 = sld [smem:[#allocation7 + $0xa]]
        %v1524 = vstv %s1523
        %v1525 = vadd.f32 %v1521, %v1524
        %v1526 = vadd.f32 %v1522, %v1524
        %v1527 = vmax.f32 %v1525, 0.0
        %v1528 = vmax.f32 %v1526, 0.0
        %s1529 = sld [smem:[#allocation9 + $0xa]]
        %v1530 = vstv %s1529
        %v1531 = vmul.f32 %v1530, %v1527
        %v1532 = vmul.f32 %v1530, %v1528
        %v1533 = vadd.f32 %v1505, %v1531
        %v1534 = vadd.f32 %v1506, %v1532
        %s1535 = sld [smem:[#allocation9 + $0x2a]]
        %v1536 = vstv %s1535
        %v1537 = vmul.f32 %v1536, %v1527
        %v1538 = vmul.f32 %v1536, %v1528
        %v1539 = vadd.f32 %v1511, %v1537
        %v1540 = vadd.f32 %v1512, %v1538
        %s1541 = sld [smem:[#allocation6 + $0x16]]
        %v1542 = vstv %s1541
        %v1543 = vmul.f32 %v1542, %v1223
        %v1544 = vmul.f32 %v1542, %v1224
        %s1545 = sld [smem:[#allocation6 + $0x17]]
        %v1546 = vstv %s1545
        %v1547 = vmul.f32 %v1546, %v1231
        %v1548 = vmul.f32 %v1546, %v1232
        %v1549 = vadd.f32 %v1543, %v1547
        %v1550 = vadd.f32 %v1544, %v1548
        %s1551 = sld [smem:[#allocation7 + $0xb]]
        %v1552 = vstv %s1551
        %v1553 = vadd.f32 %v1549, %v1552
        %v1554 = vadd.f32 %v1550, %v1552
        %v1555 = vmax.f32 %v1553, 0.0
        %v1556 = vmax.f32 %v1554, 0.0
        %s1557 = sld [smem:[#allocation9 + $0xb]]
        %v1558 = vstv %s1557
        %v1559 = vmul.f32 %v1558, %v1555
        %v1560 = vmul.f32 %v1558, %v1556
        %v1561 = vadd.f32 %v1533, %v1559
        %v1562 = vadd.f32 %v1534, %v1560
        %s1563 = sld [smem:[#allocation9 + $0x2b]]
        %v1564 = vstv %s1563
        %v1565 = vmul.f32 %v1564, %v1555
        %v1566 = vmul.f32 %v1564, %v1556
        %v1567 = vadd.f32 %v1539, %v1565
        %v1568 = vadd.f32 %v1540, %v1566
        %s1569 = sld [smem:[#allocation6 + $0x18]]
        %v1570 = vstv %s1569
        %v1571 = vmul.f32 %v1570, %v1223
        %v1572 = vmul.f32 %v1570, %v1224
        %s1573 = sld [smem:[#allocation6 + $0x19]]
        %v1574 = vstv %s1573
        %v1575 = vmul.f32 %v1574, %v1231
        %v1576 = vmul.f32 %v1574, %v1232
        %v1577 = vadd.f32 %v1571, %v1575
        %v1578 = vadd.f32 %v1572, %v1576
        %s1579 = sld [smem:[#allocation7 + $0xc]]
        %v1580 = vstv %s1579
        %v1581 = vadd.f32 %v1577, %v1580
        %v1582 = vadd.f32 %v1578, %v1580
        %v1583 = vmax.f32 %v1581, 0.0
        %v1584 = vmax.f32 %v1582, 0.0
        %s1585 = sld [smem:[#allocation9 + $0xc]]
        %v1586 = vstv %s1585
        %v1587 = vmul.f32 %v1586, %v1583
        %v1588 = vmul.f32 %v1586, %v1584
        %v1589 = vadd.f32 %v1561, %v1587
        %v1590 = vadd.f32 %v1562, %v1588
        %s1591 = sld [smem:[#allocation9 + $0x2c]]
        %v1592 = vstv %s1591
        %v1593 = vmul.f32 %v1592, %v1583
        %v1594 = vmul.f32 %v1592, %v1584
        %v1595 = vadd.f32 %v1567, %v1593
        %v1596 = vadd.f32 %v1568, %v1594
        %s1597 = sld [smem:[#allocation6 + $0x1a]]
        %v1598 = vstv %s1597
        %v1599 = vmul.f32 %v1598, %v1223
        %v1600 = vmul.f32 %v1598, %v1224
        %s1601 = sld [smem:[#allocation6 + $0x1b]]
        %v1602 = vstv %s1601
        %v1603 = vmul.f32 %v1602, %v1231
        %v1604 = vmul.f32 %v1602, %v1232
        %v1605 = vadd.f32 %v1599, %v1603
        %v1606 = vadd.f32 %v1600, %v1604
        %s1607 = sld [smem:[#allocation7 + $0xd]]
        %v1608 = vstv %s1607
        %v1609 = vadd.f32 %v1605, %v1608
        %v1610 = vadd.f32 %v1606, %v1608
        %v1611 = vmax.f32 %v1609, 0.0
        %v1612 = vmax.f32 %v1610, 0.0
        %s1613 = sld [smem:[#allocation9 + $0xd]]
        %v1614 = vstv %s1613
        %v1615 = vmul.f32 %v1614, %v1611
        %v1616 = vmul.f32 %v1614, %v1612
        %v1617 = vadd.f32 %v1589, %v1615
        %v1618 = vadd.f32 %v1590, %v1616
        %s1619 = sld [smem:[#allocation9 + $0x2d]]
        %v1620 = vstv %s1619
        %v1621 = vmul.f32 %v1620, %v1611
        %v1622 = vmul.f32 %v1620, %v1612
        %v1623 = vadd.f32 %v1595, %v1621
        %v1624 = vadd.f32 %v1596, %v1622
        %s1625 = sld [smem:[#allocation6 + $0x1c]]
        %v1626 = vstv %s1625
        %v1627 = vmul.f32 %v1626, %v1223
        %v1628 = vmul.f32 %v1626, %v1224
        %s1629 = sld [smem:[#allocation6 + $0x1d]]
        %v1630 = vstv %s1629
        %v1631 = vmul.f32 %v1630, %v1231
        %v1632 = vmul.f32 %v1630, %v1232
        %v1633 = vadd.f32 %v1627, %v1631
        %v1634 = vadd.f32 %v1628, %v1632
        %s1635 = sld [smem:[#allocation7 + $0xe]]
        %v1636 = vstv %s1635
        %v1637 = vadd.f32 %v1633, %v1636
        %v1638 = vadd.f32 %v1634, %v1636
        %v1639 = vmax.f32 %v1637, 0.0
        %v1640 = vmax.f32 %v1638, 0.0
        %s1641 = sld [smem:[#allocation9 + $0xe]]
        %v1642 = vstv %s1641
        %v1643 = vmul.f32 %v1642, %v1639
        %v1644 = vmul.f32 %v1642, %v1640
        %v1645 = vadd.f32 %v1617, %v1643
        %v1646 = vadd.f32 %v1618, %v1644
        %s1647 = sld [smem:[#allocation9 + $0x2e]]
        %v1648 = vstv %s1647
        %v1649 = vmul.f32 %v1648, %v1639
        %v1650 = vmul.f32 %v1648, %v1640
        %v1651 = vadd.f32 %v1623, %v1649
        %v1652 = vadd.f32 %v1624, %v1650
        %s1653 = sld [smem:[#allocation6 + $0x1e]]
        %v1654 = vstv %s1653
        %v1655 = vmul.f32 %v1654, %v1223
        %v1656 = vmul.f32 %v1654, %v1224
        %s1657 = sld [smem:[#allocation6 + $0x1f]]
        %v1658 = vstv %s1657
        %v1659 = vmul.f32 %v1658, %v1231
        %v1660 = vmul.f32 %v1658, %v1232
        %v1661 = vadd.f32 %v1655, %v1659
        %v1662 = vadd.f32 %v1656, %v1660
        %s1663 = sld [smem:[#allocation7 + $0xf]]
        %v1664 = vstv %s1663
        %v1665 = vadd.f32 %v1661, %v1664
        %v1666 = vadd.f32 %v1662, %v1664
        %v1667 = vmax.f32 %v1665, 0.0
        %v1668 = vmax.f32 %v1666, 0.0
        %s1669 = sld [smem:[#allocation9 + $0xf]]
        %v1670 = vstv %s1669
        %v1671 = vmul.f32 %v1670, %v1667
        %v1672 = vmul.f32 %v1670, %v1668
        %v1673 = vadd.f32 %v1645, %v1671
        %v1674 = vadd.f32 %v1646, %v1672
        %s1675 = sld [smem:[#allocation9 + $0x2f]]
        %v1676 = vstv %s1675
        %v1677 = vmul.f32 %v1676, %v1667
        %v1678 = vmul.f32 %v1676, %v1668
        %v1679 = vadd.f32 %v1651, %v1677
        %v1680 = vadd.f32 %v1652, %v1678
        %s1681 = sld [smem:[#allocation6 + $0x20]]
        %v1682 = vstv %s1681
        %v1683 = vmul.f32 %v1682, %v1223
        %v1684 = vmul.f32 %v1682, %v1224
        %s1685 = sld [smem:[#allocation6 + $0x21]]
        %v1686 = vstv %s1685
        %v1687 = vmul.f32 %v1686, %v1231
        %v1688 = vmul.f32 %v1686, %v1232
        %v1689 = vadd.f32 %v1683, %v1687
        %v1690 = vadd.f32 %v1684, %v1688
        %s1691 = sld [smem:[#allocation7 + $0x10]]
        %v1692 = vstv %s1691
        %v1693 = vadd.f32 %v1689, %v1692
        %v1694 = vadd.f32 %v1690, %v1692
        %v1695 = vmax.f32 %v1693, 0.0
        %v1696 = vmax.f32 %v1694, 0.0
        %s1697 = sld [smem:[#allocation9 + $0x10]]
        %v1698 = vstv %s1697
        %v1699 = vmul.f32 %v1698, %v1695
        %v1700 = vmul.f32 %v1698, %v1696
        %v1701 = vadd.f32 %v1673, %v1699
        %v1702 = vadd.f32 %v1674, %v1700
        %s1703 = sld [smem:[#allocation9 + $0x30]]
        %v1704 = vstv %s1703
        %v1705 = vmul.f32 %v1704, %v1695
        %v1706 = vmul.f32 %v1704, %v1696
        %v1707 = vadd.f32 %v1679, %v1705
        %v1708 = vadd.f32 %v1680, %v1706
        %s1709 = sld [smem:[#allocation6 + $0x22]]
        %v1710 = vstv %s1709
        %v1711 = vmul.f32 %v1710, %v1223
        %v1712 = vmul.f32 %v1710, %v1224
        %s1713 = sld [smem:[#allocation6 + $0x23]]
        %v1714 = vstv %s1713
        %v1715 = vmul.f32 %v1714, %v1231
        %v1716 = vmul.f32 %v1714, %v1232
        %v1717 = vadd.f32 %v1711, %v1715
        %v1718 = vadd.f32 %v1712, %v1716
        %s1719 = sld [smem:[#allocation7 + $0x11]]
        %v1720 = vstv %s1719
        %v1721 = vadd.f32 %v1717, %v1720
        %v1722 = vadd.f32 %v1718, %v1720
        %v1723 = vmax.f32 %v1721, 0.0
        %v1724 = vmax.f32 %v1722, 0.0
        %s1725 = sld [smem:[#allocation9 + $0x11]]
        %v1726 = vstv %s1725
        %v1727 = vmul.f32 %v1726, %v1723
        %v1728 = vmul.f32 %v1726, %v1724
        %v1729 = vadd.f32 %v1701, %v1727
        %v1730 = vadd.f32 %v1702, %v1728
        %s1731 = sld [smem:[#allocation9 + $0x31]]
        %v1732 = vstv %s1731
        %v1733 = vmul.f32 %v1732, %v1723
        %v1734 = vmul.f32 %v1732, %v1724
        %v1735 = vadd.f32 %v1707, %v1733
        %v1736 = vadd.f32 %v1708, %v1734
        %s1737 = sld [smem:[#allocation6 + $0x24]]
        %v1738 = vstv %s1737
        %v1739 = vmul.f32 %v1738, %v1223
        %v1740 = vmul.f32 %v1738, %v1224
        %s1741 = sld [smem:[#allocation6 + $0x25]]
        %v1742 = vstv %s1741
        %v1743 = vmul.f32 %v1742, %v1231
        %v1744 = vmul.f32 %v1742, %v1232
        %v1745 = vadd.f32 %v1739, %v1743
        %v1746 = vadd.f32 %v1740, %v1744
        %s1747 = sld [smem:[#allocation7 + $0x12]]
        %v1748 = vstv %s1747
        %v1749 = vadd.f32 %v1745, %v1748
        %v1750 = vadd.f32 %v1746, %v1748
        %v1751 = vmax.f32 %v1749, 0.0
        %v1752 = vmax.f32 %v1750, 0.0
        %s1753 = sld [smem:[#allocation9 + $0x12]]
        %v1754 = vstv %s1753
        %v1755 = vmul.f32 %v1754, %v1751
        %v1756 = vmul.f32 %v1754, %v1752
        %v1757 = vadd.f32 %v1729, %v1755
        %v1758 = vadd.f32 %v1730, %v1756
        %s1759 = sld [smem:[#allocation9 + $0x32]]
        %v1760 = vstv %s1759
        %v1761 = vmul.f32 %v1760, %v1751
        %v1762 = vmul.f32 %v1760, %v1752
        %v1763 = vadd.f32 %v1735, %v1761
        %v1764 = vadd.f32 %v1736, %v1762
        %s1765 = sld [smem:[#allocation6 + $0x26]]
        %v1766 = vstv %s1765
        %v1767 = vmul.f32 %v1766, %v1223
        %v1768 = vmul.f32 %v1766, %v1224
        %s1769 = sld [smem:[#allocation6 + $0x27]]
        %v1770 = vstv %s1769
        %v1771 = vmul.f32 %v1770, %v1231
        %v1772 = vmul.f32 %v1770, %v1232
        %v1773 = vadd.f32 %v1767, %v1771
        %v1774 = vadd.f32 %v1768, %v1772
        %s1775 = sld [smem:[#allocation7 + $0x13]]
        %v1776 = vstv %s1775
        %v1777 = vadd.f32 %v1773, %v1776
        %v1778 = vadd.f32 %v1774, %v1776
        %v1779 = vmax.f32 %v1777, 0.0
        %v1780 = vmax.f32 %v1778, 0.0
        %s1781 = sld [smem:[#allocation9 + $0x13]]
        %v1782 = vstv %s1781
        %v1783 = vmul.f32 %v1782, %v1779
        %v1784 = vmul.f32 %v1782, %v1780
        %v1785 = vadd.f32 %v1757, %v1783
        %v1786 = vadd.f32 %v1758, %v1784
        %s1787 = sld [smem:[#allocation9 + $0x33]]
        %v1788 = vstv %s1787
        %v1789 = vmul.f32 %v1788, %v1779
        %v1790 = vmul.f32 %v1788, %v1780
        %v1791 = vadd.f32 %v1763, %v1789
        %v1792 = vadd.f32 %v1764, %v1790
        %s1793 = sld [smem:[#allocation6 + $0x28]]
        %v1794 = vstv %s1793
        %v1795 = vmul.f32 %v1794, %v1223
        %v1796 = vmul.f32 %v1794, %v1224
        %s1797 = sld [smem:[#allocation6 + $0x29]]
        %v1798 = vstv %s1797
        %v1799 = vmul.f32 %v1798, %v1231
        %v1800 = vmul.f32 %v1798, %v1232
        %v1801 = vadd.f32 %v1795, %v1799
        %v1802 = vadd.f32 %v1796, %v1800
        %s1803 = sld [smem:[#allocation7 + $0x14]]
        %v1804 = vstv %s1803
        %v1805 = vadd.f32 %v1801, %v1804
        %v1806 = vadd.f32 %v1802, %v1804
        %v1807 = vmax.f32 %v1805, 0.0
        %v1808 = vmax.f32 %v1806, 0.0
        %s1809 = sld [smem:[#allocation9 + $0x14]]
        %v1810 = vstv %s1809
        %v1811 = vmul.f32 %v1810, %v1807
        %v1812 = vmul.f32 %v1810, %v1808
        %v1813 = vadd.f32 %v1785, %v1811
        %v1814 = vadd.f32 %v1786, %v1812
        %s1815 = sld [smem:[#allocation9 + $0x34]]
        %v1816 = vstv %s1815
        %v1817 = vmul.f32 %v1816, %v1807
        %v1818 = vmul.f32 %v1816, %v1808
        %v1819 = vadd.f32 %v1791, %v1817
        %v1820 = vadd.f32 %v1792, %v1818
        %s1821 = sld [smem:[#allocation6 + $0x2a]]
        %v1822 = vstv %s1821
        %v1823 = vmul.f32 %v1822, %v1223
        %v1824 = vmul.f32 %v1822, %v1224
        %s1825 = sld [smem:[#allocation6 + $0x2b]]
        %v1826 = vstv %s1825
        %v1827 = vmul.f32 %v1826, %v1231
        %v1828 = vmul.f32 %v1826, %v1232
        %v1829 = vadd.f32 %v1823, %v1827
        %v1830 = vadd.f32 %v1824, %v1828
        %s1831 = sld [smem:[#allocation7 + $0x15]]
        %v1832 = vstv %s1831
        %v1833 = vadd.f32 %v1829, %v1832
        %v1834 = vadd.f32 %v1830, %v1832
        %v1835 = vmax.f32 %v1833, 0.0
        %v1836 = vmax.f32 %v1834, 0.0
        %s1837 = sld [smem:[#allocation9 + $0x15]]
        %v1838 = vstv %s1837
        %v1839 = vmul.f32 %v1838, %v1835
        %v1840 = vmul.f32 %v1838, %v1836
        %v1841 = vadd.f32 %v1813, %v1839
        %v1842 = vadd.f32 %v1814, %v1840
        %s1843 = sld [smem:[#allocation9 + $0x35]]
        %v1844 = vstv %s1843
        %v1845 = vmul.f32 %v1844, %v1835
        %v1846 = vmul.f32 %v1844, %v1836
        %v1847 = vadd.f32 %v1819, %v1845
        %v1848 = vadd.f32 %v1820, %v1846
        %s1849 = sld [smem:[#allocation6 + $0x2c]]
        %v1850 = vstv %s1849
        %v1851 = vmul.f32 %v1850, %v1223
        %v1852 = vmul.f32 %v1850, %v1224
        %s1853 = sld [smem:[#allocation6 + $0x2d]]
        %v1854 = vstv %s1853
        %v1855 = vmul.f32 %v1854, %v1231
        %v1856 = vmul.f32 %v1854, %v1232
        %v1857 = vadd.f32 %v1851, %v1855
        %v1858 = vadd.f32 %v1852, %v1856
        %s1859 = sld [smem:[#allocation7 + $0x16]]
        %v1860 = vstv %s1859
        %v1861 = vadd.f32 %v1857, %v1860
        %v1862 = vadd.f32 %v1858, %v1860
        %v1863 = vmax.f32 %v1861, 0.0
        %v1864 = vmax.f32 %v1862, 0.0
        %s1865 = sld [smem:[#allocation9 + $0x16]]
        %v1866 = vstv %s1865
        %v1867 = vmul.f32 %v1866, %v1863
        %v1868 = vmul.f32 %v1866, %v1864
        %v1869 = vadd.f32 %v1841, %v1867
        %v1870 = vadd.f32 %v1842, %v1868
        %s1871 = sld [smem:[#allocation9 + $0x36]]
        %v1872 = vstv %s1871
        %v1873 = vmul.f32 %v1872, %v1863
        %v1874 = vmul.f32 %v1872, %v1864
        %v1875 = vadd.f32 %v1847, %v1873
        %v1876 = vadd.f32 %v1848, %v1874
        %s1877 = sld [smem:[#allocation6 + $0x2e]]
        %v1878 = vstv %s1877
        %v1879 = vmul.f32 %v1878, %v1223
        %v1880 = vmul.f32 %v1878, %v1224
        %s1881 = sld [smem:[#allocation6 + $0x2f]]
        %v1882 = vstv %s1881
        %v1883 = vmul.f32 %v1882, %v1231
        %v1884 = vmul.f32 %v1882, %v1232
        %v1885 = vadd.f32 %v1879, %v1883
        %v1886 = vadd.f32 %v1880, %v1884
        %s1887 = sld [smem:[#allocation7 + $0x17]]
        %v1888 = vstv %s1887
        %v1889 = vadd.f32 %v1885, %v1888
        %v1890 = vadd.f32 %v1886, %v1888
        %v1891 = vmax.f32 %v1889, 0.0
        %v1892 = vmax.f32 %v1890, 0.0
        %s1893 = sld [smem:[#allocation9 + $0x17]]
        %v1894 = vstv %s1893
        %v1895 = vmul.f32 %v1894, %v1891
        %v1896 = vmul.f32 %v1894, %v1892
        %v1897 = vadd.f32 %v1869, %v1895
        %v1898 = vadd.f32 %v1870, %v1896
        %s1899 = sld [smem:[#allocation9 + $0x37]]
        %v1900 = vstv %s1899
        %v1901 = vmul.f32 %v1900, %v1891
        %v1902 = vmul.f32 %v1900, %v1892
        %v1903 = vadd.f32 %v1875, %v1901
        %v1904 = vadd.f32 %v1876, %v1902
        %s1905 = sld [smem:[#allocation6 + $0x30]]
        %v1906 = vstv %s1905
        %v1907 = vmul.f32 %v1906, %v1223
        %v1908 = vmul.f32 %v1906, %v1224
        %s1909 = sld [smem:[#allocation6 + $0x31]]
        %v1910 = vstv %s1909
        %v1911 = vmul.f32 %v1910, %v1231
        %v1912 = vmul.f32 %v1910, %v1232
        %v1913 = vadd.f32 %v1907, %v1911
        %v1914 = vadd.f32 %v1908, %v1912
        %s1915 = sld [smem:[#allocation7 + $0x18]]
        %v1916 = vstv %s1915
        %v1917 = vadd.f32 %v1913, %v1916
        %v1918 = vadd.f32 %v1914, %v1916
        %v1919 = vmax.f32 %v1917, 0.0
        %v1920 = vmax.f32 %v1918, 0.0
        %s1921 = sld [smem:[#allocation9 + $0x18]]
        %v1922 = vstv %s1921
        %v1923 = vmul.f32 %v1922, %v1919
        %v1924 = vmul.f32 %v1922, %v1920
        %v1925 = vadd.f32 %v1897, %v1923
        %v1926 = vadd.f32 %v1898, %v1924
        %s1927 = sld [smem:[#allocation9 + $0x38]]
        %v1928 = vstv %s1927
        %v1929 = vmul.f32 %v1928, %v1919
        %v1930 = vmul.f32 %v1928, %v1920
        %v1931 = vadd.f32 %v1903, %v1929
        %v1932 = vadd.f32 %v1904, %v1930
        %s1933 = sld [smem:[#allocation6 + $0x32]]
        %v1934 = vstv %s1933
        %v1935 = vmul.f32 %v1934, %v1223
        %v1936 = vmul.f32 %v1934, %v1224
        %s1937 = sld [smem:[#allocation6 + $0x33]]
        %v1938 = vstv %s1937
        %v1939 = vmul.f32 %v1938, %v1231
        %v1940 = vmul.f32 %v1938, %v1232
        %v1941 = vadd.f32 %v1935, %v1939
        %v1942 = vadd.f32 %v1936, %v1940
        %s1943 = sld [smem:[#allocation7 + $0x19]]
        %v1944 = vstv %s1943
        %v1945 = vadd.f32 %v1941, %v1944
        %v1946 = vadd.f32 %v1942, %v1944
        %v1947 = vmax.f32 %v1945, 0.0
        %v1948 = vmax.f32 %v1946, 0.0
        %s1949 = sld [smem:[#allocation9 + $0x19]]
        %v1950 = vstv %s1949
        %v1951 = vmul.f32 %v1950, %v1947
        %v1952 = vmul.f32 %v1950, %v1948
        %v1953 = vadd.f32 %v1925, %v1951
        %v1954 = vadd.f32 %v1926, %v1952
        %s1955 = sld [smem:[#allocation9 + $0x39]]
        %v1956 = vstv %s1955
        %v1957 = vmul.f32 %v1956, %v1947
        %v1958 = vmul.f32 %v1956, %v1948
        %v1959 = vadd.f32 %v1931, %v1957
        %v1960 = vadd.f32 %v1932, %v1958
        %s1961 = sld [smem:[#allocation6 + $0x34]]
        %v1962 = vstv %s1961
        %v1963 = vmul.f32 %v1962, %v1223
        %v1964 = vmul.f32 %v1962, %v1224
        %s1965 = sld [smem:[#allocation6 + $0x35]]
        %v1966 = vstv %s1965
        %v1967 = vmul.f32 %v1966, %v1231
        %v1968 = vmul.f32 %v1966, %v1232
        %v1969 = vadd.f32 %v1963, %v1967
        %v1970 = vadd.f32 %v1964, %v1968
        %s1971 = sld [smem:[#allocation7 + $0x1a]]
        %v1972 = vstv %s1971
        %v1973 = vadd.f32 %v1969, %v1972
        %v1974 = vadd.f32 %v1970, %v1972
        %v1975 = vmax.f32 %v1973, 0.0
        %v1976 = vmax.f32 %v1974, 0.0
        %s1977 = sld [smem:[#allocation9 + $0x1a]]
        %v1978 = vstv %s1977
        %v1979 = vmul.f32 %v1978, %v1975
        %v1980 = vmul.f32 %v1978, %v1976
        %v1981 = vadd.f32 %v1953, %v1979
        %v1982 = vadd.f32 %v1954, %v1980
        %s1983 = sld [smem:[#allocation9 + $0x3a]]
        %v1984 = vstv %s1983
        %v1985 = vmul.f32 %v1984, %v1975
        %v1986 = vmul.f32 %v1984, %v1976
        %v1987 = vadd.f32 %v1959, %v1985
        %v1988 = vadd.f32 %v1960, %v1986
        %s1989 = sld [smem:[#allocation6 + $0x36]]
        %v1990 = vstv %s1989
        %v1991 = vmul.f32 %v1990, %v1223
        %v1992 = vmul.f32 %v1990, %v1224
        %s1993 = sld [smem:[#allocation6 + $0x37]]
        %v1994 = vstv %s1993
        %v1995 = vmul.f32 %v1994, %v1231
        %v1996 = vmul.f32 %v1994, %v1232
        %v1997 = vadd.f32 %v1991, %v1995
        %v1998 = vadd.f32 %v1992, %v1996
        %s1999 = sld [smem:[#allocation7 + $0x1b]]
        %v2000 = vstv %s1999
        %v2001 = vadd.f32 %v1997, %v2000
        %v2002 = vadd.f32 %v1998, %v2000
        %v2003 = vmax.f32 %v2001, 0.0
        %v2004 = vmax.f32 %v2002, 0.0
        %s2005 = sld [smem:[#allocation9 + $0x1b]]
        %v2006 = vstv %s2005
        %v2007 = vmul.f32 %v2006, %v2003
        %v2008 = vmul.f32 %v2006, %v2004
        %v2009 = vadd.f32 %v1981, %v2007
        %v2010 = vadd.f32 %v1982, %v2008
        %s2011 = sld [smem:[#allocation9 + $0x3b]]
        %v2012 = vstv %s2011
        %v2013 = vmul.f32 %v2012, %v2003
        %v2014 = vmul.f32 %v2012, %v2004
        %v2015 = vadd.f32 %v1987, %v2013
        %v2016 = vadd.f32 %v1988, %v2014
        %s2017 = sld [smem:[#allocation6 + $0x38]]
        %v2018 = vstv %s2017
        %v2019 = vmul.f32 %v2018, %v1223
        %v2020 = vmul.f32 %v2018, %v1224
        %s2021 = sld [smem:[#allocation6 + $0x39]]
        %v2022 = vstv %s2021
        %v2023 = vmul.f32 %v2022, %v1231
        %v2024 = vmul.f32 %v2022, %v1232
        %v2025 = vadd.f32 %v2019, %v2023
        %v2026 = vadd.f32 %v2020, %v2024
        %s2027 = sld [smem:[#allocation7 + $0x1c]]
        %v2028 = vstv %s2027
        %v2029 = vadd.f32 %v2025, %v2028
        %v2030 = vadd.f32 %v2026, %v2028
        %v2031 = vmax.f32 %v2029, 0.0
        %v2032 = vmax.f32 %v2030, 0.0
        %s2033 = sld [smem:[#allocation9 + $0x1c]]
        %v2034 = vstv %s2033
        %v2035 = vmul.f32 %v2034, %v2031
        %v2036 = vmul.f32 %v2034, %v2032
        %v2037 = vadd.f32 %v2009, %v2035
        %v2038 = vadd.f32 %v2010, %v2036
        %s2039 = sld [smem:[#allocation9 + $0x3c]]
        %v2040 = vstv %s2039
        %v2041 = vmul.f32 %v2040, %v2031
        %v2042 = vmul.f32 %v2040, %v2032
        %v2043 = vadd.f32 %v2015, %v2041
        %v2044 = vadd.f32 %v2016, %v2042
        %s2045 = sld [smem:[#allocation6 + $0x3a]]
        %v2046 = vstv %s2045
        %v2047 = vmul.f32 %v2046, %v1223
        %v2048 = vmul.f32 %v2046, %v1224
        %s2049 = sld [smem:[#allocation6 + $0x3b]]
        %v2050 = vstv %s2049
        %v2051 = vmul.f32 %v2050, %v1231
        %v2052 = vmul.f32 %v2050, %v1232
        %v2053 = vadd.f32 %v2047, %v2051
        %v2054 = vadd.f32 %v2048, %v2052
        %s2055 = sld [smem:[#allocation7 + $0x1d]]
        %v2056 = vstv %s2055
        %v2057 = vadd.f32 %v2053, %v2056
        %v2058 = vadd.f32 %v2054, %v2056
        %v2059 = vmax.f32 %v2057, 0.0
        %v2060 = vmax.f32 %v2058, 0.0
        %s2061 = sld [smem:[#allocation9 + $0x1d]]
        %v2062 = vstv %s2061
        %v2063 = vmul.f32 %v2062, %v2059
        %v2064 = vmul.f32 %v2062, %v2060
        %v2065 = vadd.f32 %v2037, %v2063
        %v2066 = vadd.f32 %v2038, %v2064
        %s2067 = sld [smem:[#allocation9 + $0x3d]]
        %v2068 = vstv %s2067
        %v2069 = vmul.f32 %v2068, %v2059
        %v2070 = vmul.f32 %v2068, %v2060
        %v2071 = vadd.f32 %v2043, %v2069
        %v2072 = vadd.f32 %v2044, %v2070
        %s2073 = sld [smem:[#allocation6 + $0x3c]]
        %v2074 = vstv %s2073
        %v2075 = vmul.f32 %v2074, %v1223
        %v2076 = vmul.f32 %v2074, %v1224
        %s2077 = sld [smem:[#allocation6 + $0x3d]]
        %v2078 = vstv %s2077
        %v2079 = vmul.f32 %v2078, %v1231
        %v2080 = vmul.f32 %v2078, %v1232
        %v2081 = vadd.f32 %v2075, %v2079
        %v2082 = vadd.f32 %v2076, %v2080
        %s2083 = sld [smem:[#allocation7 + $0x1e]]
        %v2084 = vstv %s2083
        %v2085 = vadd.f32 %v2081, %v2084
        %v2086 = vadd.f32 %v2082, %v2084
        %v2087 = vmax.f32 %v2085, 0.0
        %v2088 = vmax.f32 %v2086, 0.0
        %s2089 = sld [smem:[#allocation9 + $0x1e]]
        %v2090 = vstv %s2089
        %v2091 = vmul.f32 %v2090, %v2087
        %v2092 = vmul.f32 %v2090, %v2088
        %v2093 = vadd.f32 %v2065, %v2091
        %v2094 = vadd.f32 %v2066, %v2092
        %s2095 = sld [smem:[#allocation9 + $0x3e]]
        %v2096 = vstv %s2095
        %v2097 = vmul.f32 %v2096, %v2087
        %v2098 = vmul.f32 %v2096, %v2088
        %v2099 = vadd.f32 %v2071, %v2097
        %v2100 = vadd.f32 %v2072, %v2098
        %s2101 = sld [smem:[#allocation6 + $0x3e]]
        %v2102 = vstv %s2101
        %v2103 = vmul.f32 %v2102, %v1223
        %v2104 = vmul.f32 %v2102, %v1224
        %s2105 = sld [smem:[#allocation6 + $0x3f]]
        %v2106 = vstv %s2105
        %v2107 = vmul.f32 %v2106, %v1231
        %v2108 = vmul.f32 %v2106, %v1232
        %v2109 = vadd.f32 %v2103, %v2107
        %v2110 = vadd.f32 %v2104, %v2108
        %s2111 = sld [smem:[#allocation7 + $0x1f]]
        %v2112 = vstv %s2111
        %v2113 = vadd.f32 %v2109, %v2112
        %v2114 = vadd.f32 %v2110, %v2112
        %v2115 = vmax.f32 %v2113, 0.0
        %v2116 = vmax.f32 %v2114, 0.0
        %s2117 = sld [smem:[#allocation9 + $0x1f]]
        %v2118 = vstv %s2117
        %v2119 = vmul.f32 %v2118, %v2115
        %v2120 = vmul.f32 %v2118, %v2116
        %v2121 = vadd.f32 %v2093, %v2119
        %v2122 = vadd.f32 %v2094, %v2120
        %s2123 = sld [smem:[#allocation9 + $0x3f]]
        %v2124 = vstv %s2123
        %v2125 = vmul.f32 %v2124, %v2115
        %v2126 = vmul.f32 %v2124, %v2116
        %v2127 = vadd.f32 %v2099, %v2125
        %v2128 = vadd.f32 %v2100, %v2126
        %s2129 = sld [smem:[#allocation10]]
        %v2130 = vstv %s2129
        %v2131 = vadd.f32 %v2121, %v2130
        %v2132 = vadd.f32 %v2122, %v2130
        %s2133 = sld [smem:[#allocation10 + $0x1]]
        %v2134 = vstv %s2133
        %v2135 = vadd.f32 %v2127, %v2134
        %v2136 = vadd.f32 %v2128, %v2134
        %v2137 = vld [vmem:[%s703] sm:$0xff]
        %v2138 = vld [vmem:[%s703 + $0x8] sm:$0xff]
        %v2139 = vld [vmem:[%s713] sm:$0xff]
        %v2140 = vld [vmem:[%s713 + $0x8] sm:$0xff]
        %v2141 = vmul.f32 %v2131, %v2137
        %v2142 = vmul.f32 %v2132, %v2138
        %v2143 = vmul.f32 %v2135, %v2139
        %v2144 = vmul.f32 %v2136, %v2140
        %v2145 = vsub.f32 %v2141, %v2143
        %v2146 = vsub.f32 %v2142, %v2144
        %2147 = vst [vmem:[%s723] sm:$0xff] %v2145
        %2148 = vst [vmem:[%s723 + $0x8] sm:$0xff] %v2146
        %v2149 = vmul.f32 %v2131, %v2139
        %v2150 = vmul.f32 %v2132, %v2140
        %v2151 = vmul.f32 %v2135, %v2137
        %v2152 = vmul.f32 %v2136, %v2138
        %v2153 = vadd.f32 %v2149, %v2151
        %v2154 = vadd.f32 %v2150, %v2152
        %2155 = vst [vmem:[%s733] sm:$0xff] %v2153
        %2156 = vst [vmem:[%s733 + $0x8] sm:$0xff] %v2154
        %v2157 = vld [vmem:[%s957] sm:$0xff]
        %v2158 = vld [vmem:[%s957 + $0x8] sm:$0xff]
        %v2159 = vld [vmem:[%s960] sm:$0xff]
        %v2160 = vld [vmem:[%s960 + $0x8] sm:$0xff]
        %v2161 = vmul.f32 %v2131, %v2157
        %v2162 = vmul.f32 %v2132, %v2158
        %v2163 = vmul.f32 %v2135, %v2159
        %v2164 = vmul.f32 %v2136, %v2160
        %v2165 = vsub.f32 %v2161, %v2163
        %v2166 = vsub.f32 %v2162, %v2164
        %s2167 = scalar_lea.vmem %s723, 16
        %2168 = vst [vmem:[%s2167] sm:$0xff] %v2165
        %2169 = vst [vmem:[%s2167 + $0x8] sm:$0xff] %v2166
        %v2170 = vmul.f32 %v2131, %v2159
        %v2171 = vmul.f32 %v2132, %v2160
        %v2172 = vmul.f32 %v2135, %v2157
        %v2173 = vmul.f32 %v2136, %v2158
        %v2174 = vadd.f32 %v2170, %v2172
        %v2175 = vadd.f32 %v2171, %v2173
        %s2176 = scalar_lea.vmem %s733, 16
        %2177 = vst [vmem:[%s2176] sm:$0xff] %v2174
        %2178 = vst [vmem:[%s2176 + $0x8] sm:$0xff] %v2175
        %v2179 = vld [vmem:[%s1081] sm:$0xff]
        %v2180 = vld [vmem:[%s1081 + $0x8] sm:$0xff]
        %v2181 = vld [vmem:[%s1084] sm:$0xff]
        %v2182 = vld [vmem:[%s1084 + $0x8] sm:$0xff]
        %v2183 = vmul.f32 %v2131, %v2179
        %v2184 = vmul.f32 %v2132, %v2180
        %v2185 = vmul.f32 %v2135, %v2181
        %v2186 = vmul.f32 %v2136, %v2182
        %v2187 = vsub.f32 %v2183, %v2185
        %v2188 = vsub.f32 %v2184, %v2186
        %s2189 = scalar_lea.vmem %s723, 32
        %2190 = vst [vmem:[%s2189] sm:$0xff] %v2187
        %2191 = vst [vmem:[%s2189 + $0x8] sm:$0xff] %v2188
        %v2192 = vmul.f32 %v2131, %v2181
        %v2193 = vmul.f32 %v2132, %v2182
        %v2194 = vmul.f32 %v2135, %v2179
        %v2195 = vmul.f32 %v2136, %v2180
        %v2196 = vadd.f32 %v2192, %v2194
        %v2197 = vadd.f32 %v2193, %v2195
        %s2198 = scalar_lea.vmem %s733, 32
        %2199 = vst [vmem:[%s2198] sm:$0xff] %v2196
        %2200 = vst [vmem:[%s2198 + $0x8] sm:$0xff] %v2197
        %v2201 = vld [vmem:[%s1205] sm:$0xff]
        %v2202 = vld [vmem:[%s1205 + $0x8] sm:$0xff]
        %v2203 = vld [vmem:[%s1208] sm:$0xff]
        %v2204 = vld [vmem:[%s1208 + $0x8] sm:$0xff]
        %v2205 = vmul.f32 %v2131, %v2201
        %v2206 = vmul.f32 %v2132, %v2202
        %v2207 = vmul.f32 %v2135, %v2203
        %v2208 = vmul.f32 %v2136, %v2204
        %v2209 = vsub.f32 %v2205, %v2207
        %v2210 = vsub.f32 %v2206, %v2208
        %s2211 = scalar_lea.vmem %s723, 48
        %2212 = vst [vmem:[%s2211] sm:$0xff] %v2209
        %2213 = vst [vmem:[%s2211 + $0x8] sm:$0xff] %v2210
        %v2214 = vmul.f32 %v2131, %v2203
        %v2215 = vmul.f32 %v2132, %v2204
        %v2216 = vmul.f32 %v2135, %v2201
        %v2217 = vmul.f32 %v2136, %v2202
        %v2218 = vadd.f32 %v2214, %v2216
        %v2219 = vadd.f32 %v2215, %v2217
        %s2220 = scalar_lea.vmem %s733, 48
        %2221 = vst [vmem:[%s2220] sm:$0xff] %v2218
        %2222 = vst [vmem:[%s2220 + $0x8] sm:$0xff] %v2219
        %s2223 = smul.u32 2, %s34
        %p2224 = scmp.lt.s32.totalorder %s33, 1
        %s2225 = scalar_select %p2224, %s33, 1
        %p2226 = scmp.lt.s32.totalorder %s2223, 1
        %s2227 = scalar_select %p2226, %s2223, 1
        %s2228 = smul.addr %s2225, 8
        %s2229 = sadd.s32 %s2227, %s2228
        %s2230 = smul.addr %s2229, 8
        %s2231 = scalar_lea.vmem %s10, %s2230
        %s2232 = smul.u32 2, %s34
        %p2233 = scmp.lt.s32.totalorder %s33, 1
        %s2234 = scalar_select %p2233, %s33, 1
        %p2235 = scmp.lt.s32.totalorder %s2232, 1
        %s2236 = scalar_select %p2235, %s2232, 1
        %s2237 = smul.addr %s2234, 8
        %s2238 = sadd.s32 %s2236, %s2237
        %s2239 = smul.addr %s2238, 8
        %s2240 = scalar_lea.vmem %s11, %s2239
        %s2241 = smul.u32 2, %s34
        %p2242 = scmp.lt.s32.totalorder %s33, 1
        %s2243 = scalar_select %p2242, %s33, 1
        %p2244 = scmp.lt.s32.totalorder %s2241, 1
        %s2245 = scalar_select %p2244, %s2241, 1
        %s2246 = smul.addr %s2243, 8
        %s2247 = sadd.s32 %s2245, %s2246
        %s2248 = smul.addr %s2247, 8
        %s2249 = scalar_lea.vmem %s12, %s2248
        %s2250 = smul.u32 2, %s34
        %p2251 = scmp.lt.s32.totalorder %s33, 1
        %s2252 = scalar_select %p2251, %s33, 1
        %p2253 = scmp.lt.s32.totalorder %s2250, 1
        %s2254 = scalar_select %p2253, %s2250, 1
        %s2255 = smul.addr %s2252, 8
        %s2256 = sadd.s32 %s2254, %s2255
        %s2257 = smul.addr %s2256, 8
        %s2258 = scalar_lea.vmem %s13, %s2257
        // Predicated region
        $region85: #{p2p_cse_regularization.1} parent=59 // pred_check
          %p2259 = pneg %p299
        $region86: #{p2p_cse_regularization.1} parent=59 // pred_check_branch
          %2261 = sbr.rel (%p2259) target = $region88
        $region87: #{p2p_cse_regularization.1} parent=59 // pred_region
          %s2262 = smul.u32 2, %s34
        $region88: #{p2p_cse_regularization.1} parent=59 // pred_fallthru
          _
        // Predicated region
        $region89: #{p2p_cse_regularization.1} parent=59 // pred_check
          %p2263 = pneg %p327
        $region90: #{p2p_cse_regularization.1} parent=59 // pred_check_branch
          %2265 = sbr.rel (%p2263) target = $region92
        $region91: #{p2p_cse_regularization.1} parent=59 // pred_region
          %s2266 = smul.u32 2, %s34
        $region92: #{p2p_cse_regularization.1} parent=59 // pred_fallthru
          _
        // Predicated region
        $region93: #{p2p_cse_regularization.1} parent=59 // pred_check
          %p2267 = pneg %p355
        $region94: #{p2p_cse_regularization.1} parent=59 // pred_check_branch
          %2269 = sbr.rel (%p2267) target = $region96
        $region95: #{p2p_cse_regularization.1} parent=59 // pred_region
          %s2270 = smul.u32 2, %s34
        $region96: #{p2p_cse_regularization.1} parent=59 // pred_fallthru
          _
        // Predicated region
        $region97: #{p2p_cse_regularization.1} parent=59 // pred_check
          %p2271 = pneg %p383
        $region98: #{p2p_cse_regularization.1} parent=59 // pred_check_branch
          %2273 = sbr.rel (%p2271) target = $region100
        $region99: #{p2p_cse_regularization.1} parent=59 // pred_region
          %s2274 = smul.u32 2, %s34
        $region100: #{p2p_cse_regularization.1} parent=59 // pred_fallthru
          _
      $region60: #{p2p_cse_regularization.1} parent=5 // pred_fallthru
        _
      %p2275 = scmp.le.s32.totalorder 2, %s24
      // Predicated region
      $region101: #{p2p_cse_regularization.1} parent=5 // pred_check
        %p2276 = pneg %p2275
      $region102: #{p2p_cse_regularization.1} parent=5 // pred_check_branch
        %2278 = sbr.rel (%p2276) target = $region104
      $region103: #{p2p_cse_regularization.1} parent=5 // pred_region
        %s2279 = ssub.s32 %s24, 2
        // Predicated region
        $region105: #{p2p_cse_regularization.1} parent=103 // pred_check
          %p2280 = pneg %p305
        $region106: #{p2p_cse_regularization.1} parent=103 // pred_check_branch
          %2282 = sbr.rel (%p2280) target = $region108
        $region107: #{p2p_cse_regularization.1} parent=103 // pred_region
          %s2283 = smul.u32 2, %s36
          %p2284 = scmp.lt.s32.totalorder %s35, 1
          %s2285 = scalar_select %p2284, %s35, 1
          %p2286 = scmp.lt.s32.totalorder %s2283, 1
          %s2287 = scalar_select %p2286, %s2283, 1
          %s2288 = smul.addr %s2285, 8
          %s2289 = sadd.s32 %s2287, %s2288
          %s2290 = smul.addr %s2289, 8
          %s2291 = scalar_lea.vmem %s10, %s2290
        $region108: #{p2p_cse_regularization.1} parent=103 // pred_fallthru
          _
        // Predicated region
        $region109: #{p2p_cse_regularization.1} parent=103 // pred_check
          %p2292 = pneg %p333
        $region110: #{p2p_cse_regularization.1} parent=103 // pred_check_branch
          %2294 = sbr.rel (%p2292) target = $region112
        $region111: #{p2p_cse_regularization.1} parent=103 // pred_region
          %s2295 = smul.u32 2, %s36
          %p2296 = scmp.lt.s32.totalorder %s35, 1
          %s2297 = scalar_select %p2296, %s35, 1
          %p2298 = scmp.lt.s32.totalorder %s2295, 1
          %s2299 = scalar_select %p2298, %s2295, 1
          %s2300 = smul.addr %s2297, 8
          %s2301 = sadd.s32 %s2299, %s2300
          %s2302 = smul.addr %s2301, 8
          %s2303 = scalar_lea.vmem %s11, %s2302
        $region112: #{p2p_cse_regularization.1} parent=103 // pred_fallthru
          _
        // Predicated region
        $region113: #{p2p_cse_regularization.1} parent=103 // pred_check
          %p2304 = pneg %p361
        $region114: #{p2p_cse_regularization.1} parent=103 // pred_check_branch
          %2306 = sbr.rel (%p2304) target = $region116
        $region115: #{p2p_cse_regularization.1} parent=103 // pred_region
          %s2307 = smul.u32 2, %s36
          %p2308 = scmp.lt.s32.totalorder %s35, 1
          %s2309 = scalar_select %p2308, %s35, 1
          %p2310 = scmp.lt.s32.totalorder %s2307, 1
          %s2311 = scalar_select %p2310, %s2307, 1
          %s2312 = smul.addr %s2309, 8
          %s2313 = sadd.s32 %s2311, %s2312
          %s2314 = smul.addr %s2313, 8
          %s2315 = scalar_lea.vmem %s12, %s2314
        $region116: #{p2p_cse_regularization.1} parent=103 // pred_fallthru
          _
        // Predicated region
        $region117: #{p2p_cse_regularization.1} parent=103 // pred_check
          %p2316 = pneg %p389
        $region118: #{p2p_cse_regularization.1} parent=103 // pred_check_branch
          %2318 = sbr.rel (%p2316) target = $region120
        $region119: #{p2p_cse_regularization.1} parent=103 // pred_region
          %s2319 = smul.u32 2, %s36
          %p2320 = scmp.lt.s32.totalorder %s35, 1
          %s2321 = scalar_select %p2320, %s35, 1
          %p2322 = scmp.lt.s32.totalorder %s2319, 1
          %s2323 = scalar_select %p2322, %s2319, 1
          %s2324 = smul.addr %s2321, 8
          %s2325 = sadd.s32 %s2323, %s2324
          %s2326 = smul.addr %s2325, 8
          %s2327 = scalar_lea.vmem %s13, %s2326
        $region120: #{p2p_cse_regularization.1} parent=103 // pred_fallthru
          _
      $region104: #{p2p_cse_regularization.1} parent=5 // pred_fallthru
        _
    $region6: #{p2p_cse_regularization.1} parent=1 // loop_footer
      %s28 = sadd.s32 1, %s24
    $region7: #{p2p_cse_regularization.1} parent=1 // loop_footer_branch
      %23 = sbr.rel target = $region3
    $region8: #{p2p_cse_regularization.1} parent=1 // loop_exit
      _
    %2328 = vsyncpa [#allocation3], 1
    %s2329 = scalar_lea.sflag [#allocation3], 1
    %2330 = vsyncpa %s2329, 1
    %2331 = vsyncpa [#allocation5], 1
    %2332 = vsyncpa [#allocation8], 1
    %2333 = vsyncpa [#allocation11], 1

</llo_original>
